<compile_context>
chip_gen: v7x
topology: tpu7x:2x2x1
jax: 0.10.0
libtpu: 0.0.40
codegen_flags: <defaults>
</compile_context>

<pallas_src>
import math

import jax
import jax.numpy as jnp
import numpy as np
from jax.experimental import pallas as pl
from jax.experimental.pallas import tpu as pltpu

DEFAULT_TM = 512  # M-tile; sized so double-buffered tiles + resident weights
                  # stay well under v7x's 64 MiB VMEM (and v5e's scoped limit).

_CP = pltpu.CompilerParams(
    dimension_semantics=("parallel",),
    vmem_limit_bytes=32 * 1024 * 1024,
)


# ----------------------------------------------------------------------------
# Pallas kernels
# ----------------------------------------------------------------------------
def matmul_bias(x, w, b, activation="none", pre_relu=False, tm=DEFAULT_TM):
    """o = act( (relu?(x)) @ w + b ).  x:(M,K) f32, w:(K,N) bf16, b:(N,) f32."""
    M, K = x.shape
    N = w.shape[1]
    tm = M if M <= tm else tm
    grid = (pl.cdiv(M, tm),)

    def kernel(x_ref, w_ref, b_ref, o_ref):
        xv = x_ref[...]
        if pre_relu:
            xv = jnp.maximum(xv, 0.0)
        acc = jnp.dot(xv.astype(jnp.bfloat16), w_ref[...],
                      preferred_element_type=jnp.float32)
        acc = acc + b_ref[...]
        if activation == "relu":
            acc = jnp.maximum(acc, 0.0)
        o_ref[...] = acc

    return pl.pallas_call(
        kernel,
        out_shape=jax.ShapeDtypeStruct((M, N), jnp.float32),
        grid=grid,
        in_specs=[
            pl.BlockSpec((tm, K), lambda i: (i, 0)),
            pl.BlockSpec((K, N), lambda i: (0, 0)),   # VMEM-resident weights
            pl.BlockSpec((1, N), lambda i: (0, 0)),
        ],
        out_specs=pl.BlockSpec((tm, N), lambda i: (i, 0)),
        compiler_params=_CP,
    )(x, w, b.reshape(1, N))


def wavenet_layer(h, left, right, c2, skip, lw, tm=DEFAULT_TM):
    """One fused gated WaveNet layer (taps already time-shifted, all (M, R)):
         acc   = left@Wp + h@Wc + right@Wn + b_fg + c2@Wcond + b_cond
         out   = tanh(acc[:, :G]) * sigmoid(acc[:, G:])
         rs    = out @ [Wres | Wskip] + b_rs
         h'    = (h + rs[:, :R]) * sqrt(0.5)
         skip' = skip + rs[:, R:]
       h and skip are accumulated in place (input_output_aliases)."""
    M, R = h.shape
    Cc = c2.shape[1]
    S = skip.shape[1]
    G2 = lw["w_fg_cur"].shape[1]          # 2 * gate_channels
    G = G2 // 2
    RS = lw["w_rs"].shape[1]              # R + S
    scale = np.float32(math.sqrt(0.5))
    tm = M if M <= tm else tm
    grid = (pl.cdiv(M, tm),)

    def kernel(h_ref, l_ref, r_ref, c_ref, sk_ref,
               wp_ref, wc_ref, wn_ref, bfg_ref, wcc_ref, bcc_ref,
               wrs_ref, brs_ref, hout_ref, skout_ref):
        hb = h_ref[...]
        acc = jnp.dot(hb.astype(jnp.bfloat16), wc_ref[...],
                      preferred_element_type=jnp.float32)
        acc += jnp.dot(l_ref[...].astype(jnp.bfloat16), wp_ref[...],
                       preferred_element_type=jnp.float32)
        acc += jnp.dot(r_ref[...].astype(jnp.bfloat16), wn_ref[...],
                       preferred_element_type=jnp.float32)
        acc += jnp.dot(c_ref[...].astype(jnp.bfloat16), wcc_ref[...],
                       preferred_element_type=jnp.float32)
        acc += bfg_ref[...] + bcc_ref[...]
        out = jnp.tanh(acc[:, :G]) * jax.nn.sigmoid(acc[:, G:])
        rs = jnp.dot(out.astype(jnp.bfloat16), wrs_ref[...],
                     preferred_element_type=jnp.float32) + brs_ref[...]
        hout_ref[...] = (hb + rs[:, :R]) * scale
        skout_ref[...] = sk_ref[...] + rs[:, R:]

    return pl.pallas_call(
        kernel,
        out_shape=(jax.ShapeDtypeStruct((M, R), jnp.float32),
                   jax.ShapeDtypeStruct((M, S), jnp.float32)),
        grid=grid,
        in_specs=[
            pl.BlockSpec((tm, R), lambda i: (i, 0)),   # h (mid tap)
            pl.BlockSpec((tm, R), lambda i: (i, 0)),   # left tap (t - d)
            pl.BlockSpec((tm, R), lambda i: (i, 0)),   # right tap (t + d)
            pl.BlockSpec((tm, Cc), lambda i: (i, 0)),  # conditioning
            pl.BlockSpec((tm, S), lambda i: (i, 0)),   # skip accumulator
            pl.BlockSpec((R, G2), lambda i: (0, 0)),   # w_fg_prev
            pl.BlockSpec((R, G2), lambda i: (0, 0)),   # w_fg_cur
            pl.BlockSpec((R, G2), lambda i: (0, 0)),   # w_fg_next
            pl.BlockSpec((1, G2), lambda i: (0, 0)),   # b_fg
            pl.BlockSpec((Cc, G2), lambda i: (0, 0)),  # w_cond
            pl.BlockSpec((1, G2), lambda i: (0, 0)),   # b_cond
            pl.BlockSpec((G, RS), lambda i: (0, 0)),   # w_res|skip
            pl.BlockSpec((1, RS), lambda i: (0, 0)),   # b_res|skip
        ],
        out_specs=(pl.BlockSpec((tm, R), lambda i: (i, 0)),
                   pl.BlockSpec((tm, S), lambda i: (i, 0))),
        input_output_aliases={0: 0, 4: 1},   # h -> h', skip -> skip'
        compiler_params=_CP,
    )(h, left, right, c2, skip,
      lw["w_fg_prev"], lw["w_fg_cur"], lw["w_fg_next"], lw["b_fg"].reshape(1, G2),
      lw["w_cond"], lw["b_cond"].reshape(1, G2),
      lw["w_rs"], lw["b_rs"].reshape(1, RS))


def final2_coupling(out1, in_b, w2, b2, tm=DEFAULT_TM):
    """Fused final 1x1 conv + affine coupling epilogue:
         net   = out1 @ w2 + b2           (columns = [log_s | t])
         out_b = (in_b - t) * exp(-log_s)
       Returns (out_b, log_s)."""
    M, S = out1.shape
    C = w2.shape[1]
    half = C // 2
    tm = M if M <= tm else tm
    grid = (pl.cdiv(M, tm),)

    def kernel(x_ref, inb_ref, w_ref, b_ref, ob_ref, ls_ref):
        net = jnp.dot(x_ref[...].astype(jnp.bfloat16), w_ref[...],
                      preferred_element_type=jnp.float32) + b_ref[...]
        log_s = net[:, :half]
        t = net[:, half:]
        ls_ref[...] = log_s
        ob_ref[...] = (inb_ref[...] - t) * jnp.exp(-log_s)

    return pl.pallas_call(
        kernel,
        out_shape=(jax.ShapeDtypeStruct((M, half), jnp.float32),
                   jax.ShapeDtypeStruct((M, half), jnp.float32)),
        grid=grid,
        in_specs=[
            pl.BlockSpec((tm, S), lambda i: (i, 0)),
            pl.BlockSpec((tm, half), lambda i: (i, 0)),
            pl.BlockSpec((S, C), lambda i: (0, 0)),
            pl.BlockSpec((1, C), lambda i: (0, 0)),
        ],
        out_specs=(pl.BlockSpec((tm, half), lambda i: (i, 0)),
                   pl.BlockSpec((tm, half), lambda i: (i, 0))),
        compiler_params=_CP,
    )(out1, in_b, w2, b2.reshape(1, C))


# ----------------------------------------------------------------------------
# Glue (layout transforms, dilated tap shifting, ActNorm stats)
# ----------------------------------------------------------------------------
def _shifted_taps(h, B, T, dilation):
    """Non-causal SAME padding, kernel size 3: values at t-d and t+d."""
    M, R = h.shape
    h_btc = h.reshape(B, T, R)
    hp = jnp.pad(h_btc, ((0, 0), (dilation, dilation), (0, 0)))
    left = hp[:, 0:T].reshape(M, R)                        # h[t - d]
    right = hp[:, 2 * dilation:2 * dilation + T].reshape(M, R)  # h[t + d]
    return left, right


def wavenet_coupling(wn, x_a2, c_a2, in_b2, B, T):
    """WaveNet(in_a, c_a) fused with the affine-coupling transform of in_b.
       All inputs are channels-last (M, *).  Returns (out_b, log_s)."""
    M = x_a2.shape[0]
    h = matmul_bias(x_a2, wn["front_w"], wn["front_b"], activation="relu")
    S = wn["final1_w"].shape[0]
    skip = jnp.zeros((M, S), jnp.float32)

    for l, layer in enumerate(wn["layers"]):
        d = 2 ** l
        left, right = _shifted_taps(h, B, T, d)
        h, skip = wavenet_layer(h, left, right, c_a2, skip, layer)

    out1 = matmul_bias(skip, wn["final1_w"], wn["final1_b"],
                       activation="relu", pre_relu=True)
    out_b, log_s = final2_coupling(out1, in_b2, wn["final2_w"], wn["final2_b"])
    return out_b, log_s


def flow_forward(fp, x2, c2, B, T):
    """One Flow (ActNorm -> AffineCoupling -> change_order), channels-last."""
    M, C = x2.shape
    half = C // 2
    chalf = c2.shape[1] // 2

    # --- ActNorm (pretrained=False -> data-dependent init on this forward).
    # Tiny per-channel stats + affine; plain JAX so XLA fuses it with adjacent
    # column slicing.  torch.std is unbiased -> ddof=1.
    mean = jnp.mean(x2, axis=0)
    std = jnp.std(x2, axis=0, ddof=1)
    loc = -mean
    scale = 1.0 / (std + 1e-6)
    logdet_an = jnp.mean(jnp.log(jnp.abs(scale)))
    y2 = (x2 + loc[None, :]) * scale[None, :]

    # --- Affine coupling (log_s/t, coupling epilogue fused into final conv)
    in_a = y2[:, :half]
    in_b = y2[:, half:]
    c_a = c2[:, :chalf]
    out_b, log_s = wavenet_coupling(fp["wavenet"], in_a, c_a, in_b, B, T)
    det = jnp.mean(-log_s) / 2.0
    out2 = jnp.concatenate([in_a, out_b], axis=1)

    # --- change_order (swap channel halves of both out and c)
    out2 = jnp.concatenate([out2[:, half:], out2[:, :half]], axis=1)
    c2n = jnp.concatenate([c2[:, chalf:], c2[:, :chalf]], axis=1)
    return out2, c2n, logdet_an + det


def block_forward(params, x, c):
    B, C, T = x.shape
    Cc = c.shape[1]
    T2 = T // 2
    # squeeze: (B, C, T) -> (B, 2C, T//2)
    xs = x.reshape(B, C, T2, 2).transpose(0, 1, 3, 2).reshape(B, 2 * C, T2)
    cs = c.reshape(B, Cc, T2, 2).transpose(0, 1, 3, 2).reshape(B, 2 * Cc, T2)
    # single NCT -> (M, C) transpose for the whole flow stack
    x2 = jnp.transpose(xs, (0, 2, 1)).reshape(B * T2, 2 * C)
    c2 = jnp.transpose(cs, (0, 2, 1)).reshape(B * T2, 2 * Cc)

    logdet = jnp.float32(0.0)
    for fp in params["flows"]:
        x2, c2, det = flow_forward(fp, x2, c2, B, T2)
        logdet = logdet + det

    out = jnp.transpose(x2.reshape(B, T2, 2 * C), (0, 2, 1))
    c_out = jnp.transpose(c2.reshape(B, T2, 2 * Cc), (0, 2, 1))
    return out, c_out, logdet


# ----------------------------------------------------------------------------
# Deterministic parameter init (fused layouts; weights stored bf16 for MXU)
# ----------------------------------------------------------------------------
def _w(key, shape, scale):
    return (scale * jax.random.normal(key, shape, jnp.float32)).astype(jnp.bfloat16)


def init_params(key, in_channel, cin_channel, n_flow, n_layer, filter_size=256):
    # TODO(synk): when loading pretrained Conv1d weights, the kernel-tap axis
    # must be unpacked as [t-d, t, t+d] into w_fg_prev/cur/next, the filter and
    # gate output columns concatenated as [filter | gate], and res|skip
    # concatenated as [res | skip] (all transposed from (out, in, k)).
    squeeze_dim = in_channel * 2
    in_half = squeeze_dim // 2
    cin_half = cin_channel          # = squeeze_dim_c // 2
    R = G = S = filter_size
    flows = []
    for _ in range(n_flow):
        key, k_front, k_f1, k_f2 = jax.random.split(key, 4)
        layers = []
        for _ in range(n_layer):
            key, *lk = jax.random.split(key, 6)
            layers.append(dict(
                w_fg_prev=_w(lk[0], (R, 2 * G), 0.03),
                w_fg_cur=_w(lk[1], (R, 2 * G), 0.03),
                w_fg_next=_w(lk[2], (R, 2 * G), 0.03),
                b_fg=jnp.zeros((2 * G,), jnp.float32),
                w_cond=_w(lk[3], (cin_half, 2 * G), 0.05),
                b_cond=jnp.zeros((2 * G,), jnp.float32),
                w_rs=_w(lk[4], (G, R + S), 0.03),
                b_rs=jnp.zeros((R + S,), jnp.float32),
            ))
        wn = dict(
            front_w=_w(k_front, (in_half, R), 0.1),
            front_b=jnp.zeros((R,), jnp.float32),
            layers=layers,
            final1_w=_w(k_f1, (S, S), 0.03),
            final1_b=jnp.zeros((S,), jnp.float32),
            final2_w=_w(k_f2, (S, squeeze_dim), 0.02),
            final2_b=jnp.zeros((squeeze_dim,), jnp.float32),
        )
        flows.append(dict(wavenet=wn))
    return dict(flows=flows)


if __name__ == "__main__":
    B, in_channel, cin_channel, T = 2, 4, 8, 16
    n_flow, n_layer = 2, 2

    key = jax.random.PRNGKey(0)
    kx, kc, kp = jax.random.split(key, 3)
    x = jax.random.normal(kx, (B, in_channel, T), jnp.float32)
    c = jax.random.normal(kc, (B, cin_channel, T), jnp.float32)
    params = init_params(kp, in_channel, cin_channel, n_flow, n_layer)

    out, c_out, logdet = jax.jit(block_forward)(params, x, c)
    jax.block_until_ready((out, c_out, logdet))

    assert out.shape == (B, in_channel * 2, T // 2)
    assert c_out.shape == (B, cin_channel * 2, T // 2)
    assert logdet.shape == ()
    print("KERNEL_OK")
</pallas_src>

<mosaic_0001>
module attributes {stable_mosaic.version = 11 : i64} {
  func.func @kernel(%arg0: i32, %arg1: memref<16x4xf32, #tpu.memory_space<vmem>>, %arg2: memref<4x256xbf16, #tpu.memory_space<vmem>>, %arg3: memref<1x256xf32, #tpu.memory_space<vmem>>, %arg4: memref<16x256xf32, #tpu.memory_space<vmem>>) attributes {dimension_semantics = [#tpu.dimension_semantics<parallel>], iteration_bounds = array<i64: 1>, scalar_prefetch = 0 : i64, scratch_operands = 0 : i64, tpu.core_type = #tpu.core_type<tc>, window_params = [{transform_indices = @transform_0, window_bounds = array<i64: 16, 4>}, {pipeline_mode = #tpu.pipeline_mode<synchronous>, transform_indices = @transform_1, window_bounds = array<i64: 4, 256>}, {pipeline_mode = #tpu.pipeline_mode<synchronous>, transform_indices = @transform_2, window_bounds = array<i64: 1, 256>}, {transform_indices = @transform_3, window_bounds = array<i64: 16, 256>}]} {
    %c0 = arith.constant 0 : index
    %c0_0 = arith.constant 0 : index
    %0 = vector.load %arg1[%c0, %c0_0] : memref<16x4xf32, #tpu.memory_space<vmem>>, vector<16x4xf32>
    %1 = arith.truncf %0 : vector<16x4xf32> to vector<16x4xbf16>
    %c0_1 = arith.constant 0 : index
    %c0_2 = arith.constant 0 : index
    %2 = vector.load %arg2[%c0_1, %c0_2] : memref<4x256xbf16, #tpu.memory_space<vmem>>, vector<4x256xbf16>
    %cst = arith.constant dense<0.000000e+00> : vector<16x256xf32>
    %3 = tpu.matmul %1, %2, %cst {dimension_numbers = #tpu.dot_dimension_numbers<[1], [0], [0], [1], [0, 0, 1, 1], [], []>} : vector<16x4xbf16>, vector<4x256xbf16>, vector<16x256xf32> -> vector<16x256xf32>
    %c0_3 = arith.constant 0 : index
    %c0_4 = arith.constant 0 : index
    %4 = vector.load %arg3[%c0_3, %c0_4] : memref<1x256xf32, #tpu.memory_space<vmem>>, vector<1x256xf32>
    %5 = vector.broadcast %4 : vector<1x256xf32> to vector<16x256xf32>
    %6 = arith.addf %3, %5 : vector<16x256xf32>
    %cst_5 = arith.constant 0.000000e+00 : f32
    %7 = vector.broadcast %cst_5 : f32 to vector<16x256xf32>
    %8 = arith.maximumf %6, %7 : vector<16x256xf32>
    %c0_6 = arith.constant 0 : index
    %c0_7 = arith.constant 0 : index
    %9 = vector.load %arg4[%c0_6, %c0_7] : memref<16x256xf32, #tpu.memory_space<vmem>>, vector<16x256xf32>
    tpu.vector_store %arg4[%c0_6, %c0_7], %8 {strides = array<i32>} : memref<16x256xf32, #tpu.memory_space<vmem>>, vector<16x256xf32>,
    return
  }
  func.func @transform_0(%arg0: i32) -> (i32, i32) {
    %c0_i32 = arith.constant 0 : i32
    %c0_i32_0 = arith.constant 0 : i32
    return %arg0, %c0_i32 : i32, i32
  }
  func.func @transform_1(%arg0: i32) -> (i32, i32) {
    %c0_i32 = arith.constant 0 : i32
    %c0_i32_0 = arith.constant 0 : i32
    %c0_i32_1 = arith.constant 0 : i32
    return %c0_i32, %c0_i32_0 : i32, i32
  }
  func.func @transform_2(%arg0: i32) -> (i32, i32) {
    %c0_i32 = arith.constant 0 : i32
    %c0_i32_0 = arith.constant 0 : i32
    %c0_i32_1 = arith.constant 0 : i32
    return %c0_i32, %c0_i32_0 : i32, i32
  }
  func.func @transform_3(%arg0: i32) -> (i32, i32) {
    %c0_i32 = arith.constant 0 : i32
    %c0_i32_0 = arith.constant 0 : i32
    return %arg0, %c0_i32 : i32, i32
  }
}

module attributes {stable_mosaic.version = 11 : i64} {
  func.func @kernel(%arg0: i32, %arg1: memref<16x256xf32, #tpu.memory_space<vmem>>, %arg2: memref<16x256xf32, #tpu.memory_space<vmem>>, %arg3: memref<16x256xf32, #tpu.memory_space<vmem>>, %arg4: memref<16x8xf32, #tpu.memory_space<vmem>>, %arg5: memref<16x256xf32, #tpu.memory_space<vmem>>, %arg6: memref<256x512xbf16, #tpu.memory_space<vmem>>, %arg7: memref<256x512xbf16, #tpu.memory_space<vmem>>, %arg8: memref<256x512xbf16, #tpu.memory_space<vmem>>, %arg9: memref<1x512xf32, #tpu.memory_space<vmem>>, %arg10: memref<8x512xbf16, #tpu.memory_space<vmem>>, %arg11: memref<1x512xf32, #tpu.memory_space<vmem>>, %arg12: memref<256x512xbf16, #tpu.memory_space<vmem>>, %arg13: memref<1x512xf32, #tpu.memory_space<vmem>>, %arg14: memref<16x256xf32, #tpu.memory_space<vmem>>, %arg15: memref<16x256xf32, #tpu.memory_space<vmem>>) attributes {dimension_semantics = [#tpu.dimension_semantics<parallel>], iteration_bounds = array<i64: 1>, scalar_prefetch = 0 : i64, scratch_operands = 0 : i64, tpu.core_type = #tpu.core_type<tc>, window_params = [{transform_indices = @transform_0, window_bounds = array<i64: 16, 256>}, {transform_indices = @transform_1, window_bounds = array<i64: 16, 256>}, {transform_indices = @transform_2, window_bounds = array<i64: 16, 256>}, {transform_indices = @transform_3, window_bounds = array<i64: 16, 8>}, {transform_indices = @transform_4, window_bounds = array<i64: 16, 256>}, {pipeline_mode = #tpu.pipeline_mode<synchronous>, transform_indices = @transform_5, window_bounds = array<i64: 256, 512>}, {pipeline_mode = #tpu.pipeline_mode<synchronous>, transform_indices = @transform_6, window_bounds = array<i64: 256, 512>}, {pipeline_mode = #tpu.pipeline_mode<synchronous>, transform_indices = @transform_7, window_bounds = array<i64: 256, 512>}, {pipeline_mode = #tpu.pipeline_mode<synchronous>, transform_indices = @transform_8, window_bounds = array<i64: 1, 512>}, {pipeline_mode = #tpu.pipeline_mode<synchronous>, transform_indices = @transform_9, window_bounds = array<i64: 8, 512>}, {pipeline_mode = #tpu.pipeline_mode<synchronous>, transform_indices = @transform_10, window_bounds = array<i64: 1, 512>}, {pipeline_mode = #tpu.pipeline_mode<synchronous>, transform_indices = @transform_11, window_bounds = array<i64: 256, 512>}, {pipeline_mode = #tpu.pipeline_mode<synchronous>, transform_indices = @transform_12, window_bounds = array<i64: 1, 512>}, {transform_indices = @transform_13, window_bounds = array<i64: 16, 256>}, {transform_indices = @transform_14, window_bounds = array<i64: 16, 256>}]} {
    %c0 = arith.constant 0 : index
    %c0_0 = arith.constant 0 : index
    %0 = vector.load %arg1[%c0, %c0_0] : memref<16x256xf32, #tpu.memory_space<vmem>>, vector<16x256xf32>
    %1 = arith.truncf %0 : vector<16x256xf32> to vector<16x256xbf16>
    %c0_1 = arith.constant 0 : index
    %c0_2 = arith.constant 0 : index
    %2 = vector.load %arg7[%c0_1, %c0_2] : memref<256x512xbf16, #tpu.memory_space<vmem>>, vector<256x512xbf16>
    %cst = arith.constant dense<0.000000e+00> : vector<16x512xf32>
    %3 = tpu.matmul %1, %2, %cst {dimension_numbers = #tpu.dot_dimension_numbers<[1], [0], [0], [1], [0, 0, 1, 1], [], []>} : vector<16x256xbf16>, vector<256x512xbf16>, vector<16x512xf32> -> vector<16x512xf32>
    %c0_3 = arith.constant 0 : index
    %c0_4 = arith.constant 0 : index
    %4 = vector.load %arg2[%c0_3, %c0_4] : memref<16x256xf32, #tpu.memory_space<vmem>>, vector<16x256xf32>
    %5 = arith.truncf %4 : vector<16x256xf32> to vector<16x256xbf16>
    %c0_5 = arith.constant 0 : index
    %c0_6 = arith.constant 0 : index
    %6 = vector.load %arg6[%c0_5, %c0_6] : memref<256x512xbf16, #tpu.memory_space<vmem>>, vector<256x512xbf16>
    %cst_7 = arith.constant dense<0.000000e+00> : vector<16x512xf32>
    %7 = tpu.matmul %5, %6, %cst_7 {dimension_numbers = #tpu.dot_dimension_numbers<[1], [0], [0], [1], [0, 0, 1, 1], [], []>} : vector<16x256xbf16>, vector<256x512xbf16>, vector<16x512xf32> -> vector<16x512xf32>
    %8 = arith.addf %3, %7 : vector<16x512xf32>
    %c0_8 = arith.constant 0 : index
    %c0_9 = arith.constant 0 : index
    %9 = vector.load %arg3[%c0_8, %c0_9] : memref<16x256xf32, #tpu.memory_space<vmem>>, vector<16x256xf32>
    %10 = arith.truncf %9 : vector<16x256xf32> to vector<16x256xbf16>
    %c0_10 = arith.constant 0 : index
    %c0_11 = arith.constant 0 : index
    %11 = vector.load %arg8[%c0_10, %c0_11] : memref<256x512xbf16, #tpu.memory_space<vmem>>, vector<256x512xbf16>
    %cst_12 = arith.constant dense<0.000000e+00> : vector<16x512xf32>
    %12 = tpu.matmul %10, %11, %cst_12 {dimension_numbers = #tpu.dot_dimension_numbers<[1], [0], [0], [1], [0, 0, 1, 1], [], []>} : vector<16x256xbf16>, vector<256x512xbf16>, vector<16x512xf32> -> vector<16x512xf32>
    %13 = arith.addf %8, %12 : vector<16x512xf32>
    %c0_13 = arith.constant 0 : index
    %c0_14 = arith.constant 0 : index
    %14 = vector.load %arg4[%c0_13, %c0_14] : memref<16x8xf32, #tpu.memory_space<vmem>>, vector<16x8xf32>
    %15 = arith.truncf %14 : vector<16x8xf32> to vector<16x8xbf16>
    %c0_15 = arith.constant 0 : index
    %c0_16 = arith.constant 0 : index
    %16 = vector.load %arg10[%c0_15, %c0_16] : memref<8x512xbf16, #tpu.memory_space<vmem>>, vector<8x512xbf16>
    %cst_17 = arith.constant dense<0.000000e+00> : vector<16x512xf32>
    %17 = tpu.matmul %15, %16, %cst_17 {dimension_numbers = #tpu.dot_dimension_numbers<[1], [0], [0], [1], [0, 0, 1, 1], [], []>} : vector<16x8xbf16>, vector<8x512xbf16>, vector<16x512xf32> -> vector<16x512xf32>
    %18 = arith.addf %13, %17 : vector<16x512xf32>
    %c0_18 = arith.constant 0 : index
    %c0_19 = arith.constant 0 : index
    %19 = vector.load %arg9[%c0_18, %c0_19] : memref<1x512xf32, #tpu.memory_space<vmem>>, vector<1x512xf32>
    %c0_20 = arith.constant 0 : index
    %c0_21 = arith.constant 0 : index
    %20 = vector.load %arg11[%c0_20, %c0_21] : memref<1x512xf32, #tpu.memory_space<vmem>>, vector<1x512xf32>
    %21 = arith.addf %19, %20 : vector<1x512xf32>
    %22 = vector.broadcast %21 : vector<1x512xf32> to vector<16x512xf32>
    %23 = arith.addf %18, %22 : vector<16x512xf32>
    %24 = vector.extract_strided_slice %23 {offsets = [0, 0], sizes = [16, 256], strides = [1, 1]} : vector<16x512xf32> to vector<16x256xf32>
    %25 = math.tanh %24 : vector<16x256xf32>
    %26 = vector.extract_strided_slice %23 {offsets = [0, 256], sizes = [16, 256], strides = [1, 1]} : vector<16x512xf32> to vector<16x256xf32>
    %27 = arith.negf %26 : vector<16x256xf32>
    %28 = math.exp %27 : vector<16x256xf32>
    %cst_22 = arith.constant 1.000000e+00 : f32
    %29 = vector.broadcast %cst_22 : f32 to vector<16x256xf32>
    %30 = arith.addf %29, %28 : vector<16x256xf32>
    %31 = arith.divf %29, %30 : vector<16x256xf32>
    %32 = arith.mulf %25, %31 : vector<16x256xf32>
    %33 = arith.truncf %32 : vector<16x256xf32> to vector<16x256xbf16>
    %c0_23 = arith.constant 0 : index
    %c0_24 = arith.constant 0 : index
    %34 = vector.load %arg12[%c0_23, %c0_24] : memref<256x512xbf16, #tpu.memory_space<vmem>>, vector<256x512xbf16>
    %cst_25 = arith.constant dense<0.000000e+00> : vector<16x512xf32>
    %35 = tpu.matmul %33, %34, %cst_25 {dimension_numbers = #tpu.dot_dimension_numbers<[1], [0], [0], [1], [0, 0, 1, 1], [], []>} : vector<16x256xbf16>, vector<256x512xbf16>, vector<16x512xf32> -> vector<16x512xf32>
    %c0_26 = arith.constant 0 : index
    %c0_27 = arith.constant 0 : index
    %36 = vector.load %arg13[%c0_26, %c0_27] : memref<1x512xf32, #tpu.memory_space<vmem>>, vector<1x512xf32>
    %37 = vector.broadcast %36 : vector<1x512xf32> to vector<16x512xf32>
    %38 = arith.addf %35, %37 : vector<16x512xf32>
    %39 = vector.extract_strided_slice %38 {offsets = [0, 0], sizes = [16, 256], strides = [1, 1]} : vector<16x512xf32> to vector<16x256xf32>
    %40 = arith.addf %0, %39 : vector<16x256xf32>
    %cst_28 = arith.constant 0.707106769 : f32
    %41 = vector.broadcast %cst_28 : f32 to vector<16x256xf32>
    %42 = arith.mulf %40, %41 : vector<16x256xf32>
    %c0_29 = arith.constant 0 : index
    %c0_30 = arith.constant 0 : index
    %43 = vector.load %arg14[%c0_29, %c0_30] : memref<16x256xf32, #tpu.memory_space<vmem>>, vector<16x256xf32>
    tpu.vector_store %arg14[%c0_29, %c0_30], %42 {strides = array<i32>} : memref<16x256xf32, #tpu.memory_space<vmem>>, vector<16x256xf32>,
    %c0_31 = arith.constant 0 : index
    %c0_32 = arith.constant 0 : index
    %44 = vector.load %arg5[%c0_31, %c0_32] : memref<16x256xf32, #tpu.memory_space<vmem>>, vector<16x256xf32>
    %45 = vector.extract_strided_slice %38 {offsets = [0, 256], sizes = [16, 256], strides = [1, 1]} : vector<16x512xf32> to vector<16x256xf32>
    %46 = arith.addf %44, %45 : vector<16x256xf32>
    %c0_33 = arith.constant 0 : index
    %c0_34 = arith.constant 0 : index
    %47 = vector.load %arg15[%c0_33, %c0_34] : memref<16x256xf32, #tpu.memory_space<vmem>>, vector<16x256xf32>
    tpu.vector_store %arg15[%c0_33, %c0_34], %46 {strides = array<i32>} : memref<16x256xf32, #tpu.memory_space<vmem>>, vector<16x256xf32>,
    return
  }
  func.func @transform_0(%arg0: i32) -> (i32, i32) {
    %c0_i32 = arith.constant 0 : i32
    %c0_i32_0 = arith.constant 0 : i32
    return %arg0, %c0_i32 : i32, i32
  }
  func.func @transform_1(%arg0: i32) -> (i32, i32) {
    %c0_i32 = arith.constant 0 : i32
    %c0_i32_0 = arith.constant 0 : i32
    return %arg0, %c0_i32 : i32, i32
  }
  func.func @transform_2(%arg0: i32) -> (i32, i32) {
    %c0_i32 = arith.constant 0 : i32
    %c0_i32_0 = arith.constant 0 : i32
    return %arg0, %c0_i32 : i32, i32
  }
  func.func @transform_3(%arg0: i32) -> (i32, i32) {
    %c0_i32 = arith.constant 0 : i32
    %c0_i32_0 = arith.constant 0 : i32
    return %arg0, %c0_i32 : i32, i32
  }
  func.func @transform_4(%arg0: i32) -> (i32, i32) {
    %c0_i32 = arith.constant 0 : i32
    %c0_i32_0 = arith.constant 0 : i32
    return %arg0, %c0_i32 : i32, i32
  }
  func.func @transform_5(%arg0: i32) -> (i32, i32) {
    %c0_i32 = arith.constant 0 : i32
    %c0_i32_0 = arith.constant 0 : i32
    %c0_i32_1 = arith.constant 0 : i32
    return %c0_i32, %c0_i32_0 : i32, i32
  }
  func.func @transform_6(%arg0: i32) -> (i32, i32) {
    %c0_i32 = arith.constant 0 : i32
    %c0_i32_0 = arith.constant 0 : i32
    %c0_i32_1 = arith.constant 0 : i32
    return %c0_i32, %c0_i32_0 : i32, i32
  }
  func.func @transform_7(%arg0: i32) -> (i32, i32) {
    %c0_i32 = arith.constant 0 : i32
    %c0_i32_0 = arith.constant 0 : i32
    %c0_i32_1 = arith.constant 0 : i32
    return %c0_i32, %c0_i32_0 : i32, i32
  }
  func.func @transform_8(%arg0: i32) -> (i32, i32) {
    %c0_i32 = arith.constant 0 : i32
    %c0_i32_0 = arith.constant 0 : i32
    %c0_i32_1 = arith.constant 0 : i32
    return %c0_i32, %c0_i32_0 : i32, i32
  }
  func.func @transform_9(%arg0: i32) -> (i32, i32) {
    %c0_i32 = arith.constant 0 : i32
    %c0_i32_0 = arith.constant 0 : i32
    %c0_i32_1 = arith.constant 0 : i32
    return %c0_i32, %c0_i32_0 : i32, i32
  }
  func.func @transform_10(%arg0: i32) -> (i32, i32) {
    %c0_i32 = arith.constant 0 : i32
    %c0_i32_0 = arith.constant 0 : i32
    %c0_i32_1 = arith.constant 0 : i32
    return %c0_i32, %c0_i32_0 : i32, i32
  }
  func.func @transform_11(%arg0: i32) -> (i32, i32) {
    %c0_i32 = arith.constant 0 : i32
    %c0_i32_0 = arith.constant 0 : i32
    %c0_i32_1 = arith.constant 0 : i32
    return %c0_i32, %c0_i32_0 : i32, i32
  }
  func.func @transform_12(%arg0: i32) -> (i32, i32) {
    %c0_i32 = arith.constant 0 : i32
    %c0_i32_0 = arith.constant 0 : i32
    %c0_i32_1 = arith.constant 0 : i32
    return %c0_i32, %c0_i32_0 : i32, i32
  }
  func.func @transform_13(%arg0: i32) -> (i32, i32) {
    %c0_i32 = arith.constant 0 : i32
    %c0_i32_0 = arith.constant 0 : i32
    return %arg0, %c0_i32 : i32, i32
  }
  func.func @transform_14(%arg0: i32) -> (i32, i32) {
    %c0_i32 = arith.constant 0 : i32
    %c0_i32_0 = arith.constant 0 : i32
    return %arg0, %c0_i32 : i32, i32
  }
}

module attributes {stable_mosaic.version = 11 : i64} {
  func.func @kernel(%arg0: i32, %arg1: memref<16x256xf32, #tpu.memory_space<vmem>>, %arg2: memref<16x256xf32, #tpu.memory_space<vmem>>, %arg3: memref<16x256xf32, #tpu.memory_space<vmem>>, %arg4: memref<16x8xf32, #tpu.memory_space<vmem>>, %arg5: memref<16x256xf32, #tpu.memory_space<vmem>>, %arg6: memref<256x512xbf16, #tpu.memory_space<vmem>>, %arg7: memref<256x512xbf16, #tpu.memory_space<vmem>>, %arg8: memref<256x512xbf16, #tpu.memory_space<vmem>>, %arg9: memref<1x512xf32, #tpu.memory_space<vmem>>, %arg10: memref<8x512xbf16, #tpu.memory_space<vmem>>, %arg11: memref<1x512xf32, #tpu.memory_space<vmem>>, %arg12: memref<256x512xbf16, #tpu.memory_space<vmem>>, %arg13: memref<1x512xf32, #tpu.memory_space<vmem>>, %arg14: memref<16x256xf32, #tpu.memory_space<vmem>>, %arg15: memref<16x256xf32, #tpu.memory_space<vmem>>) attributes {dimension_semantics = [#tpu.dimension_semantics<parallel>], iteration_bounds = array<i64: 1>, scalar_prefetch = 0 : i64, scratch_operands = 0 : i64, tpu.core_type = #tpu.core_type<tc>, window_params = [{transform_indices = @transform_0, window_bounds = array<i64: 16, 256>}, {transform_indices = @transform_1, window_bounds = array<i64: 16, 256>}, {transform_indices = @transform_2, window_bounds = array<i64: 16, 256>}, {transform_indices = @transform_3, window_bounds = array<i64: 16, 8>}, {transform_indices = @transform_4, window_bounds = array<i64: 16, 256>}, {pipeline_mode = #tpu.pipeline_mode<synchronous>, transform_indices = @transform_5, window_bounds = array<i64: 256, 512>}, {pipeline_mode = #tpu.pipeline_mode<synchronous>, transform_indices = @transform_6, window_bounds = array<i64: 256, 512>}, {pipeline_mode = #tpu.pipeline_mode<synchronous>, transform_indices = @transform_7, window_bounds = array<i64: 256, 512>}, {pipeline_mode = #tpu.pipeline_mode<synchronous>, transform_indices = @transform_8, window_bounds = array<i64: 1, 512>}, {pipeline_mode = #tpu.pipeline_mode<synchronous>, transform_indices = @transform_9, window_bounds = array<i64: 8, 512>}, {pipeline_mode = #tpu.pipeline_mode<synchronous>, transform_indices = @transform_10, window_bounds = array<i64: 1, 512>}, {pipeline_mode = #tpu.pipeline_mode<synchronous>, transform_indices = @transform_11, window_bounds = array<i64: 256, 512>}, {pipeline_mode = #tpu.pipeline_mode<synchronous>, transform_indices = @transform_12, window_bounds = array<i64: 1, 512>}, {transform_indices = @transform_13, window_bounds = array<i64: 16, 256>}, {transform_indices = @transform_14, window_bounds = array<i64: 16, 256>}]} {
    %c0 = arith.constant 0 : index
    %c0_0 = arith.constant 0 : index
    %0 = vector.load %arg1[%c0, %c0_0] : memref<16x256xf32, #tpu.memory_space<vmem>>, vector<16x256xf32>
    %1 = arith.truncf %0 : vector<16x256xf32> to vector<16x256xbf16>
    %c0_1 = arith.constant 0 : index
    %c0_2 = arith.constant 0 : index
    %2 = vector.load %arg7[%c0_1, %c0_2] : memref<256x512xbf16, #tpu.memory_space<vmem>>, vector<256x512xbf16>
    %cst = arith.constant dense<0.000000e+00> : vector<16x512xf32>
    %3 = tpu.matmul %1, %2, %cst {dimension_numbers = #tpu.dot_dimension_numbers<[1], [0], [0], [1], [0, 0, 1, 1], [], []>} : vector<16x256xbf16>, vector<256x512xbf16>, vector<16x512xf32> -> vector<16x512xf32>
    %c0_3 = arith.constant 0 : index
    %c0_4 = arith.constant 0 : index
    %4 = vector.load %arg2[%c0_3, %c0_4] : memref<16x256xf32, #tpu.memory_space<vmem>>, vector<16x256xf32>
    %5 = arith.truncf %4 : vector<16x256xf32> to vector<16x256xbf16>
    %c0_5 = arith.constant 0 : index
    %c0_6 = arith.constant 0 : index
    %6 = vector.load %arg6[%c0_5, %c0_6] : memref<256x512xbf16, #tpu.memory_space<vmem>>, vector<256x512xbf16>
    %cst_7 = arith.constant dense<0.000000e+00> : vector<16x512xf32>
    %7 = tpu.matmul %5, %6, %cst_7 {dimension_numbers = #tpu.dot_dimension_numbers<[1], [0], [0], [1], [0, 0, 1, 1], [], []>} : vector<16x256xbf16>, vector<256x512xbf16>, vector<16x512xf32> -> vector<16x512xf32>
    %8 = arith.addf %3, %7 : vector<16x512xf32>
    %c0_8 = arith.constant 0 : index
    %c0_9 = arith.constant 0 : index
    %9 = vector.load %arg3[%c0_8, %c0_9] : memref<16x256xf32, #tpu.memory_space<vmem>>, vector<16x256xf32>
    %10 = arith.truncf %9 : vector<16x256xf32> to vector<16x256xbf16>
    %c0_10 = arith.constant 0 : index
    %c0_11 = arith.constant 0 : index
    %11 = vector.load %arg8[%c0_10, %c0_11] : memref<256x512xbf16, #tpu.memory_space<vmem>>, vector<256x512xbf16>
    %cst_12 = arith.constant dense<0.000000e+00> : vector<16x512xf32>
    %12 = tpu.matmul %10, %11, %cst_12 {dimension_numbers = #tpu.dot_dimension_numbers<[1], [0], [0], [1], [0, 0, 1, 1], [], []>} : vector<16x256xbf16>, vector<256x512xbf16>, vector<16x512xf32> -> vector<16x512xf32>
    %13 = arith.addf %8, %12 : vector<16x512xf32>
    %c0_13 = arith.constant 0 : index
    %c0_14 = arith.constant 0 : index
    %14 = vector.load %arg4[%c0_13, %c0_14] : memref<16x8xf32, #tpu.memory_space<vmem>>, vector<16x8xf32>
    %15 = arith.truncf %14 : vector<16x8xf32> to vector<16x8xbf16>
    %c0_15 = arith.constant 0 : index
    %c0_16 = arith.constant 0 : index
    %16 = vector.load %arg10[%c0_15, %c0_16] : memref<8x512xbf16, #tpu.memory_space<vmem>>, vector<8x512xbf16>
    %cst_17 = arith.constant dense<0.000000e+00> : vector<16x512xf32>
    %17 = tpu.matmul %15, %16, %cst_17 {dimension_numbers = #tpu.dot_dimension_numbers<[1], [0], [0], [1], [0, 0, 1, 1], [], []>} : vector<16x8xbf16>, vector<8x512xbf16>, vector<16x512xf32> -> vector<16x512xf32>
    %18 = arith.addf %13, %17 : vector<16x512xf32>
    %c0_18 = arith.constant 0 : index
    %c0_19 = arith.constant 0 : index
    %19 = vector.load %arg9[%c0_18, %c0_19] : memref<1x512xf32, #tpu.memory_space<vmem>>, vector<1x512xf32>
    %c0_20 = arith.constant 0 : index
    %c0_21 = arith.constant 0 : index
    %20 = vector.load %arg11[%c0_20, %c0_21] : memref<1x512xf32, #tpu.memory_space<vmem>>, vector<1x512xf32>
    %21 = arith.addf %19, %20 : vector<1x512xf32>
    %22 = vector.broadcast %21 : vector<1x512xf32> to vector<16x512xf32>
    %23 = arith.addf %18, %22 : vector<16x512xf32>
    %24 = vector.extract_strided_slice %23 {offsets = [0, 0], sizes = [16, 256], strides = [1, 1]} : vector<16x512xf32> to vector<16x256xf32>
    %25 = math.tanh %24 : vector<16x256xf32>
    %26 = vector.extract_strided_slice %23 {offsets = [0, 256], sizes = [16, 256], strides = [1, 1]} : vector<16x512xf32> to vector<16x256xf32>
    %27 = arith.negf %26 : vector<16x256xf32>
    %28 = math.exp %27 : vector<16x256xf32>
    %cst_22 = arith.constant 1.000000e+00 : f32
    %29 = vector.broadcast %cst_22 : f32 to vector<16x256xf32>
    %30 = arith.addf %29, %28 : vector<16x256xf32>
    %31 = arith.divf %29, %30 : vector<16x256xf32>
    %32 = arith.mulf %25, %31 : vector<16x256xf32>
    %33 = arith.truncf %32 : vector<16x256xf32> to vector<16x256xbf16>
    %c0_23 = arith.constant 0 : index
    %c0_24 = arith.constant 0 : index
    %34 = vector.load %arg12[%c0_23, %c0_24] : memref<256x512xbf16, #tpu.memory_space<vmem>>, vector<256x512xbf16>
    %cst_25 = arith.constant dense<0.000000e+00> : vector<16x512xf32>
    %35 = tpu.matmul %33, %34, %cst_25 {dimension_numbers = #tpu.dot_dimension_numbers<[1], [0], [0], [1], [0, 0, 1, 1], [], []>} : vector<16x256xbf16>, vector<256x512xbf16>, vector<16x512xf32> -> vector<16x512xf32>
    %c0_26 = arith.constant 0 : index
    %c0_27 = arith.constant 0 : index
    %36 = vector.load %arg13[%c0_26, %c0_27] : memref<1x512xf32, #tpu.memory_space<vmem>>, vector<1x512xf32>
    %37 = vector.broadcast %36 : vector<1x512xf32> to vector<16x512xf32>
    %38 = arith.addf %35, %37 : vector<16x512xf32>
    %39 = vector.extract_strided_slice %38 {offsets = [0, 0], sizes = [16, 256], strides = [1, 1]} : vector<16x512xf32> to vector<16x256xf32>
    %40 = arith.addf %0, %39 : vector<16x256xf32>
    %cst_28 = arith.constant 0.707106769 : f32
    %41 = vector.broadcast %cst_28 : f32 to vector<16x256xf32>
    %42 = arith.mulf %40, %41 : vector<16x256xf32>
    %c0_29 = arith.constant 0 : index
    %c0_30 = arith.constant 0 : index
    %43 = vector.load %arg14[%c0_29, %c0_30] : memref<16x256xf32, #tpu.memory_space<vmem>>, vector<16x256xf32>
    tpu.vector_store %arg14[%c0_29, %c0_30], %42 {strides = array<i32>} : memref<16x256xf32, #tpu.memory_space<vmem>>, vector<16x256xf32>,
    %c0_31 = arith.constant 0 : index
    %c0_32 = arith.constant 0 : index
    %44 = vector.load %arg5[%c0_31, %c0_32] : memref<16x256xf32, #tpu.memory_space<vmem>>, vector<16x256xf32>
    %45 = vector.extract_strided_slice %38 {offsets = [0, 256], sizes = [16, 256], strides = [1, 1]} : vector<16x512xf32> to vector<16x256xf32>
    %46 = arith.addf %44, %45 : vector<16x256xf32>
    %c0_33 = arith.constant 0 : index
    %c0_34 = arith.constant 0 : index
    %47 = vector.load %arg15[%c0_33, %c0_34] : memref<16x256xf32, #tpu.memory_space<vmem>>, vector<16x256xf32>
    tpu.vector_store %arg15[%c0_33, %c0_34], %46 {strides = array<i32>} : memref<16x256xf32, #tpu.memory_space<vmem>>, vector<16x256xf32>,
    return
  }
  func.func @transform_0(%arg0: i32) -> (i32, i32) {
    %c0_i32 = arith.constant 0 : i32
    %c0_i32_0 = arith.constant 0 : i32
    return %arg0, %c0_i32 : i32, i32
  }
  func.func @transform_1(%arg0: i32) -> (i32, i32) {
    %c0_i32 = arith.constant 0 : i32
    %c0_i32_0 = arith.constant 0 : i32
    return %arg0, %c0_i32 : i32, i32
  }
  func.func @transform_2(%arg0: i32) -> (i32, i32) {
    %c0_i32 = arith.constant 0 : i32
    %c0_i32_0 = arith.constant 0 : i32
    return %arg0, %c0_i32 : i32, i32
  }
  func.func @transform_3(%arg0: i32) -> (i32, i32) {
    %c0_i32 = arith.constant 0 : i32
    %c0_i32_0 = arith.constant 0 : i32
    return %arg0, %c0_i32 : i32, i32
  }
  func.func @transform_4(%arg0: i32) -> (i32, i32) {
    %c0_i32 = arith.constant 0 : i32
    %c0_i32_0 = arith.constant 0 : i32
    return %arg0, %c0_i32 : i32, i32
  }
  func.func @transform_5(%arg0: i32) -> (i32, i32) {
    %c0_i32 = arith.constant 0 : i32
    %c0_i32_0 = arith.constant 0 : i32
    %c0_i32_1 = arith.constant 0 : i32
    return %c0_i32, %c0_i32_0 : i32, i32
  }
  func.func @transform_6(%arg0: i32) -> (i32, i32) {
    %c0_i32 = arith.constant 0 : i32
    %c0_i32_0 = arith.constant 0 : i32
    %c0_i32_1 = arith.constant 0 : i32
    return %c0_i32, %c0_i32_0 : i32, i32
  }
  func.func @transform_7(%arg0: i32) -> (i32, i32) {
    %c0_i32 = arith.constant 0 : i32
    %c0_i32_0 = arith.constant 0 : i32
    %c0_i32_1 = arith.constant 0 : i32
    return %c0_i32, %c0_i32_0 : i32, i32
  }
  func.func @transform_8(%arg0: i32) -> (i32, i32) {
    %c0_i32 = arith.constant 0 : i32
    %c0_i32_0 = arith.constant 0 : i32
    %c0_i32_1 = arith.constant 0 : i32
    return %c0_i32, %c0_i32_0 : i32, i32
  }
  func.func @transform_9(%arg0: i32) -> (i32, i32) {
    %c0_i32 = arith.constant 0 : i32
    %c0_i32_0 = arith.constant 0 : i32
    %c0_i32_1 = arith.constant 0 : i32
    return %c0_i32, %c0_i32_0 : i32, i32
  }
  func.func @transform_10(%arg0: i32) -> (i32, i32) {
    %c0_i32 = arith.constant 0 : i32
    %c0_i32_0 = arith.constant 0 : i32
    %c0_i32_1 = arith.constant 0 : i32
    return %c0_i32, %c0_i32_0 : i32, i32
  }
  func.func @transform_11(%arg0: i32) -> (i32, i32) {
    %c0_i32 = arith.constant 0 : i32
    %c0_i32_0 = arith.constant 0 : i32
    %c0_i32_1 = arith.constant 0 : i32
    return %c0_i32, %c0_i32_0 : i32, i32
  }
  func.func @transform_12(%arg0: i32) -> (i32, i32) {
    %c0_i32 = arith.constant 0 : i32
    %c0_i32_0 = arith.constant 0 : i32
    %c0_i32_1 = arith.constant 0 : i32
    return %c0_i32, %c0_i32_0 : i32, i32
  }
  func.func @transform_13(%arg0: i32) -> (i32, i32) {
    %c0_i32 = arith.constant 0 : i32
    %c0_i32_0 = arith.constant 0 : i32
    return %arg0, %c0_i32 : i32, i32
  }
  func.func @transform_14(%arg0: i32) -> (i32, i32) {
    %c0_i32 = arith.constant 0 : i32
    %c0_i32_0 = arith.constant 0 : i32
    return %arg0, %c0_i32 : i32, i32
  }
}

module attributes {stable_mosaic.version = 11 : i64} {
  func.func @kernel(%arg0: i32, %arg1: memref<16x256xf32, #tpu.memory_space<vmem>>, %arg2: memref<256x256xbf16, #tpu.memory_space<vmem>>, %arg3: memref<1x256xf32, #tpu.memory_space<vmem>>, %arg4: memref<16x256xf32, #tpu.memory_space<vmem>>) attributes {dimension_semantics = [#tpu.dimension_semantics<parallel>], iteration_bounds = array<i64: 1>, scalar_prefetch = 0 : i64, scratch_operands = 0 : i64, tpu.core_type = #tpu.core_type<tc>, window_params = [{transform_indices = @transform_0, window_bounds = array<i64: 16, 256>}, {pipeline_mode = #tpu.pipeline_mode<synchronous>, transform_indices = @transform_1, window_bounds = array<i64: 256, 256>}, {pipeline_mode = #tpu.pipeline_mode<synchronous>, transform_indices = @transform_2, window_bounds = array<i64: 1, 256>}, {transform_indices = @transform_3, window_bounds = array<i64: 16, 256>}]} {
    %c0 = arith.constant 0 : index
    %c0_0 = arith.constant 0 : index
    %0 = vector.load %arg1[%c0, %c0_0] : memref<16x256xf32, #tpu.memory_space<vmem>>, vector<16x256xf32>
    %cst = arith.constant 0.000000e+00 : f32
    %1 = vector.broadcast %cst : f32 to vector<16x256xf32>
    %2 = arith.maximumf %0, %1 : vector<16x256xf32>
    %3 = arith.truncf %2 : vector<16x256xf32> to vector<16x256xbf16>
    %c0_1 = arith.constant 0 : index
    %c0_2 = arith.constant 0 : index
    %4 = vector.load %arg2[%c0_1, %c0_2] : memref<256x256xbf16, #tpu.memory_space<vmem>>, vector<256x256xbf16>
    %cst_3 = arith.constant dense<0.000000e+00> : vector<16x256xf32>
    %5 = tpu.matmul %3, %4, %cst_3 {dimension_numbers = #tpu.dot_dimension_numbers<[1], [0], [0], [1], [0, 0, 1, 1], [], []>} : vector<16x256xbf16>, vector<256x256xbf16>, vector<16x256xf32> -> vector<16x256xf32>
    %c0_4 = arith.constant 0 : index
    %c0_5 = arith.constant 0 : index
    %6 = vector.load %arg3[%c0_4, %c0_5] : memref<1x256xf32, #tpu.memory_space<vmem>>, vector<1x256xf32>
    %7 = vector.broadcast %6 : vector<1x256xf32> to vector<16x256xf32>
    %8 = arith.addf %5, %7 : vector<16x256xf32>
    %cst_6 = arith.constant 0.000000e+00 : f32
    %9 = vector.broadcast %cst_6 : f32 to vector<16x256xf32>
    %10 = arith.maximumf %8, %9 : vector<16x256xf32>
    %c0_7 = arith.constant 0 : index
    %c0_8 = arith.constant 0 : index
    %11 = vector.load %arg4[%c0_7, %c0_8] : memref<16x256xf32, #tpu.memory_space<vmem>>, vector<16x256xf32>
    tpu.vector_store %arg4[%c0_7, %c0_8], %10 {strides = array<i32>} : memref<16x256xf32, #tpu.memory_space<vmem>>, vector<16x256xf32>,
    return
  }
  func.func @transform_0(%arg0: i32) -> (i32, i32) {
    %c0_i32 = arith.constant 0 : i32
    %c0_i32_0 = arith.constant 0 : i32
    return %arg0, %c0_i32 : i32, i32
  }
  func.func @transform_1(%arg0: i32) -> (i32, i32) {
    %c0_i32 = arith.constant 0 : i32
    %c0_i32_0 = arith.constant 0 : i32
    %c0_i32_1 = arith.constant 0 : i32
    return %c0_i32, %c0_i32_0 : i32, i32
  }
  func.func @transform_2(%arg0: i32) -> (i32, i32) {
    %c0_i32 = arith.constant 0 : i32
    %c0_i32_0 = arith.constant 0 : i32
    %c0_i32_1 = arith.constant 0 : i32
    return %c0_i32, %c0_i32_0 : i32, i32
  }
  func.func @transform_3(%arg0: i32) -> (i32, i32) {
    %c0_i32 = arith.constant 0 : i32
    %c0_i32_0 = arith.constant 0 : i32
    return %arg0, %c0_i32 : i32, i32
  }
}

module attributes {stable_mosaic.version = 11 : i64} {
  func.func @kernel(%arg0: i32, %arg1: memref<16x256xf32, #tpu.memory_space<vmem>>, %arg2: memref<16x4xf32, #tpu.memory_space<vmem>>, %arg3: memref<256x8xbf16, #tpu.memory_space<vmem>>, %arg4: memref<1x8xf32, #tpu.memory_space<vmem>>, %arg5: memref<16x4xf32, #tpu.memory_space<vmem>>, %arg6: memref<16x4xf32, #tpu.memory_space<vmem>>) attributes {dimension_semantics = [#tpu.dimension_semantics<parallel>], iteration_bounds = array<i64: 1>, scalar_prefetch = 0 : i64, scratch_operands = 0 : i64, tpu.core_type = #tpu.core_type<tc>, window_params = [{transform_indices = @transform_0, window_bounds = array<i64: 16, 256>}, {transform_indices = @transform_1, window_bounds = array<i64: 16, 4>}, {pipeline_mode = #tpu.pipeline_mode<synchronous>, transform_indices = @transform_2, window_bounds = array<i64: 256, 8>}, {pipeline_mode = #tpu.pipeline_mode<synchronous>, transform_indices = @transform_3, window_bounds = array<i64: 1, 8>}, {transform_indices = @transform_4, window_bounds = array<i64: 16, 4>}, {transform_indices = @transform_5, window_bounds = array<i64: 16, 4>}]} {
    %c0 = arith.constant 0 : index
    %c0_0 = arith.constant 0 : index
    %0 = vector.load %arg1[%c0, %c0_0] : memref<16x256xf32, #tpu.memory_space<vmem>>, vector<16x256xf32>
    %1 = arith.truncf %0 : vector<16x256xf32> to vector<16x256xbf16>
    %c0_1 = arith.constant 0 : index
    %c0_2 = arith.constant 0 : index
    %2 = vector.load %arg3[%c0_1, %c0_2] : memref<256x8xbf16, #tpu.memory_space<vmem>>, vector<256x8xbf16>
    %cst = arith.constant dense<0.000000e+00> : vector<16x8xf32>
    %3 = tpu.matmul %1, %2, %cst {dimension_numbers = #tpu.dot_dimension_numbers<[1], [0], [0], [1], [0, 0, 1, 1], [], []>} : vector<16x256xbf16>, vector<256x8xbf16>, vector<16x8xf32> -> vector<16x8xf32>
    %c0_3 = arith.constant 0 : index
    %c0_4 = arith.constant 0 : index
    %4 = vector.load %arg4[%c0_3, %c0_4] : memref<1x8xf32, #tpu.memory_space<vmem>>, vector<1x8xf32>
    %5 = vector.broadcast %4 : vector<1x8xf32> to vector<16x8xf32>
    %6 = arith.addf %3, %5 : vector<16x8xf32>
    %7 = vector.extract_strided_slice %6 {offsets = [0, 0], sizes = [16, 4], strides = [1, 1]} : vector<16x8xf32> to vector<16x4xf32>
    %8 = vector.extract_strided_slice %6 {offsets = [0, 4], sizes = [16, 4], strides = [1, 1]} : vector<16x8xf32> to vector<16x4xf32>
    %c0_5 = arith.constant 0 : index
    %c0_6 = arith.constant 0 : index
    %9 = vector.load %arg6[%c0_5, %c0_6] : memref<16x4xf32, #tpu.memory_space<vmem>>, vector<16x4xf32>
    tpu.vector_store %arg6[%c0_5, %c0_6], %7 {strides = array<i32>} : memref<16x4xf32, #tpu.memory_space<vmem>>, vector<16x4xf32>,
    %c0_7 = arith.constant 0 : index
    %c0_8 = arith.constant 0 : index
    %10 = vector.load %arg2[%c0_7, %c0_8] : memref<16x4xf32, #tpu.memory_space<vmem>>, vector<16x4xf32>
    %11 = arith.subf %10, %8 : vector<16x4xf32>
    %cst_9 = arith.constant 0.000000e+00 : f32
    %12 = vector.broadcast %cst_9 : f32 to vector<16x4xf32>
    %13 = arith.subf %12, %7 : vector<16x4xf32>
    %14 = math.exp %13 : vector<16x4xf32>
    %15 = arith.mulf %11, %14 : vector<16x4xf32>
    %c0_10 = arith.constant 0 : index
    %c0_11 = arith.constant 0 : index
    %16 = vector.load %arg5[%c0_10, %c0_11] : memref<16x4xf32, #tpu.memory_space<vmem>>, vector<16x4xf32>
    tpu.vector_store %arg5[%c0_10, %c0_11], %15 {strides = array<i32>} : memref<16x4xf32, #tpu.memory_space<vmem>>, vector<16x4xf32>,
    return
  }
  func.func @transform_0(%arg0: i32) -> (i32, i32) {
    %c0_i32 = arith.constant 0 : i32
    %c0_i32_0 = arith.constant 0 : i32
    return %arg0, %c0_i32 : i32, i32
  }
  func.func @transform_1(%arg0: i32) -> (i32, i32) {
    %c0_i32 = arith.constant 0 : i32
    %c0_i32_0 = arith.constant 0 : i32
    return %arg0, %c0_i32 : i32, i32
  }
  func.func @transform_2(%arg0: i32) -> (i32, i32) {
    %c0_i32 = arith.constant 0 : i32
    %c0_i32_0 = arith.constant 0 : i32
    %c0_i32_1 = arith.constant 0 : i32
    return %c0_i32, %c0_i32_0 : i32, i32
  }
  func.func @transform_3(%arg0: i32) -> (i32, i32) {
    %c0_i32 = arith.constant 0 : i32
    %c0_i32_0 = arith.constant 0 : i32
    %c0_i32_1 = arith.constant 0 : i32
    return %c0_i32, %c0_i32_0 : i32, i32
  }
  func.func @transform_4(%arg0: i32) -> (i32, i32) {
    %c0_i32 = arith.constant 0 : i32
    %c0_i32_0 = arith.constant 0 : i32
    return %arg0, %c0_i32 : i32, i32
  }
  func.func @transform_5(%arg0: i32) -> (i32, i32) {
    %c0_i32 = arith.constant 0 : i32
    %c0_i32_0 = arith.constant 0 : i32
    return %arg0, %c0_i32 : i32, i32
  }
}

</mosaic_0001>

<llo_original>
// kernel: block_forward.10
$region0: #{block_forward.10}
  #allocation0 [shape = 'u32[]', space=smem, size = 0x4, offset = 0x4, fixed_abs, tag = 'smem constant byte address 0x4 - core index']
  #allocation1 [shape = 'u32[144,128]{1,0:T(1,128)}', space=vmem, size = 0x12000, scoped, tag = 'internal scratch']
  %s0 = inlined_call_operand.vmem [shape: f32[16,4], index: 0, kind: input, shape index: {}]
  %s1 = inlined_call_operand.vmem [shape: bf16[4,256], index: 1, kind: input, shape index: {}]
  %s2 = inlined_call_operand.vmem [shape: f32[1,256], index: 2, kind: input, shape index: {}]
  %s3 = inlined_call_operand.vmem [shape: f32[16,256], index: 3, kind: output, shape index: {}]
  %s4 = sld [smem:[#allocation0]]
  $region22: #{block_forward.10} parent=0
    _
  %s6 = ssub.s32 1, %s4
  %s7 = scalar_select 0, %s6, %s4
  // Predicated region
  $region2: #{block_forward.10} parent=0 // pred_check
    _
  $region3: #{block_forward.10} parent=0 // pred_check_branch
    %9 = sbr.rel (0) target = $region5
  $region4: #{block_forward.10} parent=0 // pred_region
    _
  $region5: #{block_forward.10} parent=0 // pred_fallthru
    _
  // Predicated region
  $region6: #{block_forward.10} parent=0 // pred_check
    _
  $region7: #{block_forward.10} parent=0 // pred_check_branch
    %11 = sbr.rel (0) target = $region9
  $region8: #{block_forward.10} parent=0 // pred_region
    _
  $region9: #{block_forward.10} parent=0 // pred_fallthru
    _
  // Predicated region
  $region10: #{block_forward.10} parent=0 // pred_check
    _
  $region11: #{block_forward.10} parent=0 // pred_check_branch
    %13 = sbr.rel (0) target = $region13
  $region12: #{block_forward.10} parent=0 // pred_region
    _
  $region13: #{block_forward.10} parent=0 // pred_fallthru
    _
  %v15 = vld [vmem:[%s0] sm:$0xff]
  %v16 = vld [vmem:[%s0 + $0x8] sm:$0xff]
  %v17 = vpack.c.bf16 %v16, %v15
  %v18 = vld [vmem:[%s1] sm:$0xf]
  %v19 = vld [vmem:[%s2] sm:$0x3]
  %v21 = vlaneseq
  %v22 = vshrl.u32 %v21, 7
  %v23 = vsub.s32 0, %v22
  %v24 = vrot.slane %v19, %v23
  %v25 = vlaneseq
  %v26 = vshrl.u32 %v25, 7
  %v27 = vsub.s32 1, %v26
  %v28 = vrot.slane %v19, %v27
  %v33 = vunpack.c.l.s4 1983009808
  %v34 = vunpack.c.0.s8 %v33
  %v35 = vlaneseq
  %v36 = vshrl.u32 %v35, 7
  %v37 = vsub.s32 %v34, %v36
  %v38 = vrot.slane %v18, %v37
  %v39 = vcombine.high %v38, %v38
  %vm40 = vcmask 31744
  %v42 = vsel %vm40, %v17, 0
  %vm44 = vcmask 1041408
  %v46 = vsel %vm44, %v38, 0
  %v49 = vsel %vm44, %v39, 0
  %51 = vmatprep.subr.bf16.mxu0 %v49
  %52 = vmatpush1.bf16.msra.mxu0 %v46
  %53 = vmatprep.subr.bf16.mxu0 0
  %54 = vmatpush1.bf16.msra.mxu0 0
  %55 = vmatprep.subr.bf16.mxu0 0
  %56 = vmatpush1.bf16.msra.mxu0 0
  %57 = vmatprep.subr.bf16.mxu0 0
  %58 = vmatpush1.bf16.msra.mxu0 0
  %59 = vmatprep.subr.bf16.mxu0 0
  %60 = vmatpush1.bf16.msra.mxu0 0
  %61 = vmatprep.subr.bf16.mxu0 0
  %62 = vmatpush1.bf16.msra.mxu0 0
  %63 = vmatprep.subr.bf16.mxu0 0
  %64 = vmatpush1.bf16.msra.mxu0 0
  %65 = vmatprep.subr.bf16.mxu0 0
  %66 = vmatpush1.bf16.msra.mxu0 0
  %67 = vmatprep.subr.bf16.mxu0 0
  %68 = vmatpush1.bf16.msra.mxu0 0
  %69 = vmatprep.subr.bf16.mxu0 0
  %70 = vmatpush1.bf16.msra.mxu0 0
  %71 = vmatprep.subr.bf16.mxu0 0
  %72 = vmatpush1.bf16.msra.mxu0 0
  %73 = vmatprep.subr.bf16.mxu0 0
  %74 = vmatpush1.bf16.msra.mxu0 0
  %75 = vmatprep.subr.bf16.mxu0 0
  %76 = vmatpush1.bf16.msra.mxu0 0
  %77 = vmatprep.subr.bf16.mxu0 0
  %78 = vmatpush1.bf16.msra.mxu0 0
  %79 = vmatprep.subr.bf16.mxu0 0
  %80 = vmatpush1.bf16.msra.mxu0 0
  %81 = vmatprep.subr.bf16.mxu0 0
  %82 = vmatpush1.bf16.msra.mxu0 0
  %83 = vmatprep.mubr.bf16.mxu0 0
  %84 = vmatmul.mubr.bf16.gmra.mrb[0].mxu0 %v42
  %v85 = vpop.f32.mrb[0].mxu0
  %v86 = vadd.f32 %v24, %v85
  %v87 = vpop.f32.mrb[0].mxu0
  %v88 = vadd.f32 %v28, %v87
  %v89 = vpop.f32.mrb[0].mxu0
  %v90 = vadd.f32 %v24, %v89
  %v91 = vpop.f32.mrb[0].mxu0
  %v92 = vadd.f32 %v28, %v91
  %93 = vdwg.mxu0
  %v94 = vmax.f32 %v86, 0.0
  %v95 = vmax.f32 %v88, 0.0
  %v96 = vmax.f32 %v90, 0.0
  %v97 = vmax.f32 %v92, 0.0
  %98 = vst [vmem:[%s3] sm:$0xff] %v94
  %99 = vst [vmem:[%s3 + $0x8] sm:$0xff] %v95
  %100 = vst [vmem:[%s3 + $0x10] sm:$0xff] %v96
  %101 = vst [vmem:[%s3 + $0x18] sm:$0xff] %v97
  // Predicated region
  $region14: #{block_forward.10} parent=0 // pred_check
    _
  $region15: #{block_forward.10} parent=0 // pred_check_branch
    %103 = sbr.rel (0) target = $region17
  $region16: #{block_forward.10} parent=0 // pred_region
    _
  $region17: #{block_forward.10} parent=0 // pred_fallthru
    _
  // Predicated region
  $region18: #{block_forward.10} parent=0 // pred_check
    _
  $region19: #{block_forward.10} parent=0 // pred_check_branch
    %105 = sbr.rel (0) target = $region21
  $region20: #{block_forward.10} parent=0 // pred_region
    _
  $region21: #{block_forward.10} parent=0 // pred_fallthru
    _

// kernel: block_forward.13
$region0: #{block_forward.13}
  #allocation0 [shape = 'u32[]', space=smem, size = 0x4, offset = 0x4, fixed_abs, tag = 'smem constant byte address 0x4 - core index']
  #allocation1 [shape = 'u32[144,128]{1,0:T(1,128)}', space=vmem, size = 0x12000, scoped, tag = 'internal scratch']
  %s0 = inlined_call_operand.vmem [shape: f32[16,256], index: 0, kind: input, shape index: {}]
  %s1 = inlined_call_operand.vmem [shape: bf16[256,256], index: 1, kind: input, shape index: {}]
  %s2 = inlined_call_operand.vmem [shape: f32[1,256], index: 2, kind: input, shape index: {}]
  %s3 = inlined_call_operand.vmem [shape: f32[16,256], index: 3, kind: output, shape index: {}]
  %s4 = sld [smem:[#allocation0]]
  $region22: #{block_forward.13} parent=0
    _
  %s6 = ssub.s32 1, %s4
  %s7 = scalar_select 0, %s6, %s4
  // Predicated region
  $region2: #{block_forward.13} parent=0 // pred_check
    _
  $region3: #{block_forward.13} parent=0 // pred_check_branch
    %9 = sbr.rel (0) target = $region5
  $region4: #{block_forward.13} parent=0 // pred_region
    _
  $region5: #{block_forward.13} parent=0 // pred_fallthru
    _
  // Predicated region
  $region6: #{block_forward.13} parent=0 // pred_check
    _
  $region7: #{block_forward.13} parent=0 // pred_check_branch
    %11 = sbr.rel (0) target = $region9
  $region8: #{block_forward.13} parent=0 // pred_region
    _
  $region9: #{block_forward.13} parent=0 // pred_fallthru
    _
  // Predicated region
  $region10: #{block_forward.13} parent=0 // pred_check
    _
  $region11: #{block_forward.13} parent=0 // pred_check_branch
    %13 = sbr.rel (0) target = $region13
  $region12: #{block_forward.13} parent=0 // pred_region
    _
  $region13: #{block_forward.13} parent=0 // pred_fallthru
    _
  %v14 = vld [vmem:[%s0] sm:$0xff]
  %v15 = vld [vmem:[%s0 + $0x8] sm:$0xff]
  %v16 = vld [vmem:[%s0 + $0x10] sm:$0xff]
  %v17 = vld [vmem:[%s0 + $0x18] sm:$0xff]
  %v18 = vmax.f32 %v14, 0.0
  %v19 = vmax.f32 %v15, 0.0
  %v20 = vmax.f32 %v16, 0.0
  %v21 = vmax.f32 %v17, 0.0
  %v22 = vpack.c.bf16 %v20, %v18
  %v23 = vpack.c.bf16 %v21, %v19
  %v24 = vld [vmem:[%s1] sm:$0xff]
  %v25 = vld [vmem:[%s1 + $0x8] sm:$0xff]
  %v26 = vld [vmem:[%s1 + $0x10] sm:$0xff]
  %v27 = vld [vmem:[%s1 + $0x18] sm:$0xff]
  %v28 = vld [vmem:[%s1 + $0x20] sm:$0xff]
  %v29 = vld [vmem:[%s1 + $0x28] sm:$0xff]
  %v30 = vld [vmem:[%s1 + $0x30] sm:$0xff]
  %v31 = vld [vmem:[%s1 + $0x38] sm:$0xff]
  %v32 = vld [vmem:[%s1 + $0x40] sm:$0xff]
  %v33 = vld [vmem:[%s1 + $0x48] sm:$0xff]
  %v34 = vld [vmem:[%s1 + $0x50] sm:$0xff]
  %v35 = vld [vmem:[%s1 + $0x58] sm:$0xff]
  %v36 = vld [vmem:[%s1 + $0x60] sm:$0xff]
  %v37 = vld [vmem:[%s1 + $0x68] sm:$0xff]
  %v38 = vld [vmem:[%s1 + $0x70] sm:$0xff]
  %v39 = vld [vmem:[%s1 + $0x78] sm:$0xff]
  %v40 = vld [vmem:[%s1 + $0x80] sm:$0xff]
  %v41 = vld [vmem:[%s1 + $0x88] sm:$0xff]
  %v42 = vld [vmem:[%s1 + $0x90] sm:$0xff]
  %v43 = vld [vmem:[%s1 + $0x98] sm:$0xff]
  %v44 = vld [vmem:[%s1 + $0xa0] sm:$0xff]
  %v45 = vld [vmem:[%s1 + $0xa8] sm:$0xff]
  %v46 = vld [vmem:[%s1 + $0xb0] sm:$0xff]
  %v47 = vld [vmem:[%s1 + $0xb8] sm:$0xff]
  %v48 = vld [vmem:[%s1 + $0xc0] sm:$0xff]
  %v49 = vld [vmem:[%s1 + $0xc8] sm:$0xff]
  %v50 = vld [vmem:[%s1 + $0xd0] sm:$0xff]
  %v51 = vld [vmem:[%s1 + $0xd8] sm:$0xff]
  %v52 = vld [vmem:[%s1 + $0xe0] sm:$0xff]
  %v53 = vld [vmem:[%s1 + $0xe8] sm:$0xff]
  %v54 = vld [vmem:[%s1 + $0xf0] sm:$0xff]
  %v55 = vld [vmem:[%s1 + $0xf8] sm:$0xff]
  %v56 = vld [vmem:[%s2] sm:$0x3]
  %v58 = vlaneseq
  %v59 = vshrl.u32 %v58, 7
  %v60 = vsub.s32 0, %v59
  %v61 = vrot.slane %v56, %v60
  %v62 = vlaneseq
  %v63 = vshrl.u32 %v62, 7
  %v64 = vsub.s32 1, %v63
  %v65 = vrot.slane %v56, %v64
  %v100 = vunpack.c.l.b16 %v24
  %v101 = vunpack.c.h.b16 %v24
  %v102 = vunpack.c.l.b16 %v25
  %v103 = vunpack.c.h.b16 %v25
  %v104 = vunpack.c.l.b16 %v26
  %v105 = vunpack.c.h.b16 %v26
  %v106 = vunpack.c.l.b16 %v27
  %v107 = vunpack.c.h.b16 %v27
  %v108 = vunpack.c.l.b16 %v28
  %v109 = vunpack.c.h.b16 %v28
  %v110 = vunpack.c.l.b16 %v29
  %v111 = vunpack.c.h.b16 %v29
  %v112 = vunpack.c.l.b16 %v30
  %v113 = vunpack.c.h.b16 %v30
  %v114 = vunpack.c.l.b16 %v31
  %v115 = vunpack.c.h.b16 %v31
  %v116 = vunpack.c.l.b16 %v32
  %v117 = vunpack.c.h.b16 %v32
  %v118 = vunpack.c.l.b16 %v33
  %v119 = vunpack.c.h.b16 %v33
  %v120 = vunpack.c.l.b16 %v34
  %v121 = vunpack.c.h.b16 %v34
  %v122 = vunpack.c.l.b16 %v35
  %v123 = vunpack.c.h.b16 %v35
  %v124 = vunpack.c.l.b16 %v36
  %v125 = vunpack.c.h.b16 %v36
  %v126 = vunpack.c.l.b16 %v37
  %v127 = vunpack.c.h.b16 %v37
  %v128 = vunpack.c.l.b16 %v38
  %v129 = vunpack.c.h.b16 %v38
  %v130 = vunpack.c.l.b16 %v39
  %v131 = vunpack.c.h.b16 %v39
  %v132 = vunpack.c.l.b16 %v40
  %v133 = vunpack.c.h.b16 %v40
  %v134 = vunpack.c.l.b16 %v41
  %v135 = vunpack.c.h.b16 %v41
  %v136 = vunpack.c.l.b16 %v42
  %v137 = vunpack.c.h.b16 %v42
  %v138 = vunpack.c.l.b16 %v43
  %v139 = vunpack.c.h.b16 %v43
  %v140 = vunpack.c.l.b16 %v44
  %v141 = vunpack.c.h.b16 %v44
  %v142 = vunpack.c.l.b16 %v45
  %v143 = vunpack.c.h.b16 %v45
  %v144 = vunpack.c.l.b16 %v46
  %v145 = vunpack.c.h.b16 %v46
  %v146 = vunpack.c.l.b16 %v47
  %v147 = vunpack.c.h.b16 %v47
  %v148 = vunpack.c.l.b16 %v48
  %v149 = vunpack.c.h.b16 %v48
  %v150 = vunpack.c.l.b16 %v49
  %v151 = vunpack.c.h.b16 %v49
  %v152 = vunpack.c.l.b16 %v50
  %v153 = vunpack.c.h.b16 %v50
  %v154 = vunpack.c.l.b16 %v51
  %v155 = vunpack.c.h.b16 %v51
  %v156 = vunpack.c.l.b16 %v52
  %v157 = vunpack.c.h.b16 %v52
  %v158 = vunpack.c.l.b16 %v53
  %v159 = vunpack.c.h.b16 %v53
  %v160 = vunpack.c.l.b16 %v54
  %v161 = vunpack.c.h.b16 %v54
  %v162 = vunpack.c.l.b16 %v55
  %v163 = vunpack.c.h.b16 %v55
  %v164 = vpack.c.b16 %v102, %v100
  %v165 = vpack.c.b16 %v103, %v101
  %v166 = vpack.c.b16 %v106, %v104
  %v167 = vpack.c.b16 %v107, %v105
  %v168 = vpack.c.b16 %v110, %v108
  %v169 = vpack.c.b16 %v111, %v109
  %v170 = vpack.c.b16 %v114, %v112
  %v171 = vpack.c.b16 %v115, %v113
  %v172 = vpack.c.b16 %v118, %v116
  %v173 = vpack.c.b16 %v119, %v117
  %v174 = vpack.c.b16 %v122, %v120
  %v175 = vpack.c.b16 %v123, %v121
  %v176 = vpack.c.b16 %v126, %v124
  %v177 = vpack.c.b16 %v127, %v125
  %v178 = vpack.c.b16 %v130, %v128
  %v179 = vpack.c.b16 %v131, %v129
  %v180 = vpack.c.b16 %v134, %v132
  %v181 = vpack.c.b16 %v135, %v133
  %v182 = vpack.c.b16 %v138, %v136
  %v183 = vpack.c.b16 %v139, %v137
  %v184 = vpack.c.b16 %v142, %v140
  %v185 = vpack.c.b16 %v143, %v141
  %v186 = vpack.c.b16 %v146, %v144
  %v187 = vpack.c.b16 %v147, %v145
  %v188 = vpack.c.b16 %v150, %v148
  %v189 = vpack.c.b16 %v151, %v149
  %v190 = vpack.c.b16 %v154, %v152
  %v191 = vpack.c.b16 %v155, %v153
  %v192 = vpack.c.b16 %v158, %v156
  %v193 = vpack.c.b16 %v159, %v157
  %v194 = vpack.c.b16 %v162, %v160
  %v195 = vpack.c.b16 %v163, %v161
  %228 = vmatprep.subr.bf16.mxu0 %v165
  %229 = vmatpush1.bf16.msra.mxu0 %v164
  %230 = vmatprep.subr.bf16.mxu0 %v167
  %231 = vmatpush1.bf16.msra.mxu0 %v166
  %232 = vmatprep.subr.bf16.mxu0 %v169
  %233 = vmatpush1.bf16.msra.mxu0 %v168
  %234 = vmatprep.subr.bf16.mxu0 %v171
  %235 = vmatpush1.bf16.msra.mxu0 %v170
  %236 = vmatprep.subr.bf16.mxu0 %v173
  %237 = vmatpush1.bf16.msra.mxu0 %v172
  %238 = vmatprep.subr.bf16.mxu0 %v175
  %239 = vmatpush1.bf16.msra.mxu0 %v174
  %240 = vmatprep.subr.bf16.mxu0 %v177
  %241 = vmatpush1.bf16.msra.mxu0 %v176
  %242 = vmatprep.subr.bf16.mxu0 %v179
  %243 = vmatpush1.bf16.msra.mxu0 %v178
  %244 = vmatprep.subr.bf16.mxu0 %v181
  %245 = vmatpush1.bf16.msra.mxu0 %v180
  %246 = vmatprep.subr.bf16.mxu0 %v183
  %247 = vmatpush1.bf16.msra.mxu0 %v182
  %248 = vmatprep.subr.bf16.mxu0 %v185
  %249 = vmatpush1.bf16.msra.mxu0 %v184
  %250 = vmatprep.subr.bf16.mxu0 %v187
  %251 = vmatpush1.bf16.msra.mxu0 %v186
  %252 = vmatprep.subr.bf16.mxu0 %v189
  %253 = vmatpush1.bf16.msra.mxu0 %v188
  %254 = vmatprep.subr.bf16.mxu0 %v191
  %255 = vmatpush1.bf16.msra.mxu0 %v190
  %256 = vmatprep.subr.bf16.mxu0 %v193
  %257 = vmatpush1.bf16.msra.mxu0 %v192
  %258 = vmatprep.subr.bf16.mxu0 %v195
  %259 = vmatpush1.bf16.msra.mxu0 %v194
  %260 = vmatprep.mubr.bf16.mxu0 %v23
  %261 = vmatmul.mubr.bf16.gmra.mrb[0].mxu0 %v22
  %v262 = vpop.f32.mrb[0].mxu0
  %v263 = vadd.f32 %v61, %v262
  %v264 = vpop.f32.mrb[0].mxu0
  %v265 = vadd.f32 %v65, %v264
  %v266 = vpop.f32.mrb[0].mxu0
  %v267 = vadd.f32 %v61, %v266
  %v268 = vpop.f32.mrb[0].mxu0
  %v269 = vadd.f32 %v65, %v268
  %270 = vdwg.mxu0
  %v271 = vmax.f32 %v263, 0.0
  %v272 = vmax.f32 %v265, 0.0
  %v273 = vmax.f32 %v267, 0.0
  %v274 = vmax.f32 %v269, 0.0
  %275 = vst [vmem:[%s3] sm:$0xff] %v271
  %276 = vst [vmem:[%s3 + $0x8] sm:$0xff] %v272
  %277 = vst [vmem:[%s3 + $0x10] sm:$0xff] %v273
  %278 = vst [vmem:[%s3 + $0x18] sm:$0xff] %v274
  // Predicated region
  $region14: #{block_forward.13} parent=0 // pred_check
    _
  $region15: #{block_forward.13} parent=0 // pred_check_branch
    %280 = sbr.rel (0) target = $region17
  $region16: #{block_forward.13} parent=0 // pred_region
    _
  $region17: #{block_forward.13} parent=0 // pred_fallthru
    _
  // Predicated region
  $region18: #{block_forward.13} parent=0 // pred_check
    _
  $region19: #{block_forward.13} parent=0 // pred_check_branch
    %282 = sbr.rel (0) target = $region21
  $region20: #{block_forward.13} parent=0 // pred_region
    _
  $region21: #{block_forward.13} parent=0 // pred_fallthru
    _

// kernel: block_forward.14
$region0: #{block_forward.14}
  #allocation0 [shape = 'u32[]', space=smem, size = 0x4, offset = 0x4, fixed_abs, tag = 'smem constant byte address 0x4 - core index']
  #allocation1 [shape = 'u32[144,128]{1,0:T(1,128)}', space=vmem, size = 0x12000, scoped, tag = 'internal scratch']
  %s0 = inlined_call_operand.vmem [shape: f32[16,256], index: 0, kind: input, shape index: {}]
  %s1 = inlined_call_operand.vmem [shape: f32[16,4], index: 1, kind: input, shape index: {}]
  %s2 = inlined_call_operand.vmem [shape: bf16[256,8], index: 2, kind: input, shape index: {}]
  %s3 = inlined_call_operand.vmem [shape: f32[1,8], index: 3, kind: input, shape index: {}]
  %s4 = inlined_call_operand.vmem [shape: f32[16,4], index: 4, kind: output, shape index: {0}]
  %s5 = inlined_call_operand.vmem [shape: f32[16,4], index: 5, kind: output, shape index: {1}]
  %6 = xla_tuple %s4, %s5
  %s7 = sld [smem:[#allocation0]]
  $region34: #{block_forward.14} parent=0
    _
  %s9 = ssub.s32 1, %s7
  %s10 = scalar_select 0, %s9, %s7
  // Predicated region
  $region2: #{block_forward.14} parent=0 // pred_check
    _
  $region3: #{block_forward.14} parent=0 // pred_check_branch
    %12 = sbr.rel (0) target = $region5
  $region4: #{block_forward.14} parent=0 // pred_region
    _
  $region5: #{block_forward.14} parent=0 // pred_fallthru
    _
  // Predicated region
  $region6: #{block_forward.14} parent=0 // pred_check
    _
  $region7: #{block_forward.14} parent=0 // pred_check_branch
    %14 = sbr.rel (0) target = $region9
  $region8: #{block_forward.14} parent=0 // pred_region
    _
  $region9: #{block_forward.14} parent=0 // pred_fallthru
    _
  // Predicated region
  $region10: #{block_forward.14} parent=0 // pred_check
    _
  $region11: #{block_forward.14} parent=0 // pred_check_branch
    %16 = sbr.rel (0) target = $region13
  $region12: #{block_forward.14} parent=0 // pred_region
    _
  $region13: #{block_forward.14} parent=0 // pred_fallthru
    _
  // Predicated region
  $region14: #{block_forward.14} parent=0 // pred_check
    _
  $region15: #{block_forward.14} parent=0 // pred_check_branch
    %18 = sbr.rel (0) target = $region17
  $region16: #{block_forward.14} parent=0 // pred_region
    _
  $region17: #{block_forward.14} parent=0 // pred_fallthru
    _
  %v20 = vld [vmem:[%s0] sm:$0xff]
  %v21 = vld [vmem:[%s0 + $0x8] sm:$0xff]
  %v22 = vld [vmem:[%s0 + $0x10] sm:$0xff]
  %v23 = vld [vmem:[%s0 + $0x18] sm:$0xff]
  %v24 = vpack.c.bf16 %v22, %v20
  %v25 = vpack.c.bf16 %v23, %v21
  %v26 = vld [vmem:[%s2] sm:$0xf]
  %v27 = vld [vmem:[%s2 + $0x4] sm:$0xf]
  %v28 = vld [vmem:[%s2 + $0x8] sm:$0xf]
  %v29 = vld [vmem:[%s2 + $0xc] sm:$0xf]
  %v30 = vld [vmem:[%s2 + $0x10] sm:$0xf]
  %v31 = vld [vmem:[%s2 + $0x14] sm:$0xf]
  %v32 = vld [vmem:[%s2 + $0x18] sm:$0xf]
  %v33 = vld [vmem:[%s2 + $0x1c] sm:$0xf]
  %v34 = vld [vmem:[%s2 + $0x20] sm:$0xf]
  %v35 = vld [vmem:[%s2 + $0x24] sm:$0xf]
  %v36 = vld [vmem:[%s2 + $0x28] sm:$0xf]
  %v37 = vld [vmem:[%s2 + $0x2c] sm:$0xf]
  %v38 = vld [vmem:[%s2 + $0x30] sm:$0xf]
  %v39 = vld [vmem:[%s2 + $0x34] sm:$0xf]
  %v40 = vld [vmem:[%s2 + $0x38] sm:$0xf]
  %v41 = vld [vmem:[%s2 + $0x3c] sm:$0xf]
  %v42 = vld [vmem:[%s2 + $0x40] sm:$0xf]
  %v43 = vld [vmem:[%s2 + $0x44] sm:$0xf]
  %v44 = vld [vmem:[%s2 + $0x48] sm:$0xf]
  %v45 = vld [vmem:[%s2 + $0x4c] sm:$0xf]
  %v46 = vld [vmem:[%s2 + $0x50] sm:$0xf]
  %v47 = vld [vmem:[%s2 + $0x54] sm:$0xf]
  %v48 = vld [vmem:[%s2 + $0x58] sm:$0xf]
  %v49 = vld [vmem:[%s2 + $0x5c] sm:$0xf]
  %v50 = vld [vmem:[%s2 + $0x60] sm:$0xf]
  %v51 = vld [vmem:[%s2 + $0x64] sm:$0xf]
  %v52 = vld [vmem:[%s2 + $0x68] sm:$0xf]
  %v53 = vld [vmem:[%s2 + $0x6c] sm:$0xf]
  %v54 = vld [vmem:[%s2 + $0x70] sm:$0xf]
  %v55 = vld [vmem:[%s2 + $0x74] sm:$0xf]
  %v56 = vld [vmem:[%s2 + $0x78] sm:$0xf]
  %v57 = vld [vmem:[%s2 + $0x7c] sm:$0xf]
  %v58 = vld [vmem:[%s3] sm:$0x1]
  %v60 = vlaneseq
  %v61 = vshrl.u32 %v60, 7
  %v62 = vsub.s32 0, %v61
  %v63 = vrot.slane %v58, %v62
  %v97 = vunpack.c.l.b16 %v26
  %v98 = vunpack.c.l.b16 %v27
  %v99 = vunpack.c.l.b16 %v28
  %v100 = vunpack.c.l.b16 %v29
  %v101 = vunpack.c.l.b16 %v30
  %v102 = vunpack.c.l.b16 %v31
  %v103 = vunpack.c.l.b16 %v32
  %v104 = vunpack.c.l.b16 %v33
  %v105 = vunpack.c.l.b16 %v34
  %v106 = vunpack.c.l.b16 %v35
  %v107 = vunpack.c.l.b16 %v36
  %v108 = vunpack.c.l.b16 %v37
  %v109 = vunpack.c.l.b16 %v38
  %v110 = vunpack.c.l.b16 %v39
  %v111 = vunpack.c.l.b16 %v40
  %v112 = vunpack.c.l.b16 %v41
  %v113 = vunpack.c.l.b16 %v42
  %v114 = vunpack.c.l.b16 %v43
  %v115 = vunpack.c.l.b16 %v44
  %v116 = vunpack.c.l.b16 %v45
  %v117 = vunpack.c.l.b16 %v46
  %v118 = vunpack.c.l.b16 %v47
  %v119 = vunpack.c.l.b16 %v48
  %v120 = vunpack.c.l.b16 %v49
  %v121 = vunpack.c.l.b16 %v50
  %v122 = vunpack.c.l.b16 %v51
  %v123 = vunpack.c.l.b16 %v52
  %v124 = vunpack.c.l.b16 %v53
  %v125 = vunpack.c.l.b16 %v54
  %v126 = vunpack.c.l.b16 %v55
  %v127 = vunpack.c.l.b16 %v56
  %v128 = vunpack.c.l.b16 %v57
  %v129 = vpack.c.b16 %v98, %v97
  %v130 = vpack.c.b16 %v100, %v99
  %v131 = vpack.c.b16 %v102, %v101
  %v132 = vpack.c.b16 %v104, %v103
  %v133 = vpack.c.b16 %v106, %v105
  %v134 = vpack.c.b16 %v108, %v107
  %v135 = vpack.c.b16 %v110, %v109
  %v136 = vpack.c.b16 %v112, %v111
  %v137 = vpack.c.b16 %v114, %v113
  %v138 = vpack.c.b16 %v116, %v115
  %v139 = vpack.c.b16 %v118, %v117
  %v140 = vpack.c.b16 %v120, %v119
  %v141 = vpack.c.b16 %v122, %v121
  %v142 = vpack.c.b16 %v124, %v123
  %v143 = vpack.c.b16 %v126, %v125
  %v144 = vpack.c.b16 %v128, %v127
  %161 = vmatprep.subr.bf16.mxu0 0
  %162 = vmatpush1.bf16.msra.mxu0 %v129
  %163 = vmatprep.subr.bf16.mxu0 0
  %164 = vmatpush1.bf16.msra.mxu0 %v130
  %165 = vmatprep.subr.bf16.mxu0 0
  %166 = vmatpush1.bf16.msra.mxu0 %v131
  %167 = vmatprep.subr.bf16.mxu0 0
  %168 = vmatpush1.bf16.msra.mxu0 %v132
  %169 = vmatprep.subr.bf16.mxu0 0
  %170 = vmatpush1.bf16.msra.mxu0 %v133
  %171 = vmatprep.subr.bf16.mxu0 0
  %172 = vmatpush1.bf16.msra.mxu0 %v134
  %173 = vmatprep.subr.bf16.mxu0 0
  %174 = vmatpush1.bf16.msra.mxu0 %v135
  %175 = vmatprep.subr.bf16.mxu0 0
  %176 = vmatpush1.bf16.msra.mxu0 %v136
  %177 = vmatprep.subr.bf16.mxu0 0
  %178 = vmatpush1.bf16.msra.mxu0 %v137
  %179 = vmatprep.subr.bf16.mxu0 0
  %180 = vmatpush1.bf16.msra.mxu0 %v138
  %181 = vmatprep.subr.bf16.mxu0 0
  %182 = vmatpush1.bf16.msra.mxu0 %v139
  %183 = vmatprep.subr.bf16.mxu0 0
  %184 = vmatpush1.bf16.msra.mxu0 %v140
  %185 = vmatprep.subr.bf16.mxu0 0
  %186 = vmatpush1.bf16.msra.mxu0 %v141
  %187 = vmatprep.subr.bf16.mxu0 0
  %188 = vmatpush1.bf16.msra.mxu0 %v142
  %189 = vmatprep.subr.bf16.mxu0 0
  %190 = vmatpush1.bf16.msra.mxu0 %v143
  %191 = vmatprep.subr.bf16.mxu0 0
  %192 = vmatpush1.bf16.msra.mxu0 %v144
  %193 = vmatprep.mubr.bf16.mxu0 %v25
  %194 = vmatmul.mubr.bf16.gmra.mrb[0].mxu0 %v24
  %v195 = vpop.f32.mrb[0].mxu0
  %v196 = vadd.f32 %v63, %v195
  %v197 = vpop.f32.mrb[0].mxu0
  %v198 = vpop.f32.mrb[0].mxu0
  %v199 = vadd.f32 %v63, %v198
  %v200 = vpop.f32.mrb[0].mxu0
  %201 = vdwg.mxu0
  %vm202 = vcmask 31744
  %203 = vst.msk [vmem:[%s5] sm:$0xff] %vm202, %v196
  %204 = vst.msk [vmem:[%s5 + $0x8] sm:$0xff] %vm202, %v199
  %v205 = vld [vmem:[%s1] sm:$0xff]
  %v206 = vld [vmem:[%s1 + $0x8] sm:$0xff]
  %209 = vrot.lane.b32.xlu0 %v196, 124
  %v210 = vpop.permute.xlu0 %209
  %211 = vrot.lane.b32.xlu0 %v199, 124
  %v212 = vpop.permute.xlu0 %211
  %v215 = vsub.f32 %v205, %v210
  %v216 = vsub.f32 %v206, %v212
  %v217 = vsub.f32 0.0, %v196
  %v218 = vsub.f32 0.0, %v199
  %v219 = vmul.f32 %v217, 1.442695
  %v220 = vpow.pop %v219
  %v221 = vmul.f32 %v218, 1.442695
  %v222 = vpow.pop %v221
  %v223 = vmul.f32 %v215, %v220
  %v224 = vmul.f32 %v216, %v222
  %225 = vst.msk [vmem:[%s4] sm:$0xff] %vm202, %v223
  %226 = vst.msk [vmem:[%s4 + $0x8] sm:$0xff] %vm202, %v224
  // Predicated region
  $region18: #{block_forward.14} parent=0 // pred_check
    _
  $region19: #{block_forward.14} parent=0 // pred_check_branch
    %228 = sbr.rel (0) target = $region21
  $region20: #{block_forward.14} parent=0 // pred_region
    _
  $region21: #{block_forward.14} parent=0 // pred_fallthru
    _
  // Predicated region
  $region22: #{block_forward.14} parent=0 // pred_check
    _
  $region23: #{block_forward.14} parent=0 // pred_check_branch
    %230 = sbr.rel (0) target = $region25
  $region24: #{block_forward.14} parent=0 // pred_region
    _
  $region25: #{block_forward.14} parent=0 // pred_fallthru
    _
  // Predicated region
  $region26: #{block_forward.14} parent=0 // pred_check
    _
  $region27: #{block_forward.14} parent=0 // pred_check_branch
    %232 = sbr.rel (0) target = $region29
  $region28: #{block_forward.14} parent=0 // pred_region
    _
  $region29: #{block_forward.14} parent=0 // pred_fallthru
    _
  // Predicated region
  $region30: #{block_forward.14} parent=0 // pred_check
    _
  $region31: #{block_forward.14} parent=0 // pred_check_branch
    %234 = sbr.rel (0) target = $region33
  $region32: #{block_forward.14} parent=0 // pred_region
    _
  $region33: #{block_forward.14} parent=0 // pred_fallthru
    _

// kernel: block_forward.11
$region0: #{block_forward.11}
  #allocation0 [shape = 'u32[]', space=smem, size = 0x4, offset = 0x4, fixed_abs, tag = 'smem constant byte address 0x4 - core index']
  #allocation1 [shape = 'u32[144,128]{1,0:T(1,128)}', space=vmem, size = 0x12000, scoped, tag = 'internal scratch']
  %s0 = inlined_call_operand.vmem [shape: f32[16,256], index: 0, kind: input, shape index: {}, may-alias: {0,13}]
  %s1 = inlined_call_operand.vmem [shape: f32[16,256], index: 1, kind: input, shape index: {}]
  %s2 = inlined_call_operand.vmem [shape: f32[16,256], index: 2, kind: input, shape index: {}]
  %s3 = inlined_call_operand.vmem [shape: f32[16,8], index: 3, kind: input, shape index: {}]
  %s4 = inlined_call_operand.vmem [shape: f32[16,256], index: 4, kind: input, shape index: {}, may-alias: {4,14}]
  %s5 = inlined_call_operand.vmem [shape: bf16[256,512], index: 5, kind: input, shape index: {}]
  %s6 = inlined_call_operand.hbm [shape: bf16[256,512], index: 6, kind: input, shape index: {}]
  %s7 = inlined_call_operand.hbm [shape: bf16[256,512], index: 7, kind: input, shape index: {}]
  %s8 = inlined_call_operand.vmem [shape: f32[1,512], index: 8, kind: input, shape index: {}]
  %s9 = inlined_call_operand.vmem [shape: bf16[8,512], index: 9, kind: input, shape index: {}]
  %s10 = inlined_call_operand.vmem [shape: f32[1,512], index: 10, kind: input, shape index: {}]
  %s11 = inlined_call_operand.hbm [shape: bf16[256,512], index: 11, kind: input, shape index: {}]
  %s12 = inlined_call_operand.vmem [shape: f32[1,512], index: 12, kind: input, shape index: {}]
  %s13 = inlined_call_operand.vmem [shape: f32[16,256], index: 13, kind: output, shape index: {0}, may-alias: {0,13}]
  %s14 = inlined_call_operand.vmem [shape: f32[16,256], index: 14, kind: output, shape index: {1}, may-alias: {4,14}]
  %15 = xla_tuple %s13, %s14
  %s16 = sld [smem:[#allocation0]]
  $region82: #{block_forward.11} parent=0
    _
  %s18 = ssub.s32 1, %s16
  %s19 = scalar_select 0, %s18, %s16
  $region1: #{block_forward.11} parent=0
    #allocation2 [shape = 'u8[262144]{0}', space=vmem, size = 0x40000, scoped, tag = 'input window, operand 6, single buffered']
    #allocation3 [shape = 's32[1]{0}', space=sflag, size = 0x4, scoped, tag = 'scoped memory for block_forward.11']
    #allocation4 [shape = 'u8[262144]{0}', space=vmem, size = 0x40000, scoped, tag = 'input window, operand 7, single buffered']
    #allocation5 [shape = 's32[1]{0}', space=sflag, size = 0x4, scoped, tag = 'scoped memory for block_forward.11']
    #allocation6 [shape = 'u8[262144]{0}', space=vmem, size = 0x40000, scoped, tag = 'input window, operand 11, single buffered']
    %20 = vsyncpa [#allocation3], 0
    %21 = vsyncpa [#allocation5], 0
    // Predicated region
    $region2: #{block_forward.11} parent=1 // pred_check
      _
    $region3: #{block_forward.11} parent=1 // pred_check_branch
      %23 = sbr.rel (0) target = $region5
    $region4: #{block_forward.11} parent=1 // pred_region
      _
    $region5: #{block_forward.11} parent=1 // pred_fallthru
      _
    // Predicated region
    $region6: #{block_forward.11} parent=1 // pred_check
      _
    $region7: #{block_forward.11} parent=1 // pred_check_branch
      %25 = sbr.rel (0) target = $region9
    $region8: #{block_forward.11} parent=1 // pred_region
      _
    $region9: #{block_forward.11} parent=1 // pred_fallthru
      _
    // Predicated region
    $region10: #{block_forward.11} parent=1 // pred_check
      _
    $region11: #{block_forward.11} parent=1 // pred_check_branch
      %27 = sbr.rel (0) target = $region13
    $region12: #{block_forward.11} parent=1 // pred_region
      _
    $region13: #{block_forward.11} parent=1 // pred_fallthru
      _
    // Predicated region
    $region14: #{block_forward.11} parent=1 // pred_check
      _
    $region15: #{block_forward.11} parent=1 // pred_check_branch
      %29 = sbr.rel (0) target = $region17
    $region16: #{block_forward.11} parent=1 // pred_region
      _
    $region17: #{block_forward.11} parent=1 // pred_fallthru
      _
    // Predicated region
    $region18: #{block_forward.11} parent=1 // pred_check
      _
    $region19: #{block_forward.11} parent=1 // pred_check_branch
      %31 = sbr.rel (0) target = $region21
    $region20: #{block_forward.11} parent=1 // pred_region
      _
    $region21: #{block_forward.11} parent=1 // pred_fallthru
      _
    // Predicated region
    $region22: #{block_forward.11} parent=1 // pred_check
      _
    $region23: #{block_forward.11} parent=1 // pred_check_branch
      %33 = sbr.rel (0) target = $region25
    $region24: #{block_forward.11} parent=1 // pred_region
      _
    $region25: #{block_forward.11} parent=1 // pred_fallthru
      _
    // Predicated region
    $region26: #{block_forward.11} parent=1 // pred_check
      _
    $region27: #{block_forward.11} parent=1 // pred_check_branch
      %35 = sbr.rel (0) target = $region29
    $region28: #{block_forward.11} parent=1 // pred_region
      %s37 = ssub.s32 8192, 8192
      %38 = vsyncadd [#allocation3], %s37
      %s39 = sshll.u32 [#allocation2], 4
      %s40 = int_to_ptr.vmem [resolvable:$true] %s39
      %45 = dma.hbm_to_vmem [thread:$0]  %s6, 8192, %s40, [#allocation3], 256, 256, 16
    $region29: #{block_forward.11} parent=1 // pred_fallthru
      _
    // Predicated region
    $region30: #{block_forward.11} parent=1 // pred_check
      _
    $region31: #{block_forward.11} parent=1 // pred_check_branch
      %47 = sbr.rel (0) target = $region33
    $region32: #{block_forward.11} parent=1 // pred_region
      %s49 = ssub.s32 8192, 8192
      %50 = vsyncadd [#allocation5], %s49
      %s51 = sshll.u32 [#allocation4], 4
      %s52 = int_to_ptr.vmem [resolvable:$true] %s51
      %57 = dma.hbm_to_vmem [thread:$0]  %s7, 8192, %s52, [#allocation5], 256, 256, 16
    $region33: #{block_forward.11} parent=1 // pred_fallthru
      _
    // Predicated region
    $region34: #{block_forward.11} parent=1 // pred_check
      _
    $region35: #{block_forward.11} parent=1 // pred_check_branch
      %59 = sbr.rel (0) target = $region37
    $region36: #{block_forward.11} parent=1 // pred_region
      _
    $region37: #{block_forward.11} parent=1 // pred_fallthru
      _
    // Predicated region
    $region38: #{block_forward.11} parent=1 // pred_check
      _
    $region39: #{block_forward.11} parent=1 // pred_check_branch
      %61 = sbr.rel (0) target = $region41
    $region40: #{block_forward.11} parent=1 // pred_region
      _
    $region41: #{block_forward.11} parent=1 // pred_fallthru
      _
    // Predicated region
    $region42: #{block_forward.11} parent=1 // pred_check
      _
    $region43: #{block_forward.11} parent=1 // pred_check_branch
      %63 = sbr.rel (0) target = $region45
    $region44: #{block_forward.11} parent=1 // pred_region
      _
    $region45: #{block_forward.11} parent=1 // pred_fallthru
      _
    // Predicated region
    $region46: #{block_forward.11} parent=1 // pred_check
      _
    $region47: #{block_forward.11} parent=1 // pred_check_branch
      %65 = sbr.rel (0) target = $region49
    $region48: #{block_forward.11} parent=1 // pred_region
      %s67 = ssub.s32 8192, 8192
      %68 = vsyncadd [#allocation5], %s67
      %s69 = sshll.u32 [#allocation6], 4
      %s70 = int_to_ptr.vmem [resolvable:$true] %s69
      %75 = dma.hbm_to_vmem [thread:$0]  %s11, 8192, %s70, [#allocation5], 256, 256, 16
    $region49: #{block_forward.11} parent=1 // pred_fallthru
      _
    // Predicated region
    $region50: #{block_forward.11} parent=1 // pred_check
      _
    $region51: #{block_forward.11} parent=1 // pred_check_branch
      %77 = sbr.rel (0) target = $region53
    $region52: #{block_forward.11} parent=1 // pred_region
      _
    $region53: #{block_forward.11} parent=1 // pred_fallthru
      _
    // Predicated region
    $region54: #{block_forward.11} parent=1 // pred_check
      _
    $region55: #{block_forward.11} parent=1 // pred_check_branch
      %79 = sbr.rel (0) target = $region57
    $region56: #{block_forward.11} parent=1 // pred_region
      %80 = dma.done [#allocation3], 8192
    $region57: #{block_forward.11} parent=1 // pred_fallthru
      _
    // Predicated region
    $region58: #{block_forward.11} parent=1 // pred_check
      _
    $region59: #{block_forward.11} parent=1 // pred_check_branch
      %82 = sbr.rel (0) target = $region61
    $region60: #{block_forward.11} parent=1 // pred_region
      %83 = dma.done [#allocation5], 8192
    $region61: #{block_forward.11} parent=1 // pred_fallthru
      _
    // Predicated region
    $region62: #{block_forward.11} parent=1 // pred_check
      _
    $region63: #{block_forward.11} parent=1 // pred_check_branch
      %85 = sbr.rel (0) target = $region65
    $region64: #{block_forward.11} parent=1 // pred_region
      %86 = dma.done [#allocation5], 8192
    $region65: #{block_forward.11} parent=1 // pred_fallthru
      _
    %v88 = vld [vmem:[%s0] sm:$0xff]
    %v89 = vld [vmem:[%s0 + $0x8] sm:$0xff]
    %v90 = vld [vmem:[%s0 + $0x10] sm:$0xff]
    %v91 = vld [vmem:[%s0 + $0x18] sm:$0xff]
    %v92 = vpack.c.bf16 %v90, %v88
    %v93 = vpack.c.bf16 %v91, %v89
    %v94 = vld [vmem:[#allocation2] sm:$0xff]
    %v95 = vld [vmem:[#allocation2 + $0x8] sm:$0xff]
    %v96 = vld [vmem:[#allocation2 + $0x10] sm:$0xff]
    %v97 = vld [vmem:[#allocation2 + $0x18] sm:$0xff]
    %v98 = vld [vmem:[#allocation2 + $0x20] sm:$0xff]
    %v99 = vld [vmem:[#allocation2 + $0x28] sm:$0xff]
    %v100 = vld [vmem:[#allocation2 + $0x30] sm:$0xff]
    %v101 = vld [vmem:[#allocation2 + $0x38] sm:$0xff]
    %v102 = vld [vmem:[#allocation2 + $0x40] sm:$0xff]
    %v103 = vld [vmem:[#allocation2 + $0x48] sm:$0xff]
    %v104 = vld [vmem:[#allocation2 + $0x50] sm:$0xff]
    %v105 = vld [vmem:[#allocation2 + $0x58] sm:$0xff]
    %v106 = vld [vmem:[#allocation2 + $0x60] sm:$0xff]
    %v107 = vld [vmem:[#allocation2 + $0x68] sm:$0xff]
    %v108 = vld [vmem:[#allocation2 + $0x70] sm:$0xff]
    %v109 = vld [vmem:[#allocation2 + $0x78] sm:$0xff]
    %v110 = vld [vmem:[#allocation2 + $0x80] sm:$0xff]
    %v111 = vld [vmem:[#allocation2 + $0x88] sm:$0xff]
    %v112 = vld [vmem:[#allocation2 + $0x90] sm:$0xff]
    %v113 = vld [vmem:[#allocation2 + $0x98] sm:$0xff]
    %v114 = vld [vmem:[#allocation2 + $0xa0] sm:$0xff]
    %v115 = vld [vmem:[#allocation2 + $0xa8] sm:$0xff]
    %v116 = vld [vmem:[#allocation2 + $0xb0] sm:$0xff]
    %v117 = vld [vmem:[#allocation2 + $0xb8] sm:$0xff]
    %v118 = vld [vmem:[#allocation2 + $0xc0] sm:$0xff]
    %v119 = vld [vmem:[#allocation2 + $0xc8] sm:$0xff]
    %v120 = vld [vmem:[#allocation2 + $0xd0] sm:$0xff]
    %v121 = vld [vmem:[#allocation2 + $0xd8] sm:$0xff]
    %v122 = vld [vmem:[#allocation2 + $0xe0] sm:$0xff]
    %v123 = vld [vmem:[#allocation2 + $0xe8] sm:$0xff]
    %v124 = vld [vmem:[#allocation2 + $0xf0] sm:$0xff]
    %v125 = vld [vmem:[#allocation2 + $0xf8] sm:$0xff]
    %v126 = vld [vmem:[#allocation2 + $0x100] sm:$0xff]
    %v127 = vld [vmem:[#allocation2 + $0x108] sm:$0xff]
    %v128 = vld [vmem:[#allocation2 + $0x110] sm:$0xff]
    %v129 = vld [vmem:[#allocation2 + $0x118] sm:$0xff]
    %v130 = vld [vmem:[#allocation2 + $0x120] sm:$0xff]
    %v131 = vld [vmem:[#allocation2 + $0x128] sm:$0xff]
    %v132 = vld [vmem:[#allocation2 + $0x130] sm:$0xff]
    %v133 = vld [vmem:[#allocation2 + $0x138] sm:$0xff]
    %v134 = vld [vmem:[#allocation2 + $0x140] sm:$0xff]
    %v135 = vld [vmem:[#allocation2 + $0x148] sm:$0xff]
    %v136 = vld [vmem:[#allocation2 + $0x150] sm:$0xff]
    %v137 = vld [vmem:[#allocation2 + $0x158] sm:$0xff]
    %v138 = vld [vmem:[#allocation2 + $0x160] sm:$0xff]
    %v139 = vld [vmem:[#allocation2 + $0x168] sm:$0xff]
    %v140 = vld [vmem:[#allocation2 + $0x170] sm:$0xff]
    %v141 = vld [vmem:[#allocation2 + $0x178] sm:$0xff]
    %v142 = vld [vmem:[#allocation2 + $0x180] sm:$0xff]
    %v143 = vld [vmem:[#allocation2 + $0x188] sm:$0xff]
    %v144 = vld [vmem:[#allocation2 + $0x190] sm:$0xff]
    %v145 = vld [vmem:[#allocation2 + $0x198] sm:$0xff]
    %v146 = vld [vmem:[#allocation2 + $0x1a0] sm:$0xff]
    %v147 = vld [vmem:[#allocation2 + $0x1a8] sm:$0xff]
    %v148 = vld [vmem:[#allocation2 + $0x1b0] sm:$0xff]
    %v149 = vld [vmem:[#allocation2 + $0x1b8] sm:$0xff]
    %v150 = vld [vmem:[#allocation2 + $0x1c0] sm:$0xff]
    %v151 = vld [vmem:[#allocation2 + $0x1c8] sm:$0xff]
    %v152 = vld [vmem:[#allocation2 + $0x1d0] sm:$0xff]
    %v153 = vld [vmem:[#allocation2 + $0x1d8] sm:$0xff]
    %v154 = vld [vmem:[#allocation2 + $0x1e0] sm:$0xff]
    %v155 = vld [vmem:[#allocation2 + $0x1e8] sm:$0xff]
    %v156 = vld [vmem:[#allocation2 + $0x1f0] sm:$0xff]
    %v157 = vld [vmem:[#allocation2 + $0x1f8] sm:$0xff]
    %v158 = vld [vmem:[%s1] sm:$0xff]
    %v159 = vld [vmem:[%s1 + $0x8] sm:$0xff]
    %v160 = vld [vmem:[%s1 + $0x10] sm:$0xff]
    %v161 = vld [vmem:[%s1 + $0x18] sm:$0xff]
    %v162 = vpack.c.bf16 %v160, %v158
    %v163 = vpack.c.bf16 %v161, %v159
    %v164 = vld [vmem:[%s5] sm:$0xff]
    %v165 = vld [vmem:[%s5 + $0x8] sm:$0xff]
    %v166 = vld [vmem:[%s5 + $0x10] sm:$0xff]
    %v167 = vld [vmem:[%s5 + $0x18] sm:$0xff]
    %v168 = vld [vmem:[%s5 + $0x20] sm:$0xff]
    %v169 = vld [vmem:[%s5 + $0x28] sm:$0xff]
    %v170 = vld [vmem:[%s5 + $0x30] sm:$0xff]
    %v171 = vld [vmem:[%s5 + $0x38] sm:$0xff]
    %v172 = vld [vmem:[%s5 + $0x40] sm:$0xff]
    %v173 = vld [vmem:[%s5 + $0x48] sm:$0xff]
    %v174 = vld [vmem:[%s5 + $0x50] sm:$0xff]
    %v175 = vld [vmem:[%s5 + $0x58] sm:$0xff]
    %v176 = vld [vmem:[%s5 + $0x60] sm:$0xff]
    %v177 = vld [vmem:[%s5 + $0x68] sm:$0xff]
    %v178 = vld [vmem:[%s5 + $0x70] sm:$0xff]
    %v179 = vld [vmem:[%s5 + $0x78] sm:$0xff]
    %v180 = vld [vmem:[%s5 + $0x80] sm:$0xff]
    %v181 = vld [vmem:[%s5 + $0x88] sm:$0xff]
    %v182 = vld [vmem:[%s5 + $0x90] sm:$0xff]
    %v183 = vld [vmem:[%s5 + $0x98] sm:$0xff]
    %v184 = vld [vmem:[%s5 + $0xa0] sm:$0xff]
    %v185 = vld [vmem:[%s5 + $0xa8] sm:$0xff]
    %v186 = vld [vmem:[%s5 + $0xb0] sm:$0xff]
    %v187 = vld [vmem:[%s5 + $0xb8] sm:$0xff]
    %v188 = vld [vmem:[%s5 + $0xc0] sm:$0xff]
    %v189 = vld [vmem:[%s5 + $0xc8] sm:$0xff]
    %v190 = vld [vmem:[%s5 + $0xd0] sm:$0xff]
    %v191 = vld [vmem:[%s5 + $0xd8] sm:$0xff]
    %v192 = vld [vmem:[%s5 + $0xe0] sm:$0xff]
    %v193 = vld [vmem:[%s5 + $0xe8] sm:$0xff]
    %v194 = vld [vmem:[%s5 + $0xf0] sm:$0xff]
    %v195 = vld [vmem:[%s5 + $0xf8] sm:$0xff]
    %v196 = vld [vmem:[%s5 + $0x100] sm:$0xff]
    %v197 = vld [vmem:[%s5 + $0x108] sm:$0xff]
    %v198 = vld [vmem:[%s5 + $0x110] sm:$0xff]
    %v199 = vld [vmem:[%s5 + $0x118] sm:$0xff]
    %v200 = vld [vmem:[%s5 + $0x120] sm:$0xff]
    %v201 = vld [vmem:[%s5 + $0x128] sm:$0xff]
    %v202 = vld [vmem:[%s5 + $0x130] sm:$0xff]
    %v203 = vld [vmem:[%s5 + $0x138] sm:$0xff]
    %v204 = vld [vmem:[%s5 + $0x140] sm:$0xff]
    %v205 = vld [vmem:[%s5 + $0x148] sm:$0xff]
    %v206 = vld [vmem:[%s5 + $0x150] sm:$0xff]
    %v207 = vld [vmem:[%s5 + $0x158] sm:$0xff]
    %v208 = vld [vmem:[%s5 + $0x160] sm:$0xff]
    %v209 = vld [vmem:[%s5 + $0x168] sm:$0xff]
    %v210 = vld [vmem:[%s5 + $0x170] sm:$0xff]
    %v211 = vld [vmem:[%s5 + $0x178] sm:$0xff]
    %v212 = vld [vmem:[%s5 + $0x180] sm:$0xff]
    %v213 = vld [vmem:[%s5 + $0x188] sm:$0xff]
    %v214 = vld [vmem:[%s5 + $0x190] sm:$0xff]
    %v215 = vld [vmem:[%s5 + $0x198] sm:$0xff]
    %v216 = vld [vmem:[%s5 + $0x1a0] sm:$0xff]
    %v217 = vld [vmem:[%s5 + $0x1a8] sm:$0xff]
    %v218 = vld [vmem:[%s5 + $0x1b0] sm:$0xff]
    %v219 = vld [vmem:[%s5 + $0x1b8] sm:$0xff]
    %v220 = vld [vmem:[%s5 + $0x1c0] sm:$0xff]
    %v221 = vld [vmem:[%s5 + $0x1c8] sm:$0xff]
    %v222 = vld [vmem:[%s5 + $0x1d0] sm:$0xff]
    %v223 = vld [vmem:[%s5 + $0x1d8] sm:$0xff]
    %v224 = vld [vmem:[%s5 + $0x1e0] sm:$0xff]
    %v225 = vld [vmem:[%s5 + $0x1e8] sm:$0xff]
    %v226 = vld [vmem:[%s5 + $0x1f0] sm:$0xff]
    %v227 = vld [vmem:[%s5 + $0x1f8] sm:$0xff]
    %v292 = vunpack.c.l.b16 %v164
    %v293 = vunpack.c.h.b16 %v164
    %v294 = vunpack.c.l.b16 %v165
    %v295 = vunpack.c.h.b16 %v165
    %v296 = vunpack.c.l.b16 %v166
    %v297 = vunpack.c.h.b16 %v166
    %v298 = vunpack.c.l.b16 %v167
    %v299 = vunpack.c.h.b16 %v167
    %v300 = vunpack.c.l.b16 %v168
    %v301 = vunpack.c.h.b16 %v168
    %v302 = vunpack.c.l.b16 %v169
    %v303 = vunpack.c.h.b16 %v169
    %v304 = vunpack.c.l.b16 %v170
    %v305 = vunpack.c.h.b16 %v170
    %v306 = vunpack.c.l.b16 %v171
    %v307 = vunpack.c.h.b16 %v171
    %v308 = vunpack.c.l.b16 %v172
    %v309 = vunpack.c.h.b16 %v172
    %v310 = vunpack.c.l.b16 %v173
    %v311 = vunpack.c.h.b16 %v173
    %v312 = vunpack.c.l.b16 %v174
    %v313 = vunpack.c.h.b16 %v174
    %v314 = vunpack.c.l.b16 %v175
    %v315 = vunpack.c.h.b16 %v175
    %v316 = vunpack.c.l.b16 %v176
    %v317 = vunpack.c.h.b16 %v176
    %v318 = vunpack.c.l.b16 %v177
    %v319 = vunpack.c.h.b16 %v177
    %v320 = vunpack.c.l.b16 %v178
    %v321 = vunpack.c.h.b16 %v178
    %v322 = vunpack.c.l.b16 %v179
    %v323 = vunpack.c.h.b16 %v179
    %v324 = vunpack.c.l.b16 %v180
    %v325 = vunpack.c.h.b16 %v180
    %v326 = vunpack.c.l.b16 %v181
    %v327 = vunpack.c.h.b16 %v181
    %v328 = vunpack.c.l.b16 %v182
    %v329 = vunpack.c.h.b16 %v182
    %v330 = vunpack.c.l.b16 %v183
    %v331 = vunpack.c.h.b16 %v183
    %v332 = vunpack.c.l.b16 %v184
    %v333 = vunpack.c.h.b16 %v184
    %v334 = vunpack.c.l.b16 %v185
    %v335 = vunpack.c.h.b16 %v185
    %v336 = vunpack.c.l.b16 %v186
    %v337 = vunpack.c.h.b16 %v186
    %v338 = vunpack.c.l.b16 %v187
    %v339 = vunpack.c.h.b16 %v187
    %v340 = vunpack.c.l.b16 %v188
    %v341 = vunpack.c.h.b16 %v188
    %v342 = vunpack.c.l.b16 %v189
    %v343 = vunpack.c.h.b16 %v189
    %v344 = vunpack.c.l.b16 %v190
    %v345 = vunpack.c.h.b16 %v190
    %v346 = vunpack.c.l.b16 %v191
    %v347 = vunpack.c.h.b16 %v191
    %v348 = vunpack.c.l.b16 %v192
    %v349 = vunpack.c.h.b16 %v192
    %v350 = vunpack.c.l.b16 %v193
    %v351 = vunpack.c.h.b16 %v193
    %v352 = vunpack.c.l.b16 %v194
    %v353 = vunpack.c.h.b16 %v194
    %v354 = vunpack.c.l.b16 %v195
    %v355 = vunpack.c.h.b16 %v195
    %v356 = vunpack.c.l.b16 %v196
    %v357 = vunpack.c.h.b16 %v196
    %v358 = vunpack.c.l.b16 %v197
    %v359 = vunpack.c.h.b16 %v197
    %v360 = vunpack.c.l.b16 %v198
    %v361 = vunpack.c.h.b16 %v198
    %v362 = vunpack.c.l.b16 %v199
    %v363 = vunpack.c.h.b16 %v199
    %v364 = vunpack.c.l.b16 %v200
    %v365 = vunpack.c.h.b16 %v200
    %v366 = vunpack.c.l.b16 %v201
    %v367 = vunpack.c.h.b16 %v201
    %v368 = vunpack.c.l.b16 %v202
    %v369 = vunpack.c.h.b16 %v202
    %v370 = vunpack.c.l.b16 %v203
    %v371 = vunpack.c.h.b16 %v203
    %v372 = vunpack.c.l.b16 %v204
    %v373 = vunpack.c.h.b16 %v204
    %v374 = vunpack.c.l.b16 %v205
    %v375 = vunpack.c.h.b16 %v205
    %v376 = vunpack.c.l.b16 %v206
    %v377 = vunpack.c.h.b16 %v206
    %v378 = vunpack.c.l.b16 %v207
    %v379 = vunpack.c.h.b16 %v207
    %v380 = vunpack.c.l.b16 %v208
    %v381 = vunpack.c.h.b16 %v208
    %v382 = vunpack.c.l.b16 %v209
    %v383 = vunpack.c.h.b16 %v209
    %v384 = vunpack.c.l.b16 %v210
    %v385 = vunpack.c.h.b16 %v210
    %v386 = vunpack.c.l.b16 %v211
    %v387 = vunpack.c.h.b16 %v211
    %v388 = vunpack.c.l.b16 %v212
    %v389 = vunpack.c.h.b16 %v212
    %v390 = vunpack.c.l.b16 %v213
    %v391 = vunpack.c.h.b16 %v213
    %v392 = vunpack.c.l.b16 %v214
    %v393 = vunpack.c.h.b16 %v214
    %v394 = vunpack.c.l.b16 %v215
    %v395 = vunpack.c.h.b16 %v215
    %v396 = vunpack.c.l.b16 %v216
    %v397 = vunpack.c.h.b16 %v216
    %v398 = vunpack.c.l.b16 %v217
    %v399 = vunpack.c.h.b16 %v217
    %v400 = vunpack.c.l.b16 %v218
    %v401 = vunpack.c.h.b16 %v218
    %v402 = vunpack.c.l.b16 %v219
    %v403 = vunpack.c.h.b16 %v219
    %v404 = vunpack.c.l.b16 %v220
    %v405 = vunpack.c.h.b16 %v220
    %v406 = vunpack.c.l.b16 %v221
    %v407 = vunpack.c.h.b16 %v221
    %v408 = vunpack.c.l.b16 %v222
    %v409 = vunpack.c.h.b16 %v222
    %v410 = vunpack.c.l.b16 %v223
    %v411 = vunpack.c.h.b16 %v223
    %v412 = vunpack.c.l.b16 %v224
    %v413 = vunpack.c.h.b16 %v224
    %v414 = vunpack.c.l.b16 %v225
    %v415 = vunpack.c.h.b16 %v225
    %v416 = vunpack.c.l.b16 %v226
    %v417 = vunpack.c.h.b16 %v226
    %v418 = vunpack.c.l.b16 %v227
    %v419 = vunpack.c.h.b16 %v227
    %v420 = vpack.c.b16 %v296, %v292
    %v421 = vpack.c.b16 %v297, %v293
    %v422 = vpack.c.b16 %v298, %v294
    %v423 = vpack.c.b16 %v299, %v295
    %v424 = vpack.c.b16 %v304, %v300
    %v425 = vpack.c.b16 %v305, %v301
    %v426 = vpack.c.b16 %v306, %v302
    %v427 = vpack.c.b16 %v307, %v303
    %v428 = vpack.c.b16 %v312, %v308
    %v429 = vpack.c.b16 %v313, %v309
    %v430 = vpack.c.b16 %v314, %v310
    %v431 = vpack.c.b16 %v315, %v311
    %v432 = vpack.c.b16 %v320, %v316
    %v433 = vpack.c.b16 %v321, %v317
    %v434 = vpack.c.b16 %v322, %v318
    %v435 = vpack.c.b16 %v323, %v319
    %v436 = vpack.c.b16 %v328, %v324
    %v437 = vpack.c.b16 %v329, %v325
    %v438 = vpack.c.b16 %v330, %v326
    %v439 = vpack.c.b16 %v331, %v327
    %v440 = vpack.c.b16 %v336, %v332
    %v441 = vpack.c.b16 %v337, %v333
    %v442 = vpack.c.b16 %v338, %v334
    %v443 = vpack.c.b16 %v339, %v335
    %v444 = vpack.c.b16 %v344, %v340
    %v445 = vpack.c.b16 %v345, %v341
    %v446 = vpack.c.b16 %v346, %v342
    %v447 = vpack.c.b16 %v347, %v343
    %v448 = vpack.c.b16 %v352, %v348
    %v449 = vpack.c.b16 %v353, %v349
    %v450 = vpack.c.b16 %v354, %v350
    %v451 = vpack.c.b16 %v355, %v351
    %v452 = vpack.c.b16 %v360, %v356
    %v453 = vpack.c.b16 %v361, %v357
    %v454 = vpack.c.b16 %v362, %v358
    %v455 = vpack.c.b16 %v363, %v359
    %v456 = vpack.c.b16 %v368, %v364
    %v457 = vpack.c.b16 %v369, %v365
    %v458 = vpack.c.b16 %v370, %v366
    %v459 = vpack.c.b16 %v371, %v367
    %v460 = vpack.c.b16 %v376, %v372
    %v461 = vpack.c.b16 %v377, %v373
    %v462 = vpack.c.b16 %v378, %v374
    %v463 = vpack.c.b16 %v379, %v375
    %v464 = vpack.c.b16 %v384, %v380
    %v465 = vpack.c.b16 %v385, %v381
    %v466 = vpack.c.b16 %v386, %v382
    %v467 = vpack.c.b16 %v387, %v383
    %v468 = vpack.c.b16 %v392, %v388
    %v469 = vpack.c.b16 %v393, %v389
    %v470 = vpack.c.b16 %v394, %v390
    %v471 = vpack.c.b16 %v395, %v391
    %v472 = vpack.c.b16 %v400, %v396
    %v473 = vpack.c.b16 %v401, %v397
    %v474 = vpack.c.b16 %v402, %v398
    %v475 = vpack.c.b16 %v403, %v399
    %v476 = vpack.c.b16 %v408, %v404
    %v477 = vpack.c.b16 %v409, %v405
    %v478 = vpack.c.b16 %v410, %v406
    %v479 = vpack.c.b16 %v411, %v407
    %v480 = vpack.c.b16 %v416, %v412
    %v481 = vpack.c.b16 %v417, %v413
    %v482 = vpack.c.b16 %v418, %v414
    %v483 = vpack.c.b16 %v419, %v415
    %548 = vmatprep.subr.bf16.mxu0 %v421
    %549 = vmatpush1.bf16.msra.mxu0 %v420
    %550 = vmatprep.subr.bf16.mxu0 %v425
    %551 = vmatpush1.bf16.msra.mxu0 %v424
    %552 = vmatprep.subr.bf16.mxu0 %v429
    %553 = vmatpush1.bf16.msra.mxu0 %v428
    %554 = vmatprep.subr.bf16.mxu0 %v433
    %555 = vmatpush1.bf16.msra.mxu0 %v432
    %556 = vmatprep.subr.bf16.mxu0 %v437
    %557 = vmatpush1.bf16.msra.mxu0 %v436
    %558 = vmatprep.subr.bf16.mxu0 %v441
    %559 = vmatpush1.bf16.msra.mxu0 %v440
    %560 = vmatprep.subr.bf16.mxu0 %v445
    %561 = vmatpush1.bf16.msra.mxu0 %v444
    %562 = vmatprep.subr.bf16.mxu0 %v449
    %563 = vmatpush1.bf16.msra.mxu0 %v448
    %564 = vmatprep.subr.bf16.mxu0 %v453
    %565 = vmatpush1.bf16.msra.mxu0 %v452
    %566 = vmatprep.subr.bf16.mxu0 %v457
    %567 = vmatpush1.bf16.msra.mxu0 %v456
    %568 = vmatprep.subr.bf16.mxu0 %v461
    %569 = vmatpush1.bf16.msra.mxu0 %v460
    %570 = vmatprep.subr.bf16.mxu0 %v465
    %571 = vmatpush1.bf16.msra.mxu0 %v464
    %572 = vmatprep.subr.bf16.mxu0 %v469
    %573 = vmatpush1.bf16.msra.mxu0 %v468
    %574 = vmatprep.subr.bf16.mxu0 %v473
    %575 = vmatpush1.bf16.msra.mxu0 %v472
    %576 = vmatprep.subr.bf16.mxu0 %v477
    %577 = vmatpush1.bf16.msra.mxu0 %v476
    %578 = vmatprep.subr.bf16.mxu0 %v481
    %579 = vmatpush1.bf16.msra.mxu0 %v480
    %580 = vmatprep.mubr.bf16.mxu0 %v163
    %581 = vmatmul.mubr.bf16.gmra.mrb[0].mxu0 %v162
    %v582 = vpop.f32.mrb[0].mxu0
    %v583 = vadd.f32 0.0, %v582
    %v584 = vpop.f32.mrb[0].mxu0
    %v585 = vadd.f32 0.0, %v584
    %v586 = vpop.f32.mrb[0].mxu0
    %v587 = vadd.f32 0.0, %v586
    %v588 = vpop.f32.mrb[0].mxu0
    %v589 = vadd.f32 0.0, %v588
    %590 = vdwg.mxu0
    %591 = vmatprep.subr.bf16.mxu0 %v423
    %592 = vmatpush1.bf16.msra.mxu0 %v422
    %593 = vmatprep.subr.bf16.mxu0 %v427
    %594 = vmatpush1.bf16.msra.mxu0 %v426
    %595 = vmatprep.subr.bf16.mxu0 %v431
    %596 = vmatpush1.bf16.msra.mxu0 %v430
    %597 = vmatprep.subr.bf16.mxu0 %v435
    %598 = vmatpush1.bf16.msra.mxu0 %v434
    %599 = vmatprep.subr.bf16.mxu0 %v439
    %600 = vmatpush1.bf16.msra.mxu0 %v438
    %601 = vmatprep.subr.bf16.mxu0 %v443
    %602 = vmatpush1.bf16.msra.mxu0 %v442
    %603 = vmatprep.subr.bf16.mxu0 %v447
    %604 = vmatpush1.bf16.msra.mxu0 %v446
    %605 = vmatprep.subr.bf16.mxu0 %v451
    %606 = vmatpush1.bf16.msra.mxu0 %v450
    %607 = vmatprep.subr.bf16.mxu0 %v455
    %608 = vmatpush1.bf16.msra.mxu0 %v454
    %609 = vmatprep.subr.bf16.mxu0 %v459
    %610 = vmatpush1.bf16.msra.mxu0 %v458
    %611 = vmatprep.subr.bf16.mxu0 %v463
    %612 = vmatpush1.bf16.msra.mxu0 %v462
    %613 = vmatprep.subr.bf16.mxu0 %v467
    %614 = vmatpush1.bf16.msra.mxu0 %v466
    %615 = vmatprep.subr.bf16.mxu0 %v471
    %616 = vmatpush1.bf16.msra.mxu0 %v470
    %617 = vmatprep.subr.bf16.mxu0 %v475
    %618 = vmatpush1.bf16.msra.mxu0 %v474
    %619 = vmatprep.subr.bf16.mxu0 %v479
    %620 = vmatpush1.bf16.msra.mxu0 %v478
    %621 = vmatprep.subr.bf16.mxu0 %v483
    %622 = vmatpush1.bf16.msra.mxu0 %v482
    %623 = vmatprep.mubr.bf16.mxu0 %v163
    %624 = vmatmul.mubr.bf16.gmra.mrb[0].mxu0 %v162
    %v625 = vpop.f32.mrb[0].mxu0
    %v626 = vadd.f32 0.0, %v625
    %v627 = vpop.f32.mrb[0].mxu0
    %v628 = vadd.f32 0.0, %v627
    %v629 = vpop.f32.mrb[0].mxu0
    %v630 = vadd.f32 0.0, %v629
    %v631 = vpop.f32.mrb[0].mxu0
    %v632 = vadd.f32 0.0, %v631
    %633 = vdwg.mxu0
    %v698 = vunpack.c.l.b16 %v94
    %v699 = vunpack.c.h.b16 %v94
    %v700 = vunpack.c.l.b16 %v95
    %v701 = vunpack.c.h.b16 %v95
    %v702 = vunpack.c.l.b16 %v96
    %v703 = vunpack.c.h.b16 %v96
    %v704 = vunpack.c.l.b16 %v97
    %v705 = vunpack.c.h.b16 %v97
    %v706 = vunpack.c.l.b16 %v98
    %v707 = vunpack.c.h.b16 %v98
    %v708 = vunpack.c.l.b16 %v99
    %v709 = vunpack.c.h.b16 %v99
    %v710 = vunpack.c.l.b16 %v100
    %v711 = vunpack.c.h.b16 %v100
    %v712 = vunpack.c.l.b16 %v101
    %v713 = vunpack.c.h.b16 %v101
    %v714 = vunpack.c.l.b16 %v102
    %v715 = vunpack.c.h.b16 %v102
    %v716 = vunpack.c.l.b16 %v103
    %v717 = vunpack.c.h.b16 %v103
    %v718 = vunpack.c.l.b16 %v104
    %v719 = vunpack.c.h.b16 %v104
    %v720 = vunpack.c.l.b16 %v105
    %v721 = vunpack.c.h.b16 %v105
    %v722 = vunpack.c.l.b16 %v106
    %v723 = vunpack.c.h.b16 %v106
    %v724 = vunpack.c.l.b16 %v107
    %v725 = vunpack.c.h.b16 %v107
    %v726 = vunpack.c.l.b16 %v108
    %v727 = vunpack.c.h.b16 %v108
    %v728 = vunpack.c.l.b16 %v109
    %v729 = vunpack.c.h.b16 %v109
    %v730 = vunpack.c.l.b16 %v110
    %v731 = vunpack.c.h.b16 %v110
    %v732 = vunpack.c.l.b16 %v111
    %v733 = vunpack.c.h.b16 %v111
    %v734 = vunpack.c.l.b16 %v112
    %v735 = vunpack.c.h.b16 %v112
    %v736 = vunpack.c.l.b16 %v113
    %v737 = vunpack.c.h.b16 %v113
    %v738 = vunpack.c.l.b16 %v114
    %v739 = vunpack.c.h.b16 %v114
    %v740 = vunpack.c.l.b16 %v115
    %v741 = vunpack.c.h.b16 %v115
    %v742 = vunpack.c.l.b16 %v116
    %v743 = vunpack.c.h.b16 %v116
    %v744 = vunpack.c.l.b16 %v117
    %v745 = vunpack.c.h.b16 %v117
    %v746 = vunpack.c.l.b16 %v118
    %v747 = vunpack.c.h.b16 %v118
    %v748 = vunpack.c.l.b16 %v119
    %v749 = vunpack.c.h.b16 %v119
    %v750 = vunpack.c.l.b16 %v120
    %v751 = vunpack.c.h.b16 %v120
    %v752 = vunpack.c.l.b16 %v121
    %v753 = vunpack.c.h.b16 %v121
    %v754 = vunpack.c.l.b16 %v122
    %v755 = vunpack.c.h.b16 %v122
    %v756 = vunpack.c.l.b16 %v123
    %v757 = vunpack.c.h.b16 %v123
    %v758 = vunpack.c.l.b16 %v124
    %v759 = vunpack.c.h.b16 %v124
    %v760 = vunpack.c.l.b16 %v125
    %v761 = vunpack.c.h.b16 %v125
    %v762 = vunpack.c.l.b16 %v126
    %v763 = vunpack.c.h.b16 %v126
    %v764 = vunpack.c.l.b16 %v127
    %v765 = vunpack.c.h.b16 %v127
    %v766 = vunpack.c.l.b16 %v128
    %v767 = vunpack.c.h.b16 %v128
    %v768 = vunpack.c.l.b16 %v129
    %v769 = vunpack.c.h.b16 %v129
    %v770 = vunpack.c.l.b16 %v130
    %v771 = vunpack.c.h.b16 %v130
    %v772 = vunpack.c.l.b16 %v131
    %v773 = vunpack.c.h.b16 %v131
    %v774 = vunpack.c.l.b16 %v132
    %v775 = vunpack.c.h.b16 %v132
    %v776 = vunpack.c.l.b16 %v133
    %v777 = vunpack.c.h.b16 %v133
    %v778 = vunpack.c.l.b16 %v134
    %v779 = vunpack.c.h.b16 %v134
    %v780 = vunpack.c.l.b16 %v135
    %v781 = vunpack.c.h.b16 %v135
    %v782 = vunpack.c.l.b16 %v136
    %v783 = vunpack.c.h.b16 %v136
    %v784 = vunpack.c.l.b16 %v137
    %v785 = vunpack.c.h.b16 %v137
    %v786 = vunpack.c.l.b16 %v138
    %v787 = vunpack.c.h.b16 %v138
    %v788 = vunpack.c.l.b16 %v139
    %v789 = vunpack.c.h.b16 %v139
    %v790 = vunpack.c.l.b16 %v140
    %v791 = vunpack.c.h.b16 %v140
    %v792 = vunpack.c.l.b16 %v141
    %v793 = vunpack.c.h.b16 %v141
    %v794 = vunpack.c.l.b16 %v142
    %v795 = vunpack.c.h.b16 %v142
    %v796 = vunpack.c.l.b16 %v143
    %v797 = vunpack.c.h.b16 %v143
    %v798 = vunpack.c.l.b16 %v144
    %v799 = vunpack.c.h.b16 %v144
    %v800 = vunpack.c.l.b16 %v145
    %v801 = vunpack.c.h.b16 %v145
    %v802 = vunpack.c.l.b16 %v146
    %v803 = vunpack.c.h.b16 %v146
    %v804 = vunpack.c.l.b16 %v147
    %v805 = vunpack.c.h.b16 %v147
    %v806 = vunpack.c.l.b16 %v148
    %v807 = vunpack.c.h.b16 %v148
    %v808 = vunpack.c.l.b16 %v149
    %v809 = vunpack.c.h.b16 %v149
    %v810 = vunpack.c.l.b16 %v150
    %v811 = vunpack.c.h.b16 %v150
    %v812 = vunpack.c.l.b16 %v151
    %v813 = vunpack.c.h.b16 %v151
    %v814 = vunpack.c.l.b16 %v152
    %v815 = vunpack.c.h.b16 %v152
    %v816 = vunpack.c.l.b16 %v153
    %v817 = vunpack.c.h.b16 %v153
    %v818 = vunpack.c.l.b16 %v154
    %v819 = vunpack.c.h.b16 %v154
    %v820 = vunpack.c.l.b16 %v155
    %v821 = vunpack.c.h.b16 %v155
    %v822 = vunpack.c.l.b16 %v156
    %v823 = vunpack.c.h.b16 %v156
    %v824 = vunpack.c.l.b16 %v157
    %v825 = vunpack.c.h.b16 %v157
    %v826 = vpack.c.b16 %v702, %v698
    %v827 = vpack.c.b16 %v703, %v699
    %v828 = vpack.c.b16 %v704, %v700
    %v829 = vpack.c.b16 %v705, %v701
    %v830 = vpack.c.b16 %v710, %v706
    %v831 = vpack.c.b16 %v711, %v707
    %v832 = vpack.c.b16 %v712, %v708
    %v833 = vpack.c.b16 %v713, %v709
    %v834 = vpack.c.b16 %v718, %v714
    %v835 = vpack.c.b16 %v719, %v715
    %v836 = vpack.c.b16 %v720, %v716
    %v837 = vpack.c.b16 %v721, %v717
    %v838 = vpack.c.b16 %v726, %v722
    %v839 = vpack.c.b16 %v727, %v723
    %v840 = vpack.c.b16 %v728, %v724
    %v841 = vpack.c.b16 %v729, %v725
    %v842 = vpack.c.b16 %v734, %v730
    %v843 = vpack.c.b16 %v735, %v731
    %v844 = vpack.c.b16 %v736, %v732
    %v845 = vpack.c.b16 %v737, %v733
    %v846 = vpack.c.b16 %v742, %v738
    %v847 = vpack.c.b16 %v743, %v739
    %v848 = vpack.c.b16 %v744, %v740
    %v849 = vpack.c.b16 %v745, %v741
    %v850 = vpack.c.b16 %v750, %v746
    %v851 = vpack.c.b16 %v751, %v747
    %v852 = vpack.c.b16 %v752, %v748
    %v853 = vpack.c.b16 %v753, %v749
    %v854 = vpack.c.b16 %v758, %v754
    %v855 = vpack.c.b16 %v759, %v755
    %v856 = vpack.c.b16 %v760, %v756
    %v857 = vpack.c.b16 %v761, %v757
    %v858 = vpack.c.b16 %v766, %v762
    %v859 = vpack.c.b16 %v767, %v763
    %v860 = vpack.c.b16 %v768, %v764
    %v861 = vpack.c.b16 %v769, %v765
    %v862 = vpack.c.b16 %v774, %v770
    %v863 = vpack.c.b16 %v775, %v771
    %v864 = vpack.c.b16 %v776, %v772
    %v865 = vpack.c.b16 %v777, %v773
    %v866 = vpack.c.b16 %v782, %v778
    %v867 = vpack.c.b16 %v783, %v779
    %v868 = vpack.c.b16 %v784, %v780
    %v869 = vpack.c.b16 %v785, %v781
    %v870 = vpack.c.b16 %v790, %v786
    %v871 = vpack.c.b16 %v791, %v787
    %v872 = vpack.c.b16 %v792, %v788
    %v873 = vpack.c.b16 %v793, %v789
    %v874 = vpack.c.b16 %v798, %v794
    %v875 = vpack.c.b16 %v799, %v795
    %v876 = vpack.c.b16 %v800, %v796
    %v877 = vpack.c.b16 %v801, %v797
    %v878 = vpack.c.b16 %v806, %v802
    %v879 = vpack.c.b16 %v807, %v803
    %v880 = vpack.c.b16 %v808, %v804
    %v881 = vpack.c.b16 %v809, %v805
    %v882 = vpack.c.b16 %v814, %v810
    %v883 = vpack.c.b16 %v815, %v811
    %v884 = vpack.c.b16 %v816, %v812
    %v885 = vpack.c.b16 %v817, %v813
    %v886 = vpack.c.b16 %v822, %v818
    %v887 = vpack.c.b16 %v823, %v819
    %v888 = vpack.c.b16 %v824, %v820
    %v889 = vpack.c.b16 %v825, %v821
    %954 = vmatprep.subr.bf16.mxu0 %v827
    %955 = vmatpush1.bf16.msra.mxu0 %v826
    %956 = vmatprep.subr.bf16.mxu0 %v831
    %957 = vmatpush1.bf16.msra.mxu0 %v830
    %958 = vmatprep.subr.bf16.mxu0 %v835
    %959 = vmatpush1.bf16.msra.mxu0 %v834
    %960 = vmatprep.subr.bf16.mxu0 %v839
    %961 = vmatpush1.bf16.msra.mxu0 %v838
    %962 = vmatprep.subr.bf16.mxu0 %v843
    %963 = vmatpush1.bf16.msra.mxu0 %v842
    %964 = vmatprep.subr.bf16.mxu0 %v847
    %965 = vmatpush1.bf16.msra.mxu0 %v846
    %966 = vmatprep.subr.bf16.mxu0 %v851
    %967 = vmatpush1.bf16.msra.mxu0 %v850
    %968 = vmatprep.subr.bf16.mxu0 %v855
    %969 = vmatpush1.bf16.msra.mxu0 %v854
    %970 = vmatprep.subr.bf16.mxu0 %v859
    %971 = vmatpush1.bf16.msra.mxu0 %v858
    %972 = vmatprep.subr.bf16.mxu0 %v863
    %973 = vmatpush1.bf16.msra.mxu0 %v862
    %974 = vmatprep.subr.bf16.mxu0 %v867
    %975 = vmatpush1.bf16.msra.mxu0 %v866
    %976 = vmatprep.subr.bf16.mxu0 %v871
    %977 = vmatpush1.bf16.msra.mxu0 %v870
    %978 = vmatprep.subr.bf16.mxu0 %v875
    %979 = vmatpush1.bf16.msra.mxu0 %v874
    %980 = vmatprep.subr.bf16.mxu0 %v879
    %981 = vmatpush1.bf16.msra.mxu0 %v878
    %982 = vmatprep.subr.bf16.mxu0 %v883
    %983 = vmatpush1.bf16.msra.mxu0 %v882
    %984 = vmatprep.subr.bf16.mxu0 %v887
    %985 = vmatpush1.bf16.msra.mxu0 %v886
    %986 = vmatprep.mubr.bf16.mxu0 %v93
    %987 = vmatmul.mubr.bf16.gmra.mrb[0].mxu0 %v92
    %v988 = vpop.f32.mrb[0].mxu0
    %v989 = vadd.f32 %v583, %v988
    %v990 = vpop.f32.mrb[0].mxu0
    %v991 = vadd.f32 %v585, %v990
    %v992 = vpop.f32.mrb[0].mxu0
    %v993 = vadd.f32 %v587, %v992
    %v994 = vpop.f32.mrb[0].mxu0
    %v995 = vadd.f32 %v589, %v994
    %996 = vdwg.mxu0
    %997 = vmatprep.subr.bf16.mxu0 %v829
    %998 = vmatpush1.bf16.msra.mxu0 %v828
    %999 = vmatprep.subr.bf16.mxu0 %v833
    %1000 = vmatpush1.bf16.msra.mxu0 %v832
    %1001 = vmatprep.subr.bf16.mxu0 %v837
    %1002 = vmatpush1.bf16.msra.mxu0 %v836
    %1003 = vmatprep.subr.bf16.mxu0 %v841
    %1004 = vmatpush1.bf16.msra.mxu0 %v840
    %1005 = vmatprep.subr.bf16.mxu0 %v845
    %1006 = vmatpush1.bf16.msra.mxu0 %v844
    %1007 = vmatprep.subr.bf16.mxu0 %v849
    %1008 = vmatpush1.bf16.msra.mxu0 %v848
    %1009 = vmatprep.subr.bf16.mxu0 %v853
    %1010 = vmatpush1.bf16.msra.mxu0 %v852
    %1011 = vmatprep.subr.bf16.mxu0 %v857
    %1012 = vmatpush1.bf16.msra.mxu0 %v856
    %1013 = vmatprep.subr.bf16.mxu0 %v861
    %1014 = vmatpush1.bf16.msra.mxu0 %v860
    %1015 = vmatprep.subr.bf16.mxu0 %v865
    %1016 = vmatpush1.bf16.msra.mxu0 %v864
    %1017 = vmatprep.subr.bf16.mxu0 %v869
    %1018 = vmatpush1.bf16.msra.mxu0 %v868
    %1019 = vmatprep.subr.bf16.mxu0 %v873
    %1020 = vmatpush1.bf16.msra.mxu0 %v872
    %1021 = vmatprep.subr.bf16.mxu0 %v877
    %1022 = vmatpush1.bf16.msra.mxu0 %v876
    %1023 = vmatprep.subr.bf16.mxu0 %v881
    %1024 = vmatpush1.bf16.msra.mxu0 %v880
    %1025 = vmatprep.subr.bf16.mxu0 %v885
    %1026 = vmatpush1.bf16.msra.mxu0 %v884
    %1027 = vmatprep.subr.bf16.mxu0 %v889
    %1028 = vmatpush1.bf16.msra.mxu0 %v888
    %1029 = vmatprep.mubr.bf16.mxu0 %v93
    %1030 = vmatmul.mubr.bf16.gmra.mrb[0].mxu0 %v92
    %v1031 = vpop.f32.mrb[0].mxu0
    %v1032 = vadd.f32 %v626, %v1031
    %v1033 = vpop.f32.mrb[0].mxu0
    %v1034 = vadd.f32 %v628, %v1033
    %v1035 = vpop.f32.mrb[0].mxu0
    %v1036 = vadd.f32 %v630, %v1035
    %v1037 = vpop.f32.mrb[0].mxu0
    %v1038 = vadd.f32 %v632, %v1037
    %1039 = vdwg.mxu0
    %v1040 = vld [vmem:[%s2] sm:$0xff]
    %v1041 = vld [vmem:[%s2 + $0x8] sm:$0xff]
    %v1042 = vld [vmem:[%s2 + $0x10] sm:$0xff]
    %v1043 = vld [vmem:[%s2 + $0x18] sm:$0xff]
    %v1044 = vpack.c.bf16 %v1042, %v1040
    %v1045 = vpack.c.bf16 %v1043, %v1041
    %v1046 = vld [vmem:[#allocation4] sm:$0xff]
    %v1047 = vld [vmem:[#allocation4 + $0x8] sm:$0xff]
    %v1048 = vld [vmem:[#allocation4 + $0x10] sm:$0xff]
    %v1049 = vld [vmem:[#allocation4 + $0x18] sm:$0xff]
    %v1050 = vld [vmem:[#allocation4 + $0x20] sm:$0xff]
    %v1051 = vld [vmem:[#allocation4 + $0x28] sm:$0xff]
    %v1052 = vld [vmem:[#allocation4 + $0x30] sm:$0xff]
    %v1053 = vld [vmem:[#allocation4 + $0x38] sm:$0xff]
    %v1054 = vld [vmem:[#allocation4 + $0x40] sm:$0xff]
    %v1055 = vld [vmem:[#allocation4 + $0x48] sm:$0xff]
    %v1056 = vld [vmem:[#allocation4 + $0x50] sm:$0xff]
    %v1057 = vld [vmem:[#allocation4 + $0x58] sm:$0xff]
    %v1058 = vld [vmem:[#allocation4 + $0x60] sm:$0xff]
    %v1059 = vld [vmem:[#allocation4 + $0x68] sm:$0xff]
    %v1060 = vld [vmem:[#allocation4 + $0x70] sm:$0xff]
    %v1061 = vld [vmem:[#allocation4 + $0x78] sm:$0xff]
    %v1062 = vld [vmem:[#allocation4 + $0x80] sm:$0xff]
    %v1063 = vld [vmem:[#allocation4 + $0x88] sm:$0xff]
    %v1064 = vld [vmem:[#allocation4 + $0x90] sm:$0xff]
    %v1065 = vld [vmem:[#allocation4 + $0x98] sm:$0xff]
    %v1066 = vld [vmem:[#allocation4 + $0xa0] sm:$0xff]
    %v1067 = vld [vmem:[#allocation4 + $0xa8] sm:$0xff]
    %v1068 = vld [vmem:[#allocation4 + $0xb0] sm:$0xff]
    %v1069 = vld [vmem:[#allocation4 + $0xb8] sm:$0xff]
    %v1070 = vld [vmem:[#allocation4 + $0xc0] sm:$0xff]
    %v1071 = vld [vmem:[#allocation4 + $0xc8] sm:$0xff]
    %v1072 = vld [vmem:[#allocation4 + $0xd0] sm:$0xff]
    %v1073 = vld [vmem:[#allocation4 + $0xd8] sm:$0xff]
    %v1074 = vld [vmem:[#allocation4 + $0xe0] sm:$0xff]
    %v1075 = vld [vmem:[#allocation4 + $0xe8] sm:$0xff]
    %v1076 = vld [vmem:[#allocation4 + $0xf0] sm:$0xff]
    %v1077 = vld [vmem:[#allocation4 + $0xf8] sm:$0xff]
    %v1078 = vld [vmem:[#allocation4 + $0x100] sm:$0xff]
    %v1079 = vld [vmem:[#allocation4 + $0x108] sm:$0xff]
    %v1080 = vld [vmem:[#allocation4 + $0x110] sm:$0xff]
    %v1081 = vld [vmem:[#allocation4 + $0x118] sm:$0xff]
    %v1082 = vld [vmem:[#allocation4 + $0x120] sm:$0xff]
    %v1083 = vld [vmem:[#allocation4 + $0x128] sm:$0xff]
    %v1084 = vld [vmem:[#allocation4 + $0x130] sm:$0xff]
    %v1085 = vld [vmem:[#allocation4 + $0x138] sm:$0xff]
    %v1086 = vld [vmem:[#allocation4 + $0x140] sm:$0xff]
    %v1087 = vld [vmem:[#allocation4 + $0x148] sm:$0xff]
    %v1088 = vld [vmem:[#allocation4 + $0x150] sm:$0xff]
    %v1089 = vld [vmem:[#allocation4 + $0x158] sm:$0xff]
    %v1090 = vld [vmem:[#allocation4 + $0x160] sm:$0xff]
    %v1091 = vld [vmem:[#allocation4 + $0x168] sm:$0xff]
    %v1092 = vld [vmem:[#allocation4 + $0x170] sm:$0xff]
    %v1093 = vld [vmem:[#allocation4 + $0x178] sm:$0xff]
    %v1094 = vld [vmem:[#allocation4 + $0x180] sm:$0xff]
    %v1095 = vld [vmem:[#allocation4 + $0x188] sm:$0xff]
    %v1096 = vld [vmem:[#allocation4 + $0x190] sm:$0xff]
    %v1097 = vld [vmem:[#allocation4 + $0x198] sm:$0xff]
    %v1098 = vld [vmem:[#allocation4 + $0x1a0] sm:$0xff]
    %v1099 = vld [vmem:[#allocation4 + $0x1a8] sm:$0xff]
    %v1100 = vld [vmem:[#allocation4 + $0x1b0] sm:$0xff]
    %v1101 = vld [vmem:[#allocation4 + $0x1b8] sm:$0xff]
    %v1102 = vld [vmem:[#allocation4 + $0x1c0] sm:$0xff]
    %v1103 = vld [vmem:[#allocation4 + $0x1c8] sm:$0xff]
    %v1104 = vld [vmem:[#allocation4 + $0x1d0] sm:$0xff]
    %v1105 = vld [vmem:[#allocation4 + $0x1d8] sm:$0xff]
    %v1106 = vld [vmem:[#allocation4 + $0x1e0] sm:$0xff]
    %v1107 = vld [vmem:[#allocation4 + $0x1e8] sm:$0xff]
    %v1108 = vld [vmem:[#allocation4 + $0x1f0] sm:$0xff]
    %v1109 = vld [vmem:[#allocation4 + $0x1f8] sm:$0xff]
    %v1174 = vunpack.c.l.b16 %v1046
    %v1175 = vunpack.c.h.b16 %v1046
    %v1176 = vunpack.c.l.b16 %v1047
    %v1177 = vunpack.c.h.b16 %v1047
    %v1178 = vunpack.c.l.b16 %v1048
    %v1179 = vunpack.c.h.b16 %v1048
    %v1180 = vunpack.c.l.b16 %v1049
    %v1181 = vunpack.c.h.b16 %v1049
    %v1182 = vunpack.c.l.b16 %v1050
    %v1183 = vunpack.c.h.b16 %v1050
    %v1184 = vunpack.c.l.b16 %v1051
    %v1185 = vunpack.c.h.b16 %v1051
    %v1186 = vunpack.c.l.b16 %v1052
    %v1187 = vunpack.c.h.b16 %v1052
    %v1188 = vunpack.c.l.b16 %v1053
    %v1189 = vunpack.c.h.b16 %v1053
    %v1190 = vunpack.c.l.b16 %v1054
    %v1191 = vunpack.c.h.b16 %v1054
    %v1192 = vunpack.c.l.b16 %v1055
    %v1193 = vunpack.c.h.b16 %v1055
    %v1194 = vunpack.c.l.b16 %v1056
    %v1195 = vunpack.c.h.b16 %v1056
    %v1196 = vunpack.c.l.b16 %v1057
    %v1197 = vunpack.c.h.b16 %v1057
    %v1198 = vunpack.c.l.b16 %v1058
    %v1199 = vunpack.c.h.b16 %v1058
    %v1200 = vunpack.c.l.b16 %v1059
    %v1201 = vunpack.c.h.b16 %v1059
    %v1202 = vunpack.c.l.b16 %v1060
    %v1203 = vunpack.c.h.b16 %v1060
    %v1204 = vunpack.c.l.b16 %v1061
    %v1205 = vunpack.c.h.b16 %v1061
    %v1206 = vunpack.c.l.b16 %v1062
    %v1207 = vunpack.c.h.b16 %v1062
    %v1208 = vunpack.c.l.b16 %v1063
    %v1209 = vunpack.c.h.b16 %v1063
    %v1210 = vunpack.c.l.b16 %v1064
    %v1211 = vunpack.c.h.b16 %v1064
    %v1212 = vunpack.c.l.b16 %v1065
    %v1213 = vunpack.c.h.b16 %v1065
    %v1214 = vunpack.c.l.b16 %v1066
    %v1215 = vunpack.c.h.b16 %v1066
    %v1216 = vunpack.c.l.b16 %v1067
    %v1217 = vunpack.c.h.b16 %v1067
    %v1218 = vunpack.c.l.b16 %v1068
    %v1219 = vunpack.c.h.b16 %v1068
    %v1220 = vunpack.c.l.b16 %v1069
    %v1221 = vunpack.c.h.b16 %v1069
    %v1222 = vunpack.c.l.b16 %v1070
    %v1223 = vunpack.c.h.b16 %v1070
    %v1224 = vunpack.c.l.b16 %v1071
    %v1225 = vunpack.c.h.b16 %v1071
    %v1226 = vunpack.c.l.b16 %v1072
    %v1227 = vunpack.c.h.b16 %v1072
    %v1228 = vunpack.c.l.b16 %v1073
    %v1229 = vunpack.c.h.b16 %v1073
    %v1230 = vunpack.c.l.b16 %v1074
    %v1231 = vunpack.c.h.b16 %v1074
    %v1232 = vunpack.c.l.b16 %v1075
    %v1233 = vunpack.c.h.b16 %v1075
    %v1234 = vunpack.c.l.b16 %v1076
    %v1235 = vunpack.c.h.b16 %v1076
    %v1236 = vunpack.c.l.b16 %v1077
    %v1237 = vunpack.c.h.b16 %v1077
    %v1238 = vunpack.c.l.b16 %v1078
    %v1239 = vunpack.c.h.b16 %v1078
    %v1240 = vunpack.c.l.b16 %v1079
    %v1241 = vunpack.c.h.b16 %v1079
    %v1242 = vunpack.c.l.b16 %v1080
    %v1243 = vunpack.c.h.b16 %v1080
    %v1244 = vunpack.c.l.b16 %v1081
    %v1245 = vunpack.c.h.b16 %v1081
    %v1246 = vunpack.c.l.b16 %v1082
    %v1247 = vunpack.c.h.b16 %v1082
    %v1248 = vunpack.c.l.b16 %v1083
    %v1249 = vunpack.c.h.b16 %v1083
    %v1250 = vunpack.c.l.b16 %v1084
    %v1251 = vunpack.c.h.b16 %v1084
    %v1252 = vunpack.c.l.b16 %v1085
    %v1253 = vunpack.c.h.b16 %v1085
    %v1254 = vunpack.c.l.b16 %v1086
    %v1255 = vunpack.c.h.b16 %v1086
    %v1256 = vunpack.c.l.b16 %v1087
    %v1257 = vunpack.c.h.b16 %v1087
    %v1258 = vunpack.c.l.b16 %v1088
    %v1259 = vunpack.c.h.b16 %v1088
    %v1260 = vunpack.c.l.b16 %v1089
    %v1261 = vunpack.c.h.b16 %v1089
    %v1262 = vunpack.c.l.b16 %v1090
    %v1263 = vunpack.c.h.b16 %v1090
    %v1264 = vunpack.c.l.b16 %v1091
    %v1265 = vunpack.c.h.b16 %v1091
    %v1266 = vunpack.c.l.b16 %v1092
    %v1267 = vunpack.c.h.b16 %v1092
    %v1268 = vunpack.c.l.b16 %v1093
    %v1269 = vunpack.c.h.b16 %v1093
    %v1270 = vunpack.c.l.b16 %v1094
    %v1271 = vunpack.c.h.b16 %v1094
    %v1272 = vunpack.c.l.b16 %v1095
    %v1273 = vunpack.c.h.b16 %v1095
    %v1274 = vunpack.c.l.b16 %v1096
    %v1275 = vunpack.c.h.b16 %v1096
    %v1276 = vunpack.c.l.b16 %v1097
    %v1277 = vunpack.c.h.b16 %v1097
    %v1278 = vunpack.c.l.b16 %v1098
    %v1279 = vunpack.c.h.b16 %v1098
    %v1280 = vunpack.c.l.b16 %v1099
    %v1281 = vunpack.c.h.b16 %v1099
    %v1282 = vunpack.c.l.b16 %v1100
    %v1283 = vunpack.c.h.b16 %v1100
    %v1284 = vunpack.c.l.b16 %v1101
    %v1285 = vunpack.c.h.b16 %v1101
    %v1286 = vunpack.c.l.b16 %v1102
    %v1287 = vunpack.c.h.b16 %v1102
    %v1288 = vunpack.c.l.b16 %v1103
    %v1289 = vunpack.c.h.b16 %v1103
    %v1290 = vunpack.c.l.b16 %v1104
    %v1291 = vunpack.c.h.b16 %v1104
    %v1292 = vunpack.c.l.b16 %v1105
    %v1293 = vunpack.c.h.b16 %v1105
    %v1294 = vunpack.c.l.b16 %v1106
    %v1295 = vunpack.c.h.b16 %v1106
    %v1296 = vunpack.c.l.b16 %v1107
    %v1297 = vunpack.c.h.b16 %v1107
    %v1298 = vunpack.c.l.b16 %v1108
    %v1299 = vunpack.c.h.b16 %v1108
    %v1300 = vunpack.c.l.b16 %v1109
    %v1301 = vunpack.c.h.b16 %v1109
    %v1302 = vpack.c.b16 %v1178, %v1174
    %v1303 = vpack.c.b16 %v1179, %v1175
    %v1304 = vpack.c.b16 %v1180, %v1176
    %v1305 = vpack.c.b16 %v1181, %v1177
    %v1306 = vpack.c.b16 %v1186, %v1182
    %v1307 = vpack.c.b16 %v1187, %v1183
    %v1308 = vpack.c.b16 %v1188, %v1184
    %v1309 = vpack.c.b16 %v1189, %v1185
    %v1310 = vpack.c.b16 %v1194, %v1190
    %v1311 = vpack.c.b16 %v1195, %v1191
    %v1312 = vpack.c.b16 %v1196, %v1192
    %v1313 = vpack.c.b16 %v1197, %v1193
    %v1314 = vpack.c.b16 %v1202, %v1198
    %v1315 = vpack.c.b16 %v1203, %v1199
    %v1316 = vpack.c.b16 %v1204, %v1200
    %v1317 = vpack.c.b16 %v1205, %v1201
    %v1318 = vpack.c.b16 %v1210, %v1206
    %v1319 = vpack.c.b16 %v1211, %v1207
    %v1320 = vpack.c.b16 %v1212, %v1208
    %v1321 = vpack.c.b16 %v1213, %v1209
    %v1322 = vpack.c.b16 %v1218, %v1214
    %v1323 = vpack.c.b16 %v1219, %v1215
    %v1324 = vpack.c.b16 %v1220, %v1216
    %v1325 = vpack.c.b16 %v1221, %v1217
    %v1326 = vpack.c.b16 %v1226, %v1222
    %v1327 = vpack.c.b16 %v1227, %v1223
    %v1328 = vpack.c.b16 %v1228, %v1224
    %v1329 = vpack.c.b16 %v1229, %v1225
    %v1330 = vpack.c.b16 %v1234, %v1230
    %v1331 = vpack.c.b16 %v1235, %v1231
    %v1332 = vpack.c.b16 %v1236, %v1232
    %v1333 = vpack.c.b16 %v1237, %v1233
    %v1334 = vpack.c.b16 %v1242, %v1238
    %v1335 = vpack.c.b16 %v1243, %v1239
    %v1336 = vpack.c.b16 %v1244, %v1240
    %v1337 = vpack.c.b16 %v1245, %v1241
    %v1338 = vpack.c.b16 %v1250, %v1246
    %v1339 = vpack.c.b16 %v1251, %v1247
    %v1340 = vpack.c.b16 %v1252, %v1248
    %v1341 = vpack.c.b16 %v1253, %v1249
    %v1342 = vpack.c.b16 %v1258, %v1254
    %v1343 = vpack.c.b16 %v1259, %v1255
    %v1344 = vpack.c.b16 %v1260, %v1256
    %v1345 = vpack.c.b16 %v1261, %v1257
    %v1346 = vpack.c.b16 %v1266, %v1262
    %v1347 = vpack.c.b16 %v1267, %v1263
    %v1348 = vpack.c.b16 %v1268, %v1264
    %v1349 = vpack.c.b16 %v1269, %v1265
    %v1350 = vpack.c.b16 %v1274, %v1270
    %v1351 = vpack.c.b16 %v1275, %v1271
    %v1352 = vpack.c.b16 %v1276, %v1272
    %v1353 = vpack.c.b16 %v1277, %v1273
    %v1354 = vpack.c.b16 %v1282, %v1278
    %v1355 = vpack.c.b16 %v1283, %v1279
    %v1356 = vpack.c.b16 %v1284, %v1280
    %v1357 = vpack.c.b16 %v1285, %v1281
    %v1358 = vpack.c.b16 %v1290, %v1286
    %v1359 = vpack.c.b16 %v1291, %v1287
    %v1360 = vpack.c.b16 %v1292, %v1288
    %v1361 = vpack.c.b16 %v1293, %v1289
    %v1362 = vpack.c.b16 %v1298, %v1294
    %v1363 = vpack.c.b16 %v1299, %v1295
    %v1364 = vpack.c.b16 %v1300, %v1296
    %v1365 = vpack.c.b16 %v1301, %v1297
    %1430 = vmatprep.subr.bf16.mxu0 %v1303
    %1431 = vmatpush1.bf16.msra.mxu0 %v1302
    %1432 = vmatprep.subr.bf16.mxu0 %v1307
    %1433 = vmatpush1.bf16.msra.mxu0 %v1306
    %1434 = vmatprep.subr.bf16.mxu0 %v1311
    %1435 = vmatpush1.bf16.msra.mxu0 %v1310
    %1436 = vmatprep.subr.bf16.mxu0 %v1315
    %1437 = vmatpush1.bf16.msra.mxu0 %v1314
    %1438 = vmatprep.subr.bf16.mxu0 %v1319
    %1439 = vmatpush1.bf16.msra.mxu0 %v1318
    %1440 = vmatprep.subr.bf16.mxu0 %v1323
    %1441 = vmatpush1.bf16.msra.mxu0 %v1322
    %1442 = vmatprep.subr.bf16.mxu0 %v1327
    %1443 = vmatpush1.bf16.msra.mxu0 %v1326
    %1444 = vmatprep.subr.bf16.mxu0 %v1331
    %1445 = vmatpush1.bf16.msra.mxu0 %v1330
    %1446 = vmatprep.subr.bf16.mxu0 %v1335
    %1447 = vmatpush1.bf16.msra.mxu0 %v1334
    %1448 = vmatprep.subr.bf16.mxu0 %v1339
    %1449 = vmatpush1.bf16.msra.mxu0 %v1338
    %1450 = vmatprep.subr.bf16.mxu0 %v1343
    %1451 = vmatpush1.bf16.msra.mxu0 %v1342
    %1452 = vmatprep.subr.bf16.mxu0 %v1347
    %1453 = vmatpush1.bf16.msra.mxu0 %v1346
    %1454 = vmatprep.subr.bf16.mxu0 %v1351
    %1455 = vmatpush1.bf16.msra.mxu0 %v1350
    %1456 = vmatprep.subr.bf16.mxu0 %v1355
    %1457 = vmatpush1.bf16.msra.mxu0 %v1354
    %1458 = vmatprep.subr.bf16.mxu0 %v1359
    %1459 = vmatpush1.bf16.msra.mxu0 %v1358
    %1460 = vmatprep.subr.bf16.mxu0 %v1363
    %1461 = vmatpush1.bf16.msra.mxu0 %v1362
    %1462 = vmatprep.mubr.bf16.mxu0 %v1045
    %1463 = vmatmul.mubr.bf16.gmra.mrb[0].mxu0 %v1044
    %v1464 = vpop.f32.mrb[0].mxu0
    %v1465 = vadd.f32 0.0, %v1464
    %v1466 = vpop.f32.mrb[0].mxu0
    %v1467 = vadd.f32 0.0, %v1466
    %v1468 = vpop.f32.mrb[0].mxu0
    %v1469 = vadd.f32 0.0, %v1468
    %v1470 = vpop.f32.mrb[0].mxu0
    %v1471 = vadd.f32 0.0, %v1470
    %1472 = vdwg.mxu0
    %1473 = vmatprep.subr.bf16.mxu0 %v1305
    %1474 = vmatpush1.bf16.msra.mxu0 %v1304
    %1475 = vmatprep.subr.bf16.mxu0 %v1309
    %1476 = vmatpush1.bf16.msra.mxu0 %v1308
    %1477 = vmatprep.subr.bf16.mxu0 %v1313
    %1478 = vmatpush1.bf16.msra.mxu0 %v1312
    %1479 = vmatprep.subr.bf16.mxu0 %v1317
    %1480 = vmatpush1.bf16.msra.mxu0 %v1316
    %1481 = vmatprep.subr.bf16.mxu0 %v1321
    %1482 = vmatpush1.bf16.msra.mxu0 %v1320
    %1483 = vmatprep.subr.bf16.mxu0 %v1325
    %1484 = vmatpush1.bf16.msra.mxu0 %v1324
    %1485 = vmatprep.subr.bf16.mxu0 %v1329
    %1486 = vmatpush1.bf16.msra.mxu0 %v1328
    %1487 = vmatprep.subr.bf16.mxu0 %v1333
    %1488 = vmatpush1.bf16.msra.mxu0 %v1332
    %1489 = vmatprep.subr.bf16.mxu0 %v1337
    %1490 = vmatpush1.bf16.msra.mxu0 %v1336
    %1491 = vmatprep.subr.bf16.mxu0 %v1341
    %1492 = vmatpush1.bf16.msra.mxu0 %v1340
    %1493 = vmatprep.subr.bf16.mxu0 %v1345
    %1494 = vmatpush1.bf16.msra.mxu0 %v1344
    %1495 = vmatprep.subr.bf16.mxu0 %v1349
    %1496 = vmatpush1.bf16.msra.mxu0 %v1348
    %1497 = vmatprep.subr.bf16.mxu0 %v1353
    %1498 = vmatpush1.bf16.msra.mxu0 %v1352
    %1499 = vmatprep.subr.bf16.mxu0 %v1357
    %1500 = vmatpush1.bf16.msra.mxu0 %v1356
    %1501 = vmatprep.subr.bf16.mxu0 %v1361
    %1502 = vmatpush1.bf16.msra.mxu0 %v1360
    %1503 = vmatprep.subr.bf16.mxu0 %v1365
    %1504 = vmatpush1.bf16.msra.mxu0 %v1364
    %1505 = vmatprep.mubr.bf16.mxu0 %v1045
    %1506 = vmatmul.mubr.bf16.gmra.mrb[0].mxu0 %v1044
    %v1507 = vpop.f32.mrb[0].mxu0
    %v1508 = vadd.f32 0.0, %v1507
    %v1509 = vpop.f32.mrb[0].mxu0
    %v1510 = vadd.f32 0.0, %v1509
    %v1511 = vpop.f32.mrb[0].mxu0
    %v1512 = vadd.f32 0.0, %v1511
    %v1513 = vpop.f32.mrb[0].mxu0
    %v1514 = vadd.f32 0.0, %v1513
    %1515 = vdwg.mxu0
    %v1516 = vadd.f32 %v989, %v1465
    %v1517 = vadd.f32 %v991, %v1467
    %v1518 = vadd.f32 %v1032, %v1508
    %v1519 = vadd.f32 %v1034, %v1510
    %v1520 = vadd.f32 %v993, %v1469
    %v1521 = vadd.f32 %v995, %v1471
    %v1522 = vadd.f32 %v1036, %v1512
    %v1523 = vadd.f32 %v1038, %v1514
    %v1524 = vld [vmem:[%s3] sm:$0xff]
    %v1525 = vld [vmem:[%s3 + $0x8] sm:$0xff]
    %v1526 = vpack.c.bf16 %v1525, %v1524
    %v1527 = vld [vmem:[%s9] sm:$0xff]
    %v1528 = vld [vmem:[%s9 + $0x8] sm:$0xff]
    %v1531 = vunpack.c.l.b16 %v1527
    %v1532 = vunpack.c.h.b16 %v1527
    %v1533 = vunpack.c.l.b16 %v1528
    %v1534 = vunpack.c.h.b16 %v1528
    %v1535 = vpack.c.b16 %v1531, %v1531
    %v1536 = vpack.c.b16 %v1532, %v1532
    %v1537 = vpack.c.b16 %v1533, %v1533
    %v1538 = vpack.c.b16 %v1534, %v1534
    %vm1539 = vcmask 64512
    %v1541 = vsel %vm1539, %v1526, 0
    %vm1543 = vcmask 1043456
    %v1545 = vsel %vm1543, %v1535, 0
    %v1548 = vsel %vm1543, %v1536, 0
    %v1551 = vsel %vm1543, %v1537, 0
    %v1554 = vsel %vm1543, %v1538, 0
    %1556 = vmatprep.subr.bf16.mxu0 %v1548
    %1557 = vmatpush1.bf16.msra.mxu0 %v1545
    %1558 = vmatprep.subr.bf16.mxu0 0
    %1559 = vmatpush1.bf16.msra.mxu0 0
    %1560 = vmatprep.subr.bf16.mxu0 0
    %1561 = vmatpush1.bf16.msra.mxu0 0
    %1562 = vmatprep.subr.bf16.mxu0 0
    %1563 = vmatpush1.bf16.msra.mxu0 0
    %1564 = vmatprep.subr.bf16.mxu0 0
    %1565 = vmatpush1.bf16.msra.mxu0 0
    %1566 = vmatprep.subr.bf16.mxu0 0
    %1567 = vmatpush1.bf16.msra.mxu0 0
    %1568 = vmatprep.subr.bf16.mxu0 0
    %1569 = vmatpush1.bf16.msra.mxu0 0
    %1570 = vmatprep.subr.bf16.mxu0 0
    %1571 = vmatpush1.bf16.msra.mxu0 0
    %1572 = vmatprep.subr.bf16.mxu0 0
    %1573 = vmatpush1.bf16.msra.mxu0 0
    %1574 = vmatprep.subr.bf16.mxu0 0
    %1575 = vmatpush1.bf16.msra.mxu0 0
    %1576 = vmatprep.subr.bf16.mxu0 0
    %1577 = vmatpush1.bf16.msra.mxu0 0
    %1578 = vmatprep.subr.bf16.mxu0 0
    %1579 = vmatpush1.bf16.msra.mxu0 0
    %1580 = vmatprep.subr.bf16.mxu0 0
    %1581 = vmatpush1.bf16.msra.mxu0 0
    %1582 = vmatprep.subr.bf16.mxu0 0
    %1583 = vmatpush1.bf16.msra.mxu0 0
    %1584 = vmatprep.subr.bf16.mxu0 0
    %1585 = vmatpush1.bf16.msra.mxu0 0
    %1586 = vmatprep.subr.bf16.mxu0 0
    %1587 = vmatpush1.bf16.msra.mxu0 0
    %1588 = vmatprep.mubr.bf16.mxu0 0
    %1589 = vmatmul.mubr.bf16.gmra.mrb[0].mxu0 %v1541
    %v1590 = vpop.f32.mrb[0].mxu0
    %v1591 = vadd.f32 0.0, %v1590
    %v1592 = vpop.f32.mrb[0].mxu0
    %v1593 = vadd.f32 0.0, %v1592
    %v1594 = vpop.f32.mrb[0].mxu0
    %v1595 = vadd.f32 0.0, %v1594
    %v1596 = vpop.f32.mrb[0].mxu0
    %v1597 = vadd.f32 0.0, %v1596
    %1598 = vdwg.mxu0
    %1599 = vmatprep.subr.bf16.mxu0 %v1554
    %1600 = vmatpush1.bf16.msra.mxu0 %v1551
    %1601 = vmatprep.subr.bf16.mxu0 0
    %1602 = vmatpush1.bf16.msra.mxu0 0
    %1603 = vmatprep.subr.bf16.mxu0 0
    %1604 = vmatpush1.bf16.msra.mxu0 0
    %1605 = vmatprep.subr.bf16.mxu0 0
    %1606 = vmatpush1.bf16.msra.mxu0 0
    %1607 = vmatprep.subr.bf16.mxu0 0
    %1608 = vmatpush1.bf16.msra.mxu0 0
    %1609 = vmatprep.subr.bf16.mxu0 0
    %1610 = vmatpush1.bf16.msra.mxu0 0
    %1611 = vmatprep.subr.bf16.mxu0 0
    %1612 = vmatpush1.bf16.msra.mxu0 0
    %1613 = vmatprep.subr.bf16.mxu0 0
    %1614 = vmatpush1.bf16.msra.mxu0 0
    %1615 = vmatprep.subr.bf16.mxu0 0
    %1616 = vmatpush1.bf16.msra.mxu0 0
    %1617 = vmatprep.subr.bf16.mxu0 0
    %1618 = vmatpush1.bf16.msra.mxu0 0
    %1619 = vmatprep.subr.bf16.mxu0 0
    %1620 = vmatpush1.bf16.msra.mxu0 0
    %1621 = vmatprep.subr.bf16.mxu0 0
    %1622 = vmatpush1.bf16.msra.mxu0 0
    %1623 = vmatprep.subr.bf16.mxu0 0
    %1624 = vmatpush1.bf16.msra.mxu0 0
    %1625 = vmatprep.subr.bf16.mxu0 0
    %1626 = vmatpush1.bf16.msra.mxu0 0
    %1627 = vmatprep.subr.bf16.mxu0 0
    %1628 = vmatpush1.bf16.msra.mxu0 0
    %1629 = vmatprep.subr.bf16.mxu0 0
    %1630 = vmatpush1.bf16.msra.mxu0 0
    %1631 = vmatprep.mubr.bf16.mxu0 0
    %1632 = vmatmul.mubr.bf16.gmra.mrb[0].mxu0 %v1541
    %v1633 = vpop.f32.mrb[0].mxu0
    %v1634 = vadd.f32 0.0, %v1633
    %v1635 = vpop.f32.mrb[0].mxu0
    %v1636 = vadd.f32 0.0, %v1635
    %v1637 = vpop.f32.mrb[0].mxu0
    %v1638 = vadd.f32 0.0, %v1637
    %v1639 = vpop.f32.mrb[0].mxu0
    %v1640 = vadd.f32 0.0, %v1639
    %1641 = vdwg.mxu0
    %v1642 = vadd.f32 %v1516, %v1591
    %v1643 = vadd.f32 %v1517, %v1593
    %v1644 = vadd.f32 %v1518, %v1634
    %v1645 = vadd.f32 %v1519, %v1636
    %v1646 = vadd.f32 %v1520, %v1595
    %v1647 = vadd.f32 %v1521, %v1597
    %v1648 = vadd.f32 %v1522, %v1638
    %v1649 = vadd.f32 %v1523, %v1640
    %v1650 = vld [vmem:[%s8] sm:$0xf]
    %v1651 = vld [vmem:[%s10] sm:$0xf]
    %v1652 = vadd.f32 %v1650, %v1651
    %v1654 = vlaneseq
    %v1655 = vshrl.u32 %v1654, 7
    %v1656 = vsub.s32 0, %v1655
    %v1657 = vrot.slane %v1652, %v1656
    %v1658 = vlaneseq
    %v1659 = vshrl.u32 %v1658, 7
    %v1660 = vsub.s32 1, %v1659
    %v1661 = vrot.slane %v1652, %v1660
    %v1662 = vlaneseq
    %v1663 = vshrl.u32 %v1662, 7
    %v1664 = vsub.s32 2, %v1663
    %v1665 = vrot.slane %v1652, %v1664
    %v1666 = vlaneseq
    %v1667 = vshrl.u32 %v1666, 7
    %v1668 = vsub.s32 3, %v1667
    %v1669 = vrot.slane %v1652, %v1668
    %v1674 = vadd.f32 %v1642, %v1657
    %v1675 = vadd.f32 %v1643, %v1661
    %v1676 = vadd.f32 %v1644, %v1665
    %v1677 = vadd.f32 %v1645, %v1669
    %v1678 = vadd.f32 %v1646, %v1657
    %v1679 = vadd.f32 %v1647, %v1661
    %v1680 = vadd.f32 %v1648, %v1665
    %v1681 = vadd.f32 %v1649, %v1669
    %v1682 = vtanh.pop %v1674
    %v1683 = vtanh.pop %v1675
    %v1684 = vtanh.pop %v1678
    %v1685 = vtanh.pop %v1679
    %v1686 = vxor.u32 %v1676, 2147483648
    %v1687 = vxor.u32 %v1677, 2147483648
    %v1688 = vxor.u32 %v1680, 2147483648
    %v1689 = vxor.u32 %v1681, 2147483648
    %v1690 = vmul.f32 %v1686, 1.442695
    %v1691 = vpow.pop %v1690
    %v1692 = vmul.f32 %v1687, 1.442695
    %v1693 = vpow.pop %v1692
    %v1694 = vmul.f32 %v1688, 1.442695
    %v1695 = vpow.pop %v1694
    %v1696 = vmul.f32 %v1689, 1.442695
    %v1697 = vpow.pop %v1696
    %v1698 = vadd.f32 %v1691, 1.0
    %v1699 = vadd.f32 %v1693, 1.0
    %v1700 = vadd.f32 %v1695, 1.0
    %v1701 = vadd.f32 %v1697, 1.0
    %v1702 = vrcp.pop %v1698
    %v1703 = vmul.f32 1.0, %v1702
    %v1704 = vrcp.pop %v1699
    %v1705 = vmul.f32 1.0, %v1704
    %v1706 = vrcp.pop %v1700
    %v1707 = vmul.f32 1.0, %v1706
    %v1708 = vrcp.pop %v1701
    %v1709 = vmul.f32 1.0, %v1708
    %v1710 = vmul.f32 %v1682, %v1703
    %v1711 = vmul.f32 %v1683, %v1705
    %v1712 = vmul.f32 %v1684, %v1707
    %v1713 = vmul.f32 %v1685, %v1709
    %v1714 = vpack.c.bf16 %v1712, %v1710
    %v1715 = vpack.c.bf16 %v1713, %v1711
    %v1716 = vld [vmem:[#allocation6] sm:$0xff]
    %v1717 = vld [vmem:[#allocation6 + $0x8] sm:$0xff]
    %v1718 = vld [vmem:[#allocation6 + $0x10] sm:$0xff]
    %v1719 = vld [vmem:[#allocation6 + $0x18] sm:$0xff]
    %v1720 = vld [vmem:[#allocation6 + $0x20] sm:$0xff]
    %v1721 = vld [vmem:[#allocation6 + $0x28] sm:$0xff]
    %v1722 = vld [vmem:[#allocation6 + $0x30] sm:$0xff]
    %v1723 = vld [vmem:[#allocation6 + $0x38] sm:$0xff]
    %v1724 = vld [vmem:[#allocation6 + $0x40] sm:$0xff]
    %v1725 = vld [vmem:[#allocation6 + $0x48] sm:$0xff]
    %v1726 = vld [vmem:[#allocation6 + $0x50] sm:$0xff]
    %v1727 = vld [vmem:[#allocation6 + $0x58] sm:$0xff]
    %v1728 = vld [vmem:[#allocation6 + $0x60] sm:$0xff]
    %v1729 = vld [vmem:[#allocation6 + $0x68] sm:$0xff]
    %v1730 = vld [vmem:[#allocation6 + $0x70] sm:$0xff]
    %v1731 = vld [vmem:[#allocation6 + $0x78] sm:$0xff]
    %v1732 = vld [vmem:[#allocation6 + $0x80] sm:$0xff]
    %v1733 = vld [vmem:[#allocation6 + $0x88] sm:$0xff]
    %v1734 = vld [vmem:[#allocation6 + $0x90] sm:$0xff]
    %v1735 = vld [vmem:[#allocation6 + $0x98] sm:$0xff]
    %v1736 = vld [vmem:[#allocation6 + $0xa0] sm:$0xff]
    %v1737 = vld [vmem:[#allocation6 + $0xa8] sm:$0xff]
    %v1738 = vld [vmem:[#allocation6 + $0xb0] sm:$0xff]
    %v1739 = vld [vmem:[#allocation6 + $0xb8] sm:$0xff]
    %v1740 = vld [vmem:[#allocation6 + $0xc0] sm:$0xff]
    %v1741 = vld [vmem:[#allocation6 + $0xc8] sm:$0xff]
    %v1742 = vld [vmem:[#allocation6 + $0xd0] sm:$0xff]
    %v1743 = vld [vmem:[#allocation6 + $0xd8] sm:$0xff]
    %v1744 = vld [vmem:[#allocation6 + $0xe0] sm:$0xff]
    %v1745 = vld [vmem:[#allocation6 + $0xe8] sm:$0xff]
    %v1746 = vld [vmem:[#allocation6 + $0xf0] sm:$0xff]
    %v1747 = vld [vmem:[#allocation6 + $0xf8] sm:$0xff]
    %v1748 = vld [vmem:[#allocation6 + $0x100] sm:$0xff]
    %v1749 = vld [vmem:[#allocation6 + $0x108] sm:$0xff]
    %v1750 = vld [vmem:[#allocation6 + $0x110] sm:$0xff]
    %v1751 = vld [vmem:[#allocation6 + $0x118] sm:$0xff]
    %v1752 = vld [vmem:[#allocation6 + $0x120] sm:$0xff]
    %v1753 = vld [vmem:[#allocation6 + $0x128] sm:$0xff]
    %v1754 = vld [vmem:[#allocation6 + $0x130] sm:$0xff]
    %v1755 = vld [vmem:[#allocation6 + $0x138] sm:$0xff]
    %v1756 = vld [vmem:[#allocation6 + $0x140] sm:$0xff]
    %v1757 = vld [vmem:[#allocation6 + $0x148] sm:$0xff]
    %v1758 = vld [vmem:[#allocation6 + $0x150] sm:$0xff]
    %v1759 = vld [vmem:[#allocation6 + $0x158] sm:$0xff]
    %v1760 = vld [vmem:[#allocation6 + $0x160] sm:$0xff]
    %v1761 = vld [vmem:[#allocation6 + $0x168] sm:$0xff]
    %v1762 = vld [vmem:[#allocation6 + $0x170] sm:$0xff]
    %v1763 = vld [vmem:[#allocation6 + $0x178] sm:$0xff]
    %v1764 = vld [vmem:[#allocation6 + $0x180] sm:$0xff]
    %v1765 = vld [vmem:[#allocation6 + $0x188] sm:$0xff]
    %v1766 = vld [vmem:[#allocation6 + $0x190] sm:$0xff]
    %v1767 = vld [vmem:[#allocation6 + $0x198] sm:$0xff]
    %v1768 = vld [vmem:[#allocation6 + $0x1a0] sm:$0xff]
    %v1769 = vld [vmem:[#allocation6 + $0x1a8] sm:$0xff]
    %v1770 = vld [vmem:[#allocation6 + $0x1b0] sm:$0xff]
    %v1771 = vld [vmem:[#allocation6 + $0x1b8] sm:$0xff]
    %v1772 = vld [vmem:[#allocation6 + $0x1c0] sm:$0xff]
    %v1773 = vld [vmem:[#allocation6 + $0x1c8] sm:$0xff]
    %v1774 = vld [vmem:[#allocation6 + $0x1d0] sm:$0xff]
    %v1775 = vld [vmem:[#allocation6 + $0x1d8] sm:$0xff]
    %v1776 = vld [vmem:[#allocation6 + $0x1e0] sm:$0xff]
    %v1777 = vld [vmem:[#allocation6 + $0x1e8] sm:$0xff]
    %v1778 = vld [vmem:[#allocation6 + $0x1f0] sm:$0xff]
    %v1779 = vld [vmem:[#allocation6 + $0x1f8] sm:$0xff]
    %v1780 = vld [vmem:[%s12] sm:$0xf]
    %v1782 = vlaneseq
    %v1783 = vshrl.u32 %v1782, 7
    %v1784 = vsub.s32 0, %v1783
    %v1785 = vrot.slane %v1780, %v1784
    %v1786 = vlaneseq
    %v1787 = vshrl.u32 %v1786, 7
    %v1788 = vsub.s32 1, %v1787
    %v1789 = vrot.slane %v1780, %v1788
    %v1790 = vlaneseq
    %v1791 = vshrl.u32 %v1790, 7
    %v1792 = vsub.s32 2, %v1791
    %v1793 = vrot.slane %v1780, %v1792
    %v1794 = vlaneseq
    %v1795 = vshrl.u32 %v1794, 7
    %v1796 = vsub.s32 3, %v1795
    %v1797 = vrot.slane %v1780, %v1796
    %v1866 = vunpack.c.l.b16 %v1716
    %v1867 = vunpack.c.h.b16 %v1716
    %v1868 = vunpack.c.l.b16 %v1717
    %v1869 = vunpack.c.h.b16 %v1717
    %v1870 = vunpack.c.l.b16 %v1718
    %v1871 = vunpack.c.h.b16 %v1718
    %v1872 = vunpack.c.l.b16 %v1719
    %v1873 = vunpack.c.h.b16 %v1719
    %v1874 = vunpack.c.l.b16 %v1720
    %v1875 = vunpack.c.h.b16 %v1720
    %v1876 = vunpack.c.l.b16 %v1721
    %v1877 = vunpack.c.h.b16 %v1721
    %v1878 = vunpack.c.l.b16 %v1722
    %v1879 = vunpack.c.h.b16 %v1722
    %v1880 = vunpack.c.l.b16 %v1723
    %v1881 = vunpack.c.h.b16 %v1723
    %v1882 = vunpack.c.l.b16 %v1724
    %v1883 = vunpack.c.h.b16 %v1724
    %v1884 = vunpack.c.l.b16 %v1725
    %v1885 = vunpack.c.h.b16 %v1725
    %v1886 = vunpack.c.l.b16 %v1726
    %v1887 = vunpack.c.h.b16 %v1726
    %v1888 = vunpack.c.l.b16 %v1727
    %v1889 = vunpack.c.h.b16 %v1727
    %v1890 = vunpack.c.l.b16 %v1728
    %v1891 = vunpack.c.h.b16 %v1728
    %v1892 = vunpack.c.l.b16 %v1729
    %v1893 = vunpack.c.h.b16 %v1729
    %v1894 = vunpack.c.l.b16 %v1730
    %v1895 = vunpack.c.h.b16 %v1730
    %v1896 = vunpack.c.l.b16 %v1731
    %v1897 = vunpack.c.h.b16 %v1731
    %v1898 = vunpack.c.l.b16 %v1732
    %v1899 = vunpack.c.h.b16 %v1732
    %v1900 = vunpack.c.l.b16 %v1733
    %v1901 = vunpack.c.h.b16 %v1733
    %v1902 = vunpack.c.l.b16 %v1734
    %v1903 = vunpack.c.h.b16 %v1734
    %v1904 = vunpack.c.l.b16 %v1735
    %v1905 = vunpack.c.h.b16 %v1735
    %v1906 = vunpack.c.l.b16 %v1736
    %v1907 = vunpack.c.h.b16 %v1736
    %v1908 = vunpack.c.l.b16 %v1737
    %v1909 = vunpack.c.h.b16 %v1737
    %v1910 = vunpack.c.l.b16 %v1738
    %v1911 = vunpack.c.h.b16 %v1738
    %v1912 = vunpack.c.l.b16 %v1739
    %v1913 = vunpack.c.h.b16 %v1739
    %v1914 = vunpack.c.l.b16 %v1740
    %v1915 = vunpack.c.h.b16 %v1740
    %v1916 = vunpack.c.l.b16 %v1741
    %v1917 = vunpack.c.h.b16 %v1741
    %v1918 = vunpack.c.l.b16 %v1742
    %v1919 = vunpack.c.h.b16 %v1742
    %v1920 = vunpack.c.l.b16 %v1743
    %v1921 = vunpack.c.h.b16 %v1743
    %v1922 = vunpack.c.l.b16 %v1744
    %v1923 = vunpack.c.h.b16 %v1744
    %v1924 = vunpack.c.l.b16 %v1745
    %v1925 = vunpack.c.h.b16 %v1745
    %v1926 = vunpack.c.l.b16 %v1746
    %v1927 = vunpack.c.h.b16 %v1746
    %v1928 = vunpack.c.l.b16 %v1747
    %v1929 = vunpack.c.h.b16 %v1747
    %v1930 = vunpack.c.l.b16 %v1748
    %v1931 = vunpack.c.h.b16 %v1748
    %v1932 = vunpack.c.l.b16 %v1749
    %v1933 = vunpack.c.h.b16 %v1749
    %v1934 = vunpack.c.l.b16 %v1750
    %v1935 = vunpack.c.h.b16 %v1750
    %v1936 = vunpack.c.l.b16 %v1751
    %v1937 = vunpack.c.h.b16 %v1751
    %v1938 = vunpack.c.l.b16 %v1752
    %v1939 = vunpack.c.h.b16 %v1752
    %v1940 = vunpack.c.l.b16 %v1753
    %v1941 = vunpack.c.h.b16 %v1753
    %v1942 = vunpack.c.l.b16 %v1754
    %v1943 = vunpack.c.h.b16 %v1754
    %v1944 = vunpack.c.l.b16 %v1755
    %v1945 = vunpack.c.h.b16 %v1755
    %v1946 = vunpack.c.l.b16 %v1756
    %v1947 = vunpack.c.h.b16 %v1756
    %v1948 = vunpack.c.l.b16 %v1757
    %v1949 = vunpack.c.h.b16 %v1757
    %v1950 = vunpack.c.l.b16 %v1758
    %v1951 = vunpack.c.h.b16 %v1758
    %v1952 = vunpack.c.l.b16 %v1759
    %v1953 = vunpack.c.h.b16 %v1759
    %v1954 = vunpack.c.l.b16 %v1760
    %v1955 = vunpack.c.h.b16 %v1760
    %v1956 = vunpack.c.l.b16 %v1761
    %v1957 = vunpack.c.h.b16 %v1761
    %v1958 = vunpack.c.l.b16 %v1762
    %v1959 = vunpack.c.h.b16 %v1762
    %v1960 = vunpack.c.l.b16 %v1763
    %v1961 = vunpack.c.h.b16 %v1763
    %v1962 = vunpack.c.l.b16 %v1764
    %v1963 = vunpack.c.h.b16 %v1764
    %v1964 = vunpack.c.l.b16 %v1765
    %v1965 = vunpack.c.h.b16 %v1765
    %v1966 = vunpack.c.l.b16 %v1766
    %v1967 = vunpack.c.h.b16 %v1766
    %v1968 = vunpack.c.l.b16 %v1767
    %v1969 = vunpack.c.h.b16 %v1767
    %v1970 = vunpack.c.l.b16 %v1768
    %v1971 = vunpack.c.h.b16 %v1768
    %v1972 = vunpack.c.l.b16 %v1769
    %v1973 = vunpack.c.h.b16 %v1769
    %v1974 = vunpack.c.l.b16 %v1770
    %v1975 = vunpack.c.h.b16 %v1770
    %v1976 = vunpack.c.l.b16 %v1771
    %v1977 = vunpack.c.h.b16 %v1771
    %v1978 = vunpack.c.l.b16 %v1772
    %v1979 = vunpack.c.h.b16 %v1772
    %v1980 = vunpack.c.l.b16 %v1773
    %v1981 = vunpack.c.h.b16 %v1773
    %v1982 = vunpack.c.l.b16 %v1774
    %v1983 = vunpack.c.h.b16 %v1774
    %v1984 = vunpack.c.l.b16 %v1775
    %v1985 = vunpack.c.h.b16 %v1775
    %v1986 = vunpack.c.l.b16 %v1776
    %v1987 = vunpack.c.h.b16 %v1776
    %v1988 = vunpack.c.l.b16 %v1777
    %v1989 = vunpack.c.h.b16 %v1777
    %v1990 = vunpack.c.l.b16 %v1778
    %v1991 = vunpack.c.h.b16 %v1778
    %v1992 = vunpack.c.l.b16 %v1779
    %v1993 = vunpack.c.h.b16 %v1779
    %v1994 = vpack.c.b16 %v1870, %v1866
    %v1995 = vpack.c.b16 %v1871, %v1867
    %v1996 = vpack.c.b16 %v1872, %v1868
    %v1997 = vpack.c.b16 %v1873, %v1869
    %v1998 = vpack.c.b16 %v1878, %v1874
    %v1999 = vpack.c.b16 %v1879, %v1875
    %v2000 = vpack.c.b16 %v1880, %v1876
    %v2001 = vpack.c.b16 %v1881, %v1877
    %v2002 = vpack.c.b16 %v1886, %v1882
    %v2003 = vpack.c.b16 %v1887, %v1883
    %v2004 = vpack.c.b16 %v1888, %v1884
    %v2005 = vpack.c.b16 %v1889, %v1885
    %v2006 = vpack.c.b16 %v1894, %v1890
    %v2007 = vpack.c.b16 %v1895, %v1891
    %v2008 = vpack.c.b16 %v1896, %v1892
    %v2009 = vpack.c.b16 %v1897, %v1893
    %v2010 = vpack.c.b16 %v1902, %v1898
    %v2011 = vpack.c.b16 %v1903, %v1899
    %v2012 = vpack.c.b16 %v1904, %v1900
    %v2013 = vpack.c.b16 %v1905, %v1901
    %v2014 = vpack.c.b16 %v1910, %v1906
    %v2015 = vpack.c.b16 %v1911, %v1907
    %v2016 = vpack.c.b16 %v1912, %v1908
    %v2017 = vpack.c.b16 %v1913, %v1909
    %v2018 = vpack.c.b16 %v1918, %v1914
    %v2019 = vpack.c.b16 %v1919, %v1915
    %v2020 = vpack.c.b16 %v1920, %v1916
    %v2021 = vpack.c.b16 %v1921, %v1917
    %v2022 = vpack.c.b16 %v1926, %v1922
    %v2023 = vpack.c.b16 %v1927, %v1923
    %v2024 = vpack.c.b16 %v1928, %v1924
    %v2025 = vpack.c.b16 %v1929, %v1925
    %v2026 = vpack.c.b16 %v1934, %v1930
    %v2027 = vpack.c.b16 %v1935, %v1931
    %v2028 = vpack.c.b16 %v1936, %v1932
    %v2029 = vpack.c.b16 %v1937, %v1933
    %v2030 = vpack.c.b16 %v1942, %v1938
    %v2031 = vpack.c.b16 %v1943, %v1939
    %v2032 = vpack.c.b16 %v1944, %v1940
    %v2033 = vpack.c.b16 %v1945, %v1941
    %v2034 = vpack.c.b16 %v1950, %v1946
    %v2035 = vpack.c.b16 %v1951, %v1947
    %v2036 = vpack.c.b16 %v1952, %v1948
    %v2037 = vpack.c.b16 %v1953, %v1949
    %v2038 = vpack.c.b16 %v1958, %v1954
    %v2039 = vpack.c.b16 %v1959, %v1955
    %v2040 = vpack.c.b16 %v1960, %v1956
    %v2041 = vpack.c.b16 %v1961, %v1957
    %v2042 = vpack.c.b16 %v1966, %v1962
    %v2043 = vpack.c.b16 %v1967, %v1963
    %v2044 = vpack.c.b16 %v1968, %v1964
    %v2045 = vpack.c.b16 %v1969, %v1965
    %v2046 = vpack.c.b16 %v1974, %v1970
    %v2047 = vpack.c.b16 %v1975, %v1971
    %v2048 = vpack.c.b16 %v1976, %v1972
    %v2049 = vpack.c.b16 %v1977, %v1973
    %v2050 = vpack.c.b16 %v1982, %v1978
    %v2051 = vpack.c.b16 %v1983, %v1979
    %v2052 = vpack.c.b16 %v1984, %v1980
    %v2053 = vpack.c.b16 %v1985, %v1981
    %v2054 = vpack.c.b16 %v1990, %v1986
    %v2055 = vpack.c.b16 %v1991, %v1987
    %v2056 = vpack.c.b16 %v1992, %v1988
    %v2057 = vpack.c.b16 %v1993, %v1989
    %2122 = vmatprep.subr.bf16.mxu0 %v1995
    %2123 = vmatpush1.bf16.msra.mxu0 %v1994
    %2124 = vmatprep.subr.bf16.mxu0 %v1999
    %2125 = vmatpush1.bf16.msra.mxu0 %v1998
    %2126 = vmatprep.subr.bf16.mxu0 %v2003
    %2127 = vmatpush1.bf16.msra.mxu0 %v2002
    %2128 = vmatprep.subr.bf16.mxu0 %v2007
    %2129 = vmatpush1.bf16.msra.mxu0 %v2006
    %2130 = vmatprep.subr.bf16.mxu0 %v2011
    %2131 = vmatpush1.bf16.msra.mxu0 %v2010
    %2132 = vmatprep.subr.bf16.mxu0 %v2015
    %2133 = vmatpush1.bf16.msra.mxu0 %v2014
    %2134 = vmatprep.subr.bf16.mxu0 %v2019
    %2135 = vmatpush1.bf16.msra.mxu0 %v2018
    %2136 = vmatprep.subr.bf16.mxu0 %v2023
    %2137 = vmatpush1.bf16.msra.mxu0 %v2022
    %2138 = vmatprep.subr.bf16.mxu0 %v2027
    %2139 = vmatpush1.bf16.msra.mxu0 %v2026
    %2140 = vmatprep.subr.bf16.mxu0 %v2031
    %2141 = vmatpush1.bf16.msra.mxu0 %v2030
    %2142 = vmatprep.subr.bf16.mxu0 %v2035
    %2143 = vmatpush1.bf16.msra.mxu0 %v2034
    %2144 = vmatprep.subr.bf16.mxu0 %v2039
    %2145 = vmatpush1.bf16.msra.mxu0 %v2038
    %2146 = vmatprep.subr.bf16.mxu0 %v2043
    %2147 = vmatpush1.bf16.msra.mxu0 %v2042
    %2148 = vmatprep.subr.bf16.mxu0 %v2047
    %2149 = vmatpush1.bf16.msra.mxu0 %v2046
    %2150 = vmatprep.subr.bf16.mxu0 %v2051
    %2151 = vmatpush1.bf16.msra.mxu0 %v2050
    %2152 = vmatprep.subr.bf16.mxu0 %v2055
    %2153 = vmatpush1.bf16.msra.mxu0 %v2054
    %2154 = vmatprep.mubr.bf16.mxu0 %v1715
    %2155 = vmatmul.mubr.bf16.gmra.mrb[0].mxu0 %v1714
    %v2156 = vpop.f32.mrb[0].mxu0
    %v2157 = vadd.f32 %v1785, %v2156
    %v2158 = vpop.f32.mrb[0].mxu0
    %v2159 = vadd.f32 %v1789, %v2158
    %v2160 = vpop.f32.mrb[0].mxu0
    %v2161 = vadd.f32 %v1785, %v2160
    %v2162 = vpop.f32.mrb[0].mxu0
    %v2163 = vadd.f32 %v1789, %v2162
    %2164 = vdwg.mxu0
    %2165 = vmatprep.subr.bf16.mxu0 %v1997
    %2166 = vmatpush1.bf16.msra.mxu0 %v1996
    %2167 = vmatprep.subr.bf16.mxu0 %v2001
    %2168 = vmatpush1.bf16.msra.mxu0 %v2000
    %2169 = vmatprep.subr.bf16.mxu0 %v2005
    %2170 = vmatpush1.bf16.msra.mxu0 %v2004
    %2171 = vmatprep.subr.bf16.mxu0 %v2009
    %2172 = vmatpush1.bf16.msra.mxu0 %v2008
    %2173 = vmatprep.subr.bf16.mxu0 %v2013
    %2174 = vmatpush1.bf16.msra.mxu0 %v2012
    %2175 = vmatprep.subr.bf16.mxu0 %v2017
    %2176 = vmatpush1.bf16.msra.mxu0 %v2016
    %2177 = vmatprep.subr.bf16.mxu0 %v2021
    %2178 = vmatpush1.bf16.msra.mxu0 %v2020
    %2179 = vmatprep.subr.bf16.mxu0 %v2025
    %2180 = vmatpush1.bf16.msra.mxu0 %v2024
    %2181 = vmatprep.subr.bf16.mxu0 %v2029
    %2182 = vmatpush1.bf16.msra.mxu0 %v2028
    %2183 = vmatprep.subr.bf16.mxu0 %v2033
    %2184 = vmatpush1.bf16.msra.mxu0 %v2032
    %2185 = vmatprep.subr.bf16.mxu0 %v2037
    %2186 = vmatpush1.bf16.msra.mxu0 %v2036
    %2187 = vmatprep.subr.bf16.mxu0 %v2041
    %2188 = vmatpush1.bf16.msra.mxu0 %v2040
    %2189 = vmatprep.subr.bf16.mxu0 %v2045
    %2190 = vmatpush1.bf16.msra.mxu0 %v2044
    %2191 = vmatprep.subr.bf16.mxu0 %v2049
    %2192 = vmatpush1.bf16.msra.mxu0 %v2048
    %2193 = vmatprep.subr.bf16.mxu0 %v2053
    %2194 = vmatpush1.bf16.msra.mxu0 %v2052
    %2195 = vmatprep.subr.bf16.mxu0 %v2057
    %2196 = vmatpush1.bf16.msra.mxu0 %v2056
    %2197 = vmatprep.mubr.bf16.mxu0 %v1715
    %2198 = vmatmul.mubr.bf16.gmra.mrb[0].mxu0 %v1714
    %v2199 = vpop.f32.mrb[0].mxu0
    %v2200 = vadd.f32 %v1793, %v2199
    %v2201 = vpop.f32.mrb[0].mxu0
    %v2202 = vadd.f32 %v1797, %v2201
    %v2203 = vpop.f32.mrb[0].mxu0
    %v2204 = vadd.f32 %v1793, %v2203
    %v2205 = vpop.f32.mrb[0].mxu0
    %v2206 = vadd.f32 %v1797, %v2205
    %2207 = vdwg.mxu0
    %v2208 = vadd.f32 %v88, %v2157
    %v2209 = vadd.f32 %v89, %v2159
    %v2210 = vadd.f32 %v90, %v2161
    %v2211 = vadd.f32 %v91, %v2163
    %v2212 = vmul.f32 %v2208, 0.70710677
    %v2213 = vmul.f32 %v2209, 0.70710677
    %v2214 = vmul.f32 %v2210, 0.70710677
    %v2215 = vmul.f32 %v2211, 0.70710677
    %2216 = vst [vmem:[%s13] sm:$0xff] %v2212
    %2217 = vst [vmem:[%s13 + $0x8] sm:$0xff] %v2213
    %2218 = vst [vmem:[%s13 + $0x10] sm:$0xff] %v2214
    %2219 = vst [vmem:[%s13 + $0x18] sm:$0xff] %v2215
    %v2220 = vld [vmem:[%s4] sm:$0xff]
    %v2221 = vld [vmem:[%s4 + $0x8] sm:$0xff]
    %v2222 = vld [vmem:[%s4 + $0x10] sm:$0xff]
    %v2223 = vld [vmem:[%s4 + $0x18] sm:$0xff]
    %v2224 = vadd.f32 %v2220, %v2200
    %v2225 = vadd.f32 %v2221, %v2202
    %v2226 = vadd.f32 %v2222, %v2204
    %v2227 = vadd.f32 %v2223, %v2206
    %2228 = vst [vmem:[%s14] sm:$0xff] %v2224
    %2229 = vst [vmem:[%s14 + $0x8] sm:$0xff] %v2225
    %2230 = vst [vmem:[%s14 + $0x10] sm:$0xff] %v2226
    %2231 = vst [vmem:[%s14 + $0x18] sm:$0xff] %v2227
    // Predicated region
    $region66: #{block_forward.11} parent=1 // pred_check
      _
    $region67: #{block_forward.11} parent=1 // pred_check_branch
      %2233 = sbr.rel (0) target = $region69
    $region68: #{block_forward.11} parent=1 // pred_region
      _
    $region69: #{block_forward.11} parent=1 // pred_fallthru
      _
    // Predicated region
    $region70: #{block_forward.11} parent=1 // pred_check
      _
    $region71: #{block_forward.11} parent=1 // pred_check_branch
      %2235 = sbr.rel (0) target = $region73
    $region72: #{block_forward.11} parent=1 // pred_region
      _
    $region73: #{block_forward.11} parent=1 // pred_fallthru
      _
    // Predicated region
    $region74: #{block_forward.11} parent=1 // pred_check
      _
    $region75: #{block_forward.11} parent=1 // pred_check_branch
      %2237 = sbr.rel (0) target = $region77
    $region76: #{block_forward.11} parent=1 // pred_region
      _
    $region77: #{block_forward.11} parent=1 // pred_fallthru
      _
    // Predicated region
    $region78: #{block_forward.11} parent=1 // pred_check
      _
    $region79: #{block_forward.11} parent=1 // pred_check_branch
      %2239 = sbr.rel (0) target = $region81
    $region80: #{block_forward.11} parent=1 // pred_region
      _
    $region81: #{block_forward.11} parent=1 // pred_fallthru
      _
    %2240 = vsyncpa [#allocation3], 1
    %2241 = vsyncpa [#allocation5], 1

// kernel: block_forward.12
$region0: #{block_forward.12}
  #allocation0 [shape = 'u32[]', space=smem, size = 0x4, offset = 0x4, fixed_abs, tag = 'smem constant byte address 0x4 - core index']
  #allocation1 [shape = 'u32[144,128]{1,0:T(1,128)}', space=vmem, size = 0x12000, scoped, tag = 'internal scratch']
  %s0 = inlined_call_operand.vmem [shape: f32[16,256], index: 0, kind: input, shape index: {}, may-alias: {0,13}]
  %s1 = inlined_call_operand.vmem [shape: f32[16,256], index: 1, kind: input, shape index: {}]
  %s2 = inlined_call_operand.vmem [shape: f32[16,256], index: 2, kind: input, shape index: {}]
  %s3 = inlined_call_operand.vmem [shape: f32[16,8], index: 3, kind: input, shape index: {}]
  %s4 = inlined_call_operand.vmem [shape: f32[16,256], index: 4, kind: input, shape index: {}, may-alias: {4,14}]
  %s5 = inlined_call_operand.vmem [shape: bf16[256,512], index: 5, kind: input, shape index: {}]
  %s6 = inlined_call_operand.vmem [shape: bf16[256,512], index: 6, kind: input, shape index: {}]
  %s7 = inlined_call_operand.vmem [shape: bf16[256,512], index: 7, kind: input, shape index: {}]
  %s8 = inlined_call_operand.vmem [shape: f32[1,512], index: 8, kind: input, shape index: {}]
  %s9 = inlined_call_operand.vmem [shape: bf16[8,512], index: 9, kind: input, shape index: {}]
  %s10 = inlined_call_operand.vmem [shape: f32[1,512], index: 10, kind: input, shape index: {}]
  %s11 = inlined_call_operand.vmem [shape: bf16[256,512], index: 11, kind: input, shape index: {}]
  %s12 = inlined_call_operand.vmem [shape: f32[1,512], index: 12, kind: input, shape index: {}]
  %s13 = inlined_call_operand.vmem [shape: f32[16,256], index: 13, kind: output, shape index: {0}, may-alias: {0,13}]
  %s14 = inlined_call_operand.vmem [shape: f32[16,256], index: 14, kind: output, shape index: {1}, may-alias: {4,14}]
  %15 = xla_tuple %s13, %s14
  %s16 = sld [smem:[#allocation0]]
  $region70: #{block_forward.12} parent=0
    _
  %s18 = ssub.s32 1, %s16
  %s19 = scalar_select 0, %s18, %s16
  // Predicated region
  $region2: #{block_forward.12} parent=0 // pred_check
    _
  $region3: #{block_forward.12} parent=0 // pred_check_branch
    %21 = sbr.rel (0) target = $region5
  $region4: #{block_forward.12} parent=0 // pred_region
    _
  $region5: #{block_forward.12} parent=0 // pred_fallthru
    _
  // Predicated region
  $region6: #{block_forward.12} parent=0 // pred_check
    _
  $region7: #{block_forward.12} parent=0 // pred_check_branch
    %23 = sbr.rel (0) target = $region9
  $region8: #{block_forward.12} parent=0 // pred_region
    _
  $region9: #{block_forward.12} parent=0 // pred_fallthru
    _
  // Predicated region
  $region10: #{block_forward.12} parent=0 // pred_check
    _
  $region11: #{block_forward.12} parent=0 // pred_check_branch
    %25 = sbr.rel (0) target = $region13
  $region12: #{block_forward.12} parent=0 // pred_region
    _
  $region13: #{block_forward.12} parent=0 // pred_fallthru
    _
  // Predicated region
  $region14: #{block_forward.12} parent=0 // pred_check
    _
  $region15: #{block_forward.12} parent=0 // pred_check_branch
    %27 = sbr.rel (0) target = $region17
  $region16: #{block_forward.12} parent=0 // pred_region
    _
  $region17: #{block_forward.12} parent=0 // pred_fallthru
    _
  // Predicated region
  $region18: #{block_forward.12} parent=0 // pred_check
    _
  $region19: #{block_forward.12} parent=0 // pred_check_branch
    %29 = sbr.rel (0) target = $region21
  $region20: #{block_forward.12} parent=0 // pred_region
    _
  $region21: #{block_forward.12} parent=0 // pred_fallthru
    _
  // Predicated region
  $region22: #{block_forward.12} parent=0 // pred_check
    _
  $region23: #{block_forward.12} parent=0 // pred_check_branch
    %31 = sbr.rel (0) target = $region25
  $region24: #{block_forward.12} parent=0 // pred_region
    _
  $region25: #{block_forward.12} parent=0 // pred_fallthru
    _
  // Predicated region
  $region26: #{block_forward.12} parent=0 // pred_check
    _
  $region27: #{block_forward.12} parent=0 // pred_check_branch
    %33 = sbr.rel (0) target = $region29
  $region28: #{block_forward.12} parent=0 // pred_region
    _
  $region29: #{block_forward.12} parent=0 // pred_fallthru
    _
  // Predicated region
  $region30: #{block_forward.12} parent=0 // pred_check
    _
  $region31: #{block_forward.12} parent=0 // pred_check_branch
    %35 = sbr.rel (0) target = $region33
  $region32: #{block_forward.12} parent=0 // pred_region
    _
  $region33: #{block_forward.12} parent=0 // pred_fallthru
    _
  // Predicated region
  $region34: #{block_forward.12} parent=0 // pred_check
    _
  $region35: #{block_forward.12} parent=0 // pred_check_branch
    %37 = sbr.rel (0) target = $region37
  $region36: #{block_forward.12} parent=0 // pred_region
    _
  $region37: #{block_forward.12} parent=0 // pred_fallthru
    _
  // Predicated region
  $region38: #{block_forward.12} parent=0 // pred_check
    _
  $region39: #{block_forward.12} parent=0 // pred_check_branch
    %39 = sbr.rel (0) target = $region41
  $region40: #{block_forward.12} parent=0 // pred_region
    _
  $region41: #{block_forward.12} parent=0 // pred_fallthru
    _
  // Predicated region
  $region42: #{block_forward.12} parent=0 // pred_check
    _
  $region43: #{block_forward.12} parent=0 // pred_check_branch
    %41 = sbr.rel (0) target = $region45
  $region44: #{block_forward.12} parent=0 // pred_region
    _
  $region45: #{block_forward.12} parent=0 // pred_fallthru
    _
  // Predicated region
  $region46: #{block_forward.12} parent=0 // pred_check
    _
  $region47: #{block_forward.12} parent=0 // pred_check_branch
    %43 = sbr.rel (0) target = $region49
  $region48: #{block_forward.12} parent=0 // pred_region
    _
  $region49: #{block_forward.12} parent=0 // pred_fallthru
    _
  // Predicated region
  $region50: #{block_forward.12} parent=0 // pred_check
    _
  $region51: #{block_forward.12} parent=0 // pred_check_branch
    %45 = sbr.rel (0) target = $region53
  $region52: #{block_forward.12} parent=0 // pred_region
    _
  $region53: #{block_forward.12} parent=0 // pred_fallthru
    _
  %v47 = vld [vmem:[%s0] sm:$0xff]
  %v48 = vld [vmem:[%s0 + $0x8] sm:$0xff]
  %v49 = vld [vmem:[%s0 + $0x10] sm:$0xff]
  %v50 = vld [vmem:[%s0 + $0x18] sm:$0xff]
  %v51 = vpack.c.bf16 %v49, %v47
  %v52 = vpack.c.bf16 %v50, %v48
  %v53 = vld [vmem:[%s6] sm:$0xff]
  %v54 = vld [vmem:[%s6 + $0x8] sm:$0xff]
  %v55 = vld [vmem:[%s6 + $0x10] sm:$0xff]
  %v56 = vld [vmem:[%s6 + $0x18] sm:$0xff]
  %v57 = vld [vmem:[%s6 + $0x20] sm:$0xff]
  %v58 = vld [vmem:[%s6 + $0x28] sm:$0xff]
  %v59 = vld [vmem:[%s6 + $0x30] sm:$0xff]
  %v60 = vld [vmem:[%s6 + $0x38] sm:$0xff]
  %v61 = vld [vmem:[%s6 + $0x40] sm:$0xff]
  %v62 = vld [vmem:[%s6 + $0x48] sm:$0xff]
  %v63 = vld [vmem:[%s6 + $0x50] sm:$0xff]
  %v64 = vld [vmem:[%s6 + $0x58] sm:$0xff]
  %v65 = vld [vmem:[%s6 + $0x60] sm:$0xff]
  %v66 = vld [vmem:[%s6 + $0x68] sm:$0xff]
  %v67 = vld [vmem:[%s6 + $0x70] sm:$0xff]
  %v68 = vld [vmem:[%s6 + $0x78] sm:$0xff]
  %v69 = vld [vmem:[%s6 + $0x80] sm:$0xff]
  %v70 = vld [vmem:[%s6 + $0x88] sm:$0xff]
  %v71 = vld [vmem:[%s6 + $0x90] sm:$0xff]
  %v72 = vld [vmem:[%s6 + $0x98] sm:$0xff]
  %v73 = vld [vmem:[%s6 + $0xa0] sm:$0xff]
  %v74 = vld [vmem:[%s6 + $0xa8] sm:$0xff]
  %v75 = vld [vmem:[%s6 + $0xb0] sm:$0xff]
  %v76 = vld [vmem:[%s6 + $0xb8] sm:$0xff]
  %v77 = vld [vmem:[%s6 + $0xc0] sm:$0xff]
  %v78 = vld [vmem:[%s6 + $0xc8] sm:$0xff]
  %v79 = vld [vmem:[%s6 + $0xd0] sm:$0xff]
  %v80 = vld [vmem:[%s6 + $0xd8] sm:$0xff]
  %v81 = vld [vmem:[%s6 + $0xe0] sm:$0xff]
  %v82 = vld [vmem:[%s6 + $0xe8] sm:$0xff]
  %v83 = vld [vmem:[%s6 + $0xf0] sm:$0xff]
  %v84 = vld [vmem:[%s6 + $0xf8] sm:$0xff]
  %v85 = vld [vmem:[%s6 + $0x100] sm:$0xff]
  %v86 = vld [vmem:[%s6 + $0x108] sm:$0xff]
  %v87 = vld [vmem:[%s6 + $0x110] sm:$0xff]
  %v88 = vld [vmem:[%s6 + $0x118] sm:$0xff]
  %v89 = vld [vmem:[%s6 + $0x120] sm:$0xff]
  %v90 = vld [vmem:[%s6 + $0x128] sm:$0xff]
  %v91 = vld [vmem:[%s6 + $0x130] sm:$0xff]
  %v92 = vld [vmem:[%s6 + $0x138] sm:$0xff]
  %v93 = vld [vmem:[%s6 + $0x140] sm:$0xff]
  %v94 = vld [vmem:[%s6 + $0x148] sm:$0xff]
  %v95 = vld [vmem:[%s6 + $0x150] sm:$0xff]
  %v96 = vld [vmem:[%s6 + $0x158] sm:$0xff]
  %v97 = vld [vmem:[%s6 + $0x160] sm:$0xff]
  %v98 = vld [vmem:[%s6 + $0x168] sm:$0xff]
  %v99 = vld [vmem:[%s6 + $0x170] sm:$0xff]
  %v100 = vld [vmem:[%s6 + $0x178] sm:$0xff]
  %v101 = vld [vmem:[%s6 + $0x180] sm:$0xff]
  %v102 = vld [vmem:[%s6 + $0x188] sm:$0xff]
  %v103 = vld [vmem:[%s6 + $0x190] sm:$0xff]
  %v104 = vld [vmem:[%s6 + $0x198] sm:$0xff]
  %v105 = vld [vmem:[%s6 + $0x1a0] sm:$0xff]
  %v106 = vld [vmem:[%s6 + $0x1a8] sm:$0xff]
  %v107 = vld [vmem:[%s6 + $0x1b0] sm:$0xff]
  %v108 = vld [vmem:[%s6 + $0x1b8] sm:$0xff]
  %v109 = vld [vmem:[%s6 + $0x1c0] sm:$0xff]
  %v110 = vld [vmem:[%s6 + $0x1c8] sm:$0xff]
  %v111 = vld [vmem:[%s6 + $0x1d0] sm:$0xff]
  %v112 = vld [vmem:[%s6 + $0x1d8] sm:$0xff]
  %v113 = vld [vmem:[%s6 + $0x1e0] sm:$0xff]
  %v114 = vld [vmem:[%s6 + $0x1e8] sm:$0xff]
  %v115 = vld [vmem:[%s6 + $0x1f0] sm:$0xff]
  %v116 = vld [vmem:[%s6 + $0x1f8] sm:$0xff]
  %v117 = vld [vmem:[%s1] sm:$0xff]
  %v118 = vld [vmem:[%s1 + $0x8] sm:$0xff]
  %v119 = vld [vmem:[%s1 + $0x10] sm:$0xff]
  %v120 = vld [vmem:[%s1 + $0x18] sm:$0xff]
  %v121 = vpack.c.bf16 %v119, %v117
  %v122 = vpack.c.bf16 %v120, %v118
  %v123 = vld [vmem:[%s5] sm:$0xff]
  %v124 = vld [vmem:[%s5 + $0x8] sm:$0xff]
  %v125 = vld [vmem:[%s5 + $0x10] sm:$0xff]
  %v126 = vld [vmem:[%s5 + $0x18] sm:$0xff]
  %v127 = vld [vmem:[%s5 + $0x20] sm:$0xff]
  %v128 = vld [vmem:[%s5 + $0x28] sm:$0xff]
  %v129 = vld [vmem:[%s5 + $0x30] sm:$0xff]
  %v130 = vld [vmem:[%s5 + $0x38] sm:$0xff]
  %v131 = vld [vmem:[%s5 + $0x40] sm:$0xff]
  %v132 = vld [vmem:[%s5 + $0x48] sm:$0xff]
  %v133 = vld [vmem:[%s5 + $0x50] sm:$0xff]
  %v134 = vld [vmem:[%s5 + $0x58] sm:$0xff]
  %v135 = vld [vmem:[%s5 + $0x60] sm:$0xff]
  %v136 = vld [vmem:[%s5 + $0x68] sm:$0xff]
  %v137 = vld [vmem:[%s5 + $0x70] sm:$0xff]
  %v138 = vld [vmem:[%s5 + $0x78] sm:$0xff]
  %v139 = vld [vmem:[%s5 + $0x80] sm:$0xff]
  %v140 = vld [vmem:[%s5 + $0x88] sm:$0xff]
  %v141 = vld [vmem:[%s5 + $0x90] sm:$0xff]
  %v142 = vld [vmem:[%s5 + $0x98] sm:$0xff]
  %v143 = vld [vmem:[%s5 + $0xa0] sm:$0xff]
  %v144 = vld [vmem:[%s5 + $0xa8] sm:$0xff]
  %v145 = vld [vmem:[%s5 + $0xb0] sm:$0xff]
  %v146 = vld [vmem:[%s5 + $0xb8] sm:$0xff]
  %v147 = vld [vmem:[%s5 + $0xc0] sm:$0xff]
  %v148 = vld [vmem:[%s5 + $0xc8] sm:$0xff]
  %v149 = vld [vmem:[%s5 + $0xd0] sm:$0xff]
  %v150 = vld [vmem:[%s5 + $0xd8] sm:$0xff]
  %v151 = vld [vmem:[%s5 + $0xe0] sm:$0xff]
  %v152 = vld [vmem:[%s5 + $0xe8] sm:$0xff]
  %v153 = vld [vmem:[%s5 + $0xf0] sm:$0xff]
  %v154 = vld [vmem:[%s5 + $0xf8] sm:$0xff]
  %v155 = vld [vmem:[%s5 + $0x100] sm:$0xff]
  %v156 = vld [vmem:[%s5 + $0x108] sm:$0xff]
  %v157 = vld [vmem:[%s5 + $0x110] sm:$0xff]
  %v158 = vld [vmem:[%s5 + $0x118] sm:$0xff]
  %v159 = vld [vmem:[%s5 + $0x120] sm:$0xff]
  %v160 = vld [vmem:[%s5 + $0x128] sm:$0xff]
  %v161 = vld [vmem:[%s5 + $0x130] sm:$0xff]
  %v162 = vld [vmem:[%s5 + $0x138] sm:$0xff]
  %v163 = vld [vmem:[%s5 + $0x140] sm:$0xff]
  %v164 = vld [vmem:[%s5 + $0x148] sm:$0xff]
  %v165 = vld [vmem:[%s5 + $0x150] sm:$0xff]
  %v166 = vld [vmem:[%s5 + $0x158] sm:$0xff]
  %v167 = vld [vmem:[%s5 + $0x160] sm:$0xff]
  %v168 = vld [vmem:[%s5 + $0x168] sm:$0xff]
  %v169 = vld [vmem:[%s5 + $0x170] sm:$0xff]
  %v170 = vld [vmem:[%s5 + $0x178] sm:$0xff]
  %v171 = vld [vmem:[%s5 + $0x180] sm:$0xff]
  %v172 = vld [vmem:[%s5 + $0x188] sm:$0xff]
  %v173 = vld [vmem:[%s5 + $0x190] sm:$0xff]
  %v174 = vld [vmem:[%s5 + $0x198] sm:$0xff]
  %v175 = vld [vmem:[%s5 + $0x1a0] sm:$0xff]
  %v176 = vld [vmem:[%s5 + $0x1a8] sm:$0xff]
  %v177 = vld [vmem:[%s5 + $0x1b0] sm:$0xff]
  %v178 = vld [vmem:[%s5 + $0x1b8] sm:$0xff]
  %v179 = vld [vmem:[%s5 + $0x1c0] sm:$0xff]
  %v180 = vld [vmem:[%s5 + $0x1c8] sm:$0xff]
  %v181 = vld [vmem:[%s5 + $0x1d0] sm:$0xff]
  %v182 = vld [vmem:[%s5 + $0x1d8] sm:$0xff]
  %v183 = vld [vmem:[%s5 + $0x1e0] sm:$0xff]
  %v184 = vld [vmem:[%s5 + $0x1e8] sm:$0xff]
  %v185 = vld [vmem:[%s5 + $0x1f0] sm:$0xff]
  %v186 = vld [vmem:[%s5 + $0x1f8] sm:$0xff]
  %v251 = vunpack.c.l.b16 %v123
  %v252 = vunpack.c.h.b16 %v123
  %v253 = vunpack.c.l.b16 %v124
  %v254 = vunpack.c.h.b16 %v124
  %v255 = vunpack.c.l.b16 %v125
  %v256 = vunpack.c.h.b16 %v125
  %v257 = vunpack.c.l.b16 %v126
  %v258 = vunpack.c.h.b16 %v126
  %v259 = vunpack.c.l.b16 %v127
  %v260 = vunpack.c.h.b16 %v127
  %v261 = vunpack.c.l.b16 %v128
  %v262 = vunpack.c.h.b16 %v128
  %v263 = vunpack.c.l.b16 %v129
  %v264 = vunpack.c.h.b16 %v129
  %v265 = vunpack.c.l.b16 %v130
  %v266 = vunpack.c.h.b16 %v130
  %v267 = vunpack.c.l.b16 %v131
  %v268 = vunpack.c.h.b16 %v131
  %v269 = vunpack.c.l.b16 %v132
  %v270 = vunpack.c.h.b16 %v132
  %v271 = vunpack.c.l.b16 %v133
  %v272 = vunpack.c.h.b16 %v133
  %v273 = vunpack.c.l.b16 %v134
  %v274 = vunpack.c.h.b16 %v134
  %v275 = vunpack.c.l.b16 %v135
  %v276 = vunpack.c.h.b16 %v135
  %v277 = vunpack.c.l.b16 %v136
  %v278 = vunpack.c.h.b16 %v136
  %v279 = vunpack.c.l.b16 %v137
  %v280 = vunpack.c.h.b16 %v137
  %v281 = vunpack.c.l.b16 %v138
  %v282 = vunpack.c.h.b16 %v138
  %v283 = vunpack.c.l.b16 %v139
  %v284 = vunpack.c.h.b16 %v139
  %v285 = vunpack.c.l.b16 %v140
  %v286 = vunpack.c.h.b16 %v140
  %v287 = vunpack.c.l.b16 %v141
  %v288 = vunpack.c.h.b16 %v141
  %v289 = vunpack.c.l.b16 %v142
  %v290 = vunpack.c.h.b16 %v142
  %v291 = vunpack.c.l.b16 %v143
  %v292 = vunpack.c.h.b16 %v143
  %v293 = vunpack.c.l.b16 %v144
  %v294 = vunpack.c.h.b16 %v144
  %v295 = vunpack.c.l.b16 %v145
  %v296 = vunpack.c.h.b16 %v145
  %v297 = vunpack.c.l.b16 %v146
  %v298 = vunpack.c.h.b16 %v146
  %v299 = vunpack.c.l.b16 %v147
  %v300 = vunpack.c.h.b16 %v147
  %v301 = vunpack.c.l.b16 %v148
  %v302 = vunpack.c.h.b16 %v148
  %v303 = vunpack.c.l.b16 %v149
  %v304 = vunpack.c.h.b16 %v149
  %v305 = vunpack.c.l.b16 %v150
  %v306 = vunpack.c.h.b16 %v150
  %v307 = vunpack.c.l.b16 %v151
  %v308 = vunpack.c.h.b16 %v151
  %v309 = vunpack.c.l.b16 %v152
  %v310 = vunpack.c.h.b16 %v152
  %v311 = vunpack.c.l.b16 %v153
  %v312 = vunpack.c.h.b16 %v153
  %v313 = vunpack.c.l.b16 %v154
  %v314 = vunpack.c.h.b16 %v154
  %v315 = vunpack.c.l.b16 %v155
  %v316 = vunpack.c.h.b16 %v155
  %v317 = vunpack.c.l.b16 %v156
  %v318 = vunpack.c.h.b16 %v156
  %v319 = vunpack.c.l.b16 %v157
  %v320 = vunpack.c.h.b16 %v157
  %v321 = vunpack.c.l.b16 %v158
  %v322 = vunpack.c.h.b16 %v158
  %v323 = vunpack.c.l.b16 %v159
  %v324 = vunpack.c.h.b16 %v159
  %v325 = vunpack.c.l.b16 %v160
  %v326 = vunpack.c.h.b16 %v160
  %v327 = vunpack.c.l.b16 %v161
  %v328 = vunpack.c.h.b16 %v161
  %v329 = vunpack.c.l.b16 %v162
  %v330 = vunpack.c.h.b16 %v162
  %v331 = vunpack.c.l.b16 %v163
  %v332 = vunpack.c.h.b16 %v163
  %v333 = vunpack.c.l.b16 %v164
  %v334 = vunpack.c.h.b16 %v164
  %v335 = vunpack.c.l.b16 %v165
  %v336 = vunpack.c.h.b16 %v165
  %v337 = vunpack.c.l.b16 %v166
  %v338 = vunpack.c.h.b16 %v166
  %v339 = vunpack.c.l.b16 %v167
  %v340 = vunpack.c.h.b16 %v167
  %v341 = vunpack.c.l.b16 %v168
  %v342 = vunpack.c.h.b16 %v168
  %v343 = vunpack.c.l.b16 %v169
  %v344 = vunpack.c.h.b16 %v169
  %v345 = vunpack.c.l.b16 %v170
  %v346 = vunpack.c.h.b16 %v170
  %v347 = vunpack.c.l.b16 %v171
  %v348 = vunpack.c.h.b16 %v171
  %v349 = vunpack.c.l.b16 %v172
  %v350 = vunpack.c.h.b16 %v172
  %v351 = vunpack.c.l.b16 %v173
  %v352 = vunpack.c.h.b16 %v173
  %v353 = vunpack.c.l.b16 %v174
  %v354 = vunpack.c.h.b16 %v174
  %v355 = vunpack.c.l.b16 %v175
  %v356 = vunpack.c.h.b16 %v175
  %v357 = vunpack.c.l.b16 %v176
  %v358 = vunpack.c.h.b16 %v176
  %v359 = vunpack.c.l.b16 %v177
  %v360 = vunpack.c.h.b16 %v177
  %v361 = vunpack.c.l.b16 %v178
  %v362 = vunpack.c.h.b16 %v178
  %v363 = vunpack.c.l.b16 %v179
  %v364 = vunpack.c.h.b16 %v179
  %v365 = vunpack.c.l.b16 %v180
  %v366 = vunpack.c.h.b16 %v180
  %v367 = vunpack.c.l.b16 %v181
  %v368 = vunpack.c.h.b16 %v181
  %v369 = vunpack.c.l.b16 %v182
  %v370 = vunpack.c.h.b16 %v182
  %v371 = vunpack.c.l.b16 %v183
  %v372 = vunpack.c.h.b16 %v183
  %v373 = vunpack.c.l.b16 %v184
  %v374 = vunpack.c.h.b16 %v184
  %v375 = vunpack.c.l.b16 %v185
  %v376 = vunpack.c.h.b16 %v185
  %v377 = vunpack.c.l.b16 %v186
  %v378 = vunpack.c.h.b16 %v186
  %v379 = vpack.c.b16 %v255, %v251
  %v380 = vpack.c.b16 %v256, %v252
  %v381 = vpack.c.b16 %v257, %v253
  %v382 = vpack.c.b16 %v258, %v254
  %v383 = vpack.c.b16 %v263, %v259
  %v384 = vpack.c.b16 %v264, %v260
  %v385 = vpack.c.b16 %v265, %v261
  %v386 = vpack.c.b16 %v266, %v262
  %v387 = vpack.c.b16 %v271, %v267
  %v388 = vpack.c.b16 %v272, %v268
  %v389 = vpack.c.b16 %v273, %v269
  %v390 = vpack.c.b16 %v274, %v270
  %v391 = vpack.c.b16 %v279, %v275
  %v392 = vpack.c.b16 %v280, %v276
  %v393 = vpack.c.b16 %v281, %v277
  %v394 = vpack.c.b16 %v282, %v278
  %v395 = vpack.c.b16 %v287, %v283
  %v396 = vpack.c.b16 %v288, %v284
  %v397 = vpack.c.b16 %v289, %v285
  %v398 = vpack.c.b16 %v290, %v286
  %v399 = vpack.c.b16 %v295, %v291
  %v400 = vpack.c.b16 %v296, %v292
  %v401 = vpack.c.b16 %v297, %v293
  %v402 = vpack.c.b16 %v298, %v294
  %v403 = vpack.c.b16 %v303, %v299
  %v404 = vpack.c.b16 %v304, %v300
  %v405 = vpack.c.b16 %v305, %v301
  %v406 = vpack.c.b16 %v306, %v302
  %v407 = vpack.c.b16 %v311, %v307
  %v408 = vpack.c.b16 %v312, %v308
  %v409 = vpack.c.b16 %v313, %v309
  %v410 = vpack.c.b16 %v314, %v310
  %v411 = vpack.c.b16 %v319, %v315
  %v412 = vpack.c.b16 %v320, %v316
  %v413 = vpack.c.b16 %v321, %v317
  %v414 = vpack.c.b16 %v322, %v318
  %v415 = vpack.c.b16 %v327, %v323
  %v416 = vpack.c.b16 %v328, %v324
  %v417 = vpack.c.b16 %v329, %v325
  %v418 = vpack.c.b16 %v330, %v326
  %v419 = vpack.c.b16 %v335, %v331
  %v420 = vpack.c.b16 %v336, %v332
  %v421 = vpack.c.b16 %v337, %v333
  %v422 = vpack.c.b16 %v338, %v334
  %v423 = vpack.c.b16 %v343, %v339
  %v424 = vpack.c.b16 %v344, %v340
  %v425 = vpack.c.b16 %v345, %v341
  %v426 = vpack.c.b16 %v346, %v342
  %v427 = vpack.c.b16 %v351, %v347
  %v428 = vpack.c.b16 %v352, %v348
  %v429 = vpack.c.b16 %v353, %v349
  %v430 = vpack.c.b16 %v354, %v350
  %v431 = vpack.c.b16 %v359, %v355
  %v432 = vpack.c.b16 %v360, %v356
  %v433 = vpack.c.b16 %v361, %v357
  %v434 = vpack.c.b16 %v362, %v358
  %v435 = vpack.c.b16 %v367, %v363
  %v436 = vpack.c.b16 %v368, %v364
  %v437 = vpack.c.b16 %v369, %v365
  %v438 = vpack.c.b16 %v370, %v366
  %v439 = vpack.c.b16 %v375, %v371
  %v440 = vpack.c.b16 %v376, %v372
  %v441 = vpack.c.b16 %v377, %v373
  %v442 = vpack.c.b16 %v378, %v374
  %507 = vmatprep.subr.bf16.mxu0 %v380
  %508 = vmatpush1.bf16.msra.mxu0 %v379
  %509 = vmatprep.subr.bf16.mxu0 %v384
  %510 = vmatpush1.bf16.msra.mxu0 %v383
  %511 = vmatprep.subr.bf16.mxu0 %v388
  %512 = vmatpush1.bf16.msra.mxu0 %v387
  %513 = vmatprep.subr.bf16.mxu0 %v392
  %514 = vmatpush1.bf16.msra.mxu0 %v391
  %515 = vmatprep.subr.bf16.mxu0 %v396
  %516 = vmatpush1.bf16.msra.mxu0 %v395
  %517 = vmatprep.subr.bf16.mxu0 %v400
  %518 = vmatpush1.bf16.msra.mxu0 %v399
  %519 = vmatprep.subr.bf16.mxu0 %v404
  %520 = vmatpush1.bf16.msra.mxu0 %v403
  %521 = vmatprep.subr.bf16.mxu0 %v408
  %522 = vmatpush1.bf16.msra.mxu0 %v407
  %523 = vmatprep.subr.bf16.mxu0 %v412
  %524 = vmatpush1.bf16.msra.mxu0 %v411
  %525 = vmatprep.subr.bf16.mxu0 %v416
  %526 = vmatpush1.bf16.msra.mxu0 %v415
  %527 = vmatprep.subr.bf16.mxu0 %v420
  %528 = vmatpush1.bf16.msra.mxu0 %v419
  %529 = vmatprep.subr.bf16.mxu0 %v424
  %530 = vmatpush1.bf16.msra.mxu0 %v423
  %531 = vmatprep.subr.bf16.mxu0 %v428
  %532 = vmatpush1.bf16.msra.mxu0 %v427
  %533 = vmatprep.subr.bf16.mxu0 %v432
  %534 = vmatpush1.bf16.msra.mxu0 %v431
  %535 = vmatprep.subr.bf16.mxu0 %v436
  %536 = vmatpush1.bf16.msra.mxu0 %v435
  %537 = vmatprep.subr.bf16.mxu0 %v440
  %538 = vmatpush1.bf16.msra.mxu0 %v439
  %539 = vmatprep.mubr.bf16.mxu0 %v122
  %540 = vmatmul.mubr.bf16.gmra.mrb[0].mxu0 %v121
  %v541 = vpop.f32.mrb[0].mxu0
  %v542 = vadd.f32 0.0, %v541
  %v543 = vpop.f32.mrb[0].mxu0
  %v544 = vadd.f32 0.0, %v543
  %v545 = vpop.f32.mrb[0].mxu0
  %v546 = vadd.f32 0.0, %v545
  %v547 = vpop.f32.mrb[0].mxu0
  %v548 = vadd.f32 0.0, %v547
  %549 = vdwg.mxu0
  %550 = vmatprep.subr.bf16.mxu0 %v382
  %551 = vmatpush1.bf16.msra.mxu0 %v381
  %552 = vmatprep.subr.bf16.mxu0 %v386
  %553 = vmatpush1.bf16.msra.mxu0 %v385
  %554 = vmatprep.subr.bf16.mxu0 %v390
  %555 = vmatpush1.bf16.msra.mxu0 %v389
  %556 = vmatprep.subr.bf16.mxu0 %v394
  %557 = vmatpush1.bf16.msra.mxu0 %v393
  %558 = vmatprep.subr.bf16.mxu0 %v398
  %559 = vmatpush1.bf16.msra.mxu0 %v397
  %560 = vmatprep.subr.bf16.mxu0 %v402
  %561 = vmatpush1.bf16.msra.mxu0 %v401
  %562 = vmatprep.subr.bf16.mxu0 %v406
  %563 = vmatpush1.bf16.msra.mxu0 %v405
  %564 = vmatprep.subr.bf16.mxu0 %v410
  %565 = vmatpush1.bf16.msra.mxu0 %v409
  %566 = vmatprep.subr.bf16.mxu0 %v414
  %567 = vmatpush1.bf16.msra.mxu0 %v413
  %568 = vmatprep.subr.bf16.mxu0 %v418
  %569 = vmatpush1.bf16.msra.mxu0 %v417
  %570 = vmatprep.subr.bf16.mxu0 %v422
  %571 = vmatpush1.bf16.msra.mxu0 %v421
  %572 = vmatprep.subr.bf16.mxu0 %v426
  %573 = vmatpush1.bf16.msra.mxu0 %v425
  %574 = vmatprep.subr.bf16.mxu0 %v430
  %575 = vmatpush1.bf16.msra.mxu0 %v429
  %576 = vmatprep.subr.bf16.mxu0 %v434
  %577 = vmatpush1.bf16.msra.mxu0 %v433
  %578 = vmatprep.subr.bf16.mxu0 %v438
  %579 = vmatpush1.bf16.msra.mxu0 %v437
  %580 = vmatprep.subr.bf16.mxu0 %v442
  %581 = vmatpush1.bf16.msra.mxu0 %v441
  %582 = vmatprep.mubr.bf16.mxu0 %v122
  %583 = vmatmul.mubr.bf16.gmra.mrb[0].mxu0 %v121
  %v584 = vpop.f32.mrb[0].mxu0
  %v585 = vadd.f32 0.0, %v584
  %v586 = vpop.f32.mrb[0].mxu0
  %v587 = vadd.f32 0.0, %v586
  %v588 = vpop.f32.mrb[0].mxu0
  %v589 = vadd.f32 0.0, %v588
  %v590 = vpop.f32.mrb[0].mxu0
  %v591 = vadd.f32 0.0, %v590
  %592 = vdwg.mxu0
  %v657 = vunpack.c.l.b16 %v53
  %v658 = vunpack.c.h.b16 %v53
  %v659 = vunpack.c.l.b16 %v54
  %v660 = vunpack.c.h.b16 %v54
  %v661 = vunpack.c.l.b16 %v55
  %v662 = vunpack.c.h.b16 %v55
  %v663 = vunpack.c.l.b16 %v56
  %v664 = vunpack.c.h.b16 %v56
  %v665 = vunpack.c.l.b16 %v57
  %v666 = vunpack.c.h.b16 %v57
  %v667 = vunpack.c.l.b16 %v58
  %v668 = vunpack.c.h.b16 %v58
  %v669 = vunpack.c.l.b16 %v59
  %v670 = vunpack.c.h.b16 %v59
  %v671 = vunpack.c.l.b16 %v60
  %v672 = vunpack.c.h.b16 %v60
  %v673 = vunpack.c.l.b16 %v61
  %v674 = vunpack.c.h.b16 %v61
  %v675 = vunpack.c.l.b16 %v62
  %v676 = vunpack.c.h.b16 %v62
  %v677 = vunpack.c.l.b16 %v63
  %v678 = vunpack.c.h.b16 %v63
  %v679 = vunpack.c.l.b16 %v64
  %v680 = vunpack.c.h.b16 %v64
  %v681 = vunpack.c.l.b16 %v65
  %v682 = vunpack.c.h.b16 %v65
  %v683 = vunpack.c.l.b16 %v66
  %v684 = vunpack.c.h.b16 %v66
  %v685 = vunpack.c.l.b16 %v67
  %v686 = vunpack.c.h.b16 %v67
  %v687 = vunpack.c.l.b16 %v68
  %v688 = vunpack.c.h.b16 %v68
  %v689 = vunpack.c.l.b16 %v69
  %v690 = vunpack.c.h.b16 %v69
  %v691 = vunpack.c.l.b16 %v70
  %v692 = vunpack.c.h.b16 %v70
  %v693 = vunpack.c.l.b16 %v71
  %v694 = vunpack.c.h.b16 %v71
  %v695 = vunpack.c.l.b16 %v72
  %v696 = vunpack.c.h.b16 %v72
  %v697 = vunpack.c.l.b16 %v73
  %v698 = vunpack.c.h.b16 %v73
  %v699 = vunpack.c.l.b16 %v74
  %v700 = vunpack.c.h.b16 %v74
  %v701 = vunpack.c.l.b16 %v75
  %v702 = vunpack.c.h.b16 %v75
  %v703 = vunpack.c.l.b16 %v76
  %v704 = vunpack.c.h.b16 %v76
  %v705 = vunpack.c.l.b16 %v77
  %v706 = vunpack.c.h.b16 %v77
  %v707 = vunpack.c.l.b16 %v78
  %v708 = vunpack.c.h.b16 %v78
  %v709 = vunpack.c.l.b16 %v79
  %v710 = vunpack.c.h.b16 %v79
  %v711 = vunpack.c.l.b16 %v80
  %v712 = vunpack.c.h.b16 %v80
  %v713 = vunpack.c.l.b16 %v81
  %v714 = vunpack.c.h.b16 %v81
  %v715 = vunpack.c.l.b16 %v82
  %v716 = vunpack.c.h.b16 %v82
  %v717 = vunpack.c.l.b16 %v83
  %v718 = vunpack.c.h.b16 %v83
  %v719 = vunpack.c.l.b16 %v84
  %v720 = vunpack.c.h.b16 %v84
  %v721 = vunpack.c.l.b16 %v85
  %v722 = vunpack.c.h.b16 %v85
  %v723 = vunpack.c.l.b16 %v86
  %v724 = vunpack.c.h.b16 %v86
  %v725 = vunpack.c.l.b16 %v87
  %v726 = vunpack.c.h.b16 %v87
  %v727 = vunpack.c.l.b16 %v88
  %v728 = vunpack.c.h.b16 %v88
  %v729 = vunpack.c.l.b16 %v89
  %v730 = vunpack.c.h.b16 %v89
  %v731 = vunpack.c.l.b16 %v90
  %v732 = vunpack.c.h.b16 %v90
  %v733 = vunpack.c.l.b16 %v91
  %v734 = vunpack.c.h.b16 %v91
  %v735 = vunpack.c.l.b16 %v92
  %v736 = vunpack.c.h.b16 %v92
  %v737 = vunpack.c.l.b16 %v93
  %v738 = vunpack.c.h.b16 %v93
  %v739 = vunpack.c.l.b16 %v94
  %v740 = vunpack.c.h.b16 %v94
  %v741 = vunpack.c.l.b16 %v95
  %v742 = vunpack.c.h.b16 %v95
  %v743 = vunpack.c.l.b16 %v96
  %v744 = vunpack.c.h.b16 %v96
  %v745 = vunpack.c.l.b16 %v97
  %v746 = vunpack.c.h.b16 %v97
  %v747 = vunpack.c.l.b16 %v98
  %v748 = vunpack.c.h.b16 %v98
  %v749 = vunpack.c.l.b16 %v99
  %v750 = vunpack.c.h.b16 %v99
  %v751 = vunpack.c.l.b16 %v100
  %v752 = vunpack.c.h.b16 %v100
  %v753 = vunpack.c.l.b16 %v101
  %v754 = vunpack.c.h.b16 %v101
  %v755 = vunpack.c.l.b16 %v102
  %v756 = vunpack.c.h.b16 %v102
  %v757 = vunpack.c.l.b16 %v103
  %v758 = vunpack.c.h.b16 %v103
  %v759 = vunpack.c.l.b16 %v104
  %v760 = vunpack.c.h.b16 %v104
  %v761 = vunpack.c.l.b16 %v105
  %v762 = vunpack.c.h.b16 %v105
  %v763 = vunpack.c.l.b16 %v106
  %v764 = vunpack.c.h.b16 %v106
  %v765 = vunpack.c.l.b16 %v107
  %v766 = vunpack.c.h.b16 %v107
  %v767 = vunpack.c.l.b16 %v108
  %v768 = vunpack.c.h.b16 %v108
  %v769 = vunpack.c.l.b16 %v109
  %v770 = vunpack.c.h.b16 %v109
  %v771 = vunpack.c.l.b16 %v110
  %v772 = vunpack.c.h.b16 %v110
  %v773 = vunpack.c.l.b16 %v111
  %v774 = vunpack.c.h.b16 %v111
  %v775 = vunpack.c.l.b16 %v112
  %v776 = vunpack.c.h.b16 %v112
  %v777 = vunpack.c.l.b16 %v113
  %v778 = vunpack.c.h.b16 %v113
  %v779 = vunpack.c.l.b16 %v114
  %v780 = vunpack.c.h.b16 %v114
  %v781 = vunpack.c.l.b16 %v115
  %v782 = vunpack.c.h.b16 %v115
  %v783 = vunpack.c.l.b16 %v116
  %v784 = vunpack.c.h.b16 %v116
  %v785 = vpack.c.b16 %v661, %v657
  %v786 = vpack.c.b16 %v662, %v658
  %v787 = vpack.c.b16 %v663, %v659
  %v788 = vpack.c.b16 %v664, %v660
  %v789 = vpack.c.b16 %v669, %v665
  %v790 = vpack.c.b16 %v670, %v666
  %v791 = vpack.c.b16 %v671, %v667
  %v792 = vpack.c.b16 %v672, %v668
  %v793 = vpack.c.b16 %v677, %v673
  %v794 = vpack.c.b16 %v678, %v674
  %v795 = vpack.c.b16 %v679, %v675
  %v796 = vpack.c.b16 %v680, %v676
  %v797 = vpack.c.b16 %v685, %v681
  %v798 = vpack.c.b16 %v686, %v682
  %v799 = vpack.c.b16 %v687, %v683
  %v800 = vpack.c.b16 %v688, %v684
  %v801 = vpack.c.b16 %v693, %v689
  %v802 = vpack.c.b16 %v694, %v690
  %v803 = vpack.c.b16 %v695, %v691
  %v804 = vpack.c.b16 %v696, %v692
  %v805 = vpack.c.b16 %v701, %v697
  %v806 = vpack.c.b16 %v702, %v698
  %v807 = vpack.c.b16 %v703, %v699
  %v808 = vpack.c.b16 %v704, %v700
  %v809 = vpack.c.b16 %v709, %v705
  %v810 = vpack.c.b16 %v710, %v706
  %v811 = vpack.c.b16 %v711, %v707
  %v812 = vpack.c.b16 %v712, %v708
  %v813 = vpack.c.b16 %v717, %v713
  %v814 = vpack.c.b16 %v718, %v714
  %v815 = vpack.c.b16 %v719, %v715
  %v816 = vpack.c.b16 %v720, %v716
  %v817 = vpack.c.b16 %v725, %v721
  %v818 = vpack.c.b16 %v726, %v722
  %v819 = vpack.c.b16 %v727, %v723
  %v820 = vpack.c.b16 %v728, %v724
  %v821 = vpack.c.b16 %v733, %v729
  %v822 = vpack.c.b16 %v734, %v730
  %v823 = vpack.c.b16 %v735, %v731
  %v824 = vpack.c.b16 %v736, %v732
  %v825 = vpack.c.b16 %v741, %v737
  %v826 = vpack.c.b16 %v742, %v738
  %v827 = vpack.c.b16 %v743, %v739
  %v828 = vpack.c.b16 %v744, %v740
  %v829 = vpack.c.b16 %v749, %v745
  %v830 = vpack.c.b16 %v750, %v746
  %v831 = vpack.c.b16 %v751, %v747
  %v832 = vpack.c.b16 %v752, %v748
  %v833 = vpack.c.b16 %v757, %v753
  %v834 = vpack.c.b16 %v758, %v754
  %v835 = vpack.c.b16 %v759, %v755
  %v836 = vpack.c.b16 %v760, %v756
  %v837 = vpack.c.b16 %v765, %v761
  %v838 = vpack.c.b16 %v766, %v762
  %v839 = vpack.c.b16 %v767, %v763
  %v840 = vpack.c.b16 %v768, %v764
  %v841 = vpack.c.b16 %v773, %v769
  %v842 = vpack.c.b16 %v774, %v770
  %v843 = vpack.c.b16 %v775, %v771
  %v844 = vpack.c.b16 %v776, %v772
  %v845 = vpack.c.b16 %v781, %v777
  %v846 = vpack.c.b16 %v782, %v778
  %v847 = vpack.c.b16 %v783, %v779
  %v848 = vpack.c.b16 %v784, %v780
  %913 = vmatprep.subr.bf16.mxu0 %v786
  %914 = vmatpush1.bf16.msra.mxu0 %v785
  %915 = vmatprep.subr.bf16.mxu0 %v790
  %916 = vmatpush1.bf16.msra.mxu0 %v789
  %917 = vmatprep.subr.bf16.mxu0 %v794
  %918 = vmatpush1.bf16.msra.mxu0 %v793
  %919 = vmatprep.subr.bf16.mxu0 %v798
  %920 = vmatpush1.bf16.msra.mxu0 %v797
  %921 = vmatprep.subr.bf16.mxu0 %v802
  %922 = vmatpush1.bf16.msra.mxu0 %v801
  %923 = vmatprep.subr.bf16.mxu0 %v806
  %924 = vmatpush1.bf16.msra.mxu0 %v805
  %925 = vmatprep.subr.bf16.mxu0 %v810
  %926 = vmatpush1.bf16.msra.mxu0 %v809
  %927 = vmatprep.subr.bf16.mxu0 %v814
  %928 = vmatpush1.bf16.msra.mxu0 %v813
  %929 = vmatprep.subr.bf16.mxu0 %v818
  %930 = vmatpush1.bf16.msra.mxu0 %v817
  %931 = vmatprep.subr.bf16.mxu0 %v822
  %932 = vmatpush1.bf16.msra.mxu0 %v821
  %933 = vmatprep.subr.bf16.mxu0 %v826
  %934 = vmatpush1.bf16.msra.mxu0 %v825
  %935 = vmatprep.subr.bf16.mxu0 %v830
  %936 = vmatpush1.bf16.msra.mxu0 %v829
  %937 = vmatprep.subr.bf16.mxu0 %v834
  %938 = vmatpush1.bf16.msra.mxu0 %v833
  %939 = vmatprep.subr.bf16.mxu0 %v838
  %940 = vmatpush1.bf16.msra.mxu0 %v837
  %941 = vmatprep.subr.bf16.mxu0 %v842
  %942 = vmatpush1.bf16.msra.mxu0 %v841
  %943 = vmatprep.subr.bf16.mxu0 %v846
  %944 = vmatpush1.bf16.msra.mxu0 %v845
  %945 = vmatprep.mubr.bf16.mxu0 %v52
  %946 = vmatmul.mubr.bf16.gmra.mrb[0].mxu0 %v51
  %v947 = vpop.f32.mrb[0].mxu0
  %v948 = vadd.f32 %v542, %v947
  %v949 = vpop.f32.mrb[0].mxu0
  %v950 = vadd.f32 %v544, %v949
  %v951 = vpop.f32.mrb[0].mxu0
  %v952 = vadd.f32 %v546, %v951
  %v953 = vpop.f32.mrb[0].mxu0
  %v954 = vadd.f32 %v548, %v953
  %955 = vdwg.mxu0
  %956 = vmatprep.subr.bf16.mxu0 %v788
  %957 = vmatpush1.bf16.msra.mxu0 %v787
  %958 = vmatprep.subr.bf16.mxu0 %v792
  %959 = vmatpush1.bf16.msra.mxu0 %v791
  %960 = vmatprep.subr.bf16.mxu0 %v796
  %961 = vmatpush1.bf16.msra.mxu0 %v795
  %962 = vmatprep.subr.bf16.mxu0 %v800
  %963 = vmatpush1.bf16.msra.mxu0 %v799
  %964 = vmatprep.subr.bf16.mxu0 %v804
  %965 = vmatpush1.bf16.msra.mxu0 %v803
  %966 = vmatprep.subr.bf16.mxu0 %v808
  %967 = vmatpush1.bf16.msra.mxu0 %v807
  %968 = vmatprep.subr.bf16.mxu0 %v812
  %969 = vmatpush1.bf16.msra.mxu0 %v811
  %970 = vmatprep.subr.bf16.mxu0 %v816
  %971 = vmatpush1.bf16.msra.mxu0 %v815
  %972 = vmatprep.subr.bf16.mxu0 %v820
  %973 = vmatpush1.bf16.msra.mxu0 %v819
  %974 = vmatprep.subr.bf16.mxu0 %v824
  %975 = vmatpush1.bf16.msra.mxu0 %v823
  %976 = vmatprep.subr.bf16.mxu0 %v828
  %977 = vmatpush1.bf16.msra.mxu0 %v827
  %978 = vmatprep.subr.bf16.mxu0 %v832
  %979 = vmatpush1.bf16.msra.mxu0 %v831
  %980 = vmatprep.subr.bf16.mxu0 %v836
  %981 = vmatpush1.bf16.msra.mxu0 %v835
  %982 = vmatprep.subr.bf16.mxu0 %v840
  %983 = vmatpush1.bf16.msra.mxu0 %v839
  %984 = vmatprep.subr.bf16.mxu0 %v844
  %985 = vmatpush1.bf16.msra.mxu0 %v843
  %986 = vmatprep.subr.bf16.mxu0 %v848
  %987 = vmatpush1.bf16.msra.mxu0 %v847
  %988 = vmatprep.mubr.bf16.mxu0 %v52
  %989 = vmatmul.mubr.bf16.gmra.mrb[0].mxu0 %v51
  %v990 = vpop.f32.mrb[0].mxu0
  %v991 = vadd.f32 %v585, %v990
  %v992 = vpop.f32.mrb[0].mxu0
  %v993 = vadd.f32 %v587, %v992
  %v994 = vpop.f32.mrb[0].mxu0
  %v995 = vadd.f32 %v589, %v994
  %v996 = vpop.f32.mrb[0].mxu0
  %v997 = vadd.f32 %v591, %v996
  %998 = vdwg.mxu0
  %v999 = vld [vmem:[%s2] sm:$0xff]
  %v1000 = vld [vmem:[%s2 + $0x8] sm:$0xff]
  %v1001 = vld [vmem:[%s2 + $0x10] sm:$0xff]
  %v1002 = vld [vmem:[%s2 + $0x18] sm:$0xff]
  %v1003 = vpack.c.bf16 %v1001, %v999
  %v1004 = vpack.c.bf16 %v1002, %v1000
  %v1005 = vld [vmem:[%s7] sm:$0xff]
  %v1006 = vld [vmem:[%s7 + $0x8] sm:$0xff]
  %v1007 = vld [vmem:[%s7 + $0x10] sm:$0xff]
  %v1008 = vld [vmem:[%s7 + $0x18] sm:$0xff]
  %v1009 = vld [vmem:[%s7 + $0x20] sm:$0xff]
  %v1010 = vld [vmem:[%s7 + $0x28] sm:$0xff]
  %v1011 = vld [vmem:[%s7 + $0x30] sm:$0xff]
  %v1012 = vld [vmem:[%s7 + $0x38] sm:$0xff]
  %v1013 = vld [vmem:[%s7 + $0x40] sm:$0xff]
  %v1014 = vld [vmem:[%s7 + $0x48] sm:$0xff]
  %v1015 = vld [vmem:[%s7 + $0x50] sm:$0xff]
  %v1016 = vld [vmem:[%s7 + $0x58] sm:$0xff]
  %v1017 = vld [vmem:[%s7 + $0x60] sm:$0xff]
  %v1018 = vld [vmem:[%s7 + $0x68] sm:$0xff]
  %v1019 = vld [vmem:[%s7 + $0x70] sm:$0xff]
  %v1020 = vld [vmem:[%s7 + $0x78] sm:$0xff]
  %v1021 = vld [vmem:[%s7 + $0x80] sm:$0xff]
  %v1022 = vld [vmem:[%s7 + $0x88] sm:$0xff]
  %v1023 = vld [vmem:[%s7 + $0x90] sm:$0xff]
  %v1024 = vld [vmem:[%s7 + $0x98] sm:$0xff]
  %v1025 = vld [vmem:[%s7 + $0xa0] sm:$0xff]
  %v1026 = vld [vmem:[%s7 + $0xa8] sm:$0xff]
  %v1027 = vld [vmem:[%s7 + $0xb0] sm:$0xff]
  %v1028 = vld [vmem:[%s7 + $0xb8] sm:$0xff]
  %v1029 = vld [vmem:[%s7 + $0xc0] sm:$0xff]
  %v1030 = vld [vmem:[%s7 + $0xc8] sm:$0xff]
  %v1031 = vld [vmem:[%s7 + $0xd0] sm:$0xff]
  %v1032 = vld [vmem:[%s7 + $0xd8] sm:$0xff]
  %v1033 = vld [vmem:[%s7 + $0xe0] sm:$0xff]
  %v1034 = vld [vmem:[%s7 + $0xe8] sm:$0xff]
  %v1035 = vld [vmem:[%s7 + $0xf0] sm:$0xff]
  %v1036 = vld [vmem:[%s7 + $0xf8] sm:$0xff]
  %v1037 = vld [vmem:[%s7 + $0x100] sm:$0xff]
  %v1038 = vld [vmem:[%s7 + $0x108] sm:$0xff]
  %v1039 = vld [vmem:[%s7 + $0x110] sm:$0xff]
  %v1040 = vld [vmem:[%s7 + $0x118] sm:$0xff]
  %v1041 = vld [vmem:[%s7 + $0x120] sm:$0xff]
  %v1042 = vld [vmem:[%s7 + $0x128] sm:$0xff]
  %v1043 = vld [vmem:[%s7 + $0x130] sm:$0xff]
  %v1044 = vld [vmem:[%s7 + $0x138] sm:$0xff]
  %v1045 = vld [vmem:[%s7 + $0x140] sm:$0xff]
  %v1046 = vld [vmem:[%s7 + $0x148] sm:$0xff]
  %v1047 = vld [vmem:[%s7 + $0x150] sm:$0xff]
  %v1048 = vld [vmem:[%s7 + $0x158] sm:$0xff]
  %v1049 = vld [vmem:[%s7 + $0x160] sm:$0xff]
  %v1050 = vld [vmem:[%s7 + $0x168] sm:$0xff]
  %v1051 = vld [vmem:[%s7 + $0x170] sm:$0xff]
  %v1052 = vld [vmem:[%s7 + $0x178] sm:$0xff]
  %v1053 = vld [vmem:[%s7 + $0x180] sm:$0xff]
  %v1054 = vld [vmem:[%s7 + $0x188] sm:$0xff]
  %v1055 = vld [vmem:[%s7 + $0x190] sm:$0xff]
  %v1056 = vld [vmem:[%s7 + $0x198] sm:$0xff]
  %v1057 = vld [vmem:[%s7 + $0x1a0] sm:$0xff]
  %v1058 = vld [vmem:[%s7 + $0x1a8] sm:$0xff]
  %v1059 = vld [vmem:[%s7 + $0x1b0] sm:$0xff]
  %v1060 = vld [vmem:[%s7 + $0x1b8] sm:$0xff]
  %v1061 = vld [vmem:[%s7 + $0x1c0] sm:$0xff]
  %v1062 = vld [vmem:[%s7 + $0x1c8] sm:$0xff]
  %v1063 = vld [vmem:[%s7 + $0x1d0] sm:$0xff]
  %v1064 = vld [vmem:[%s7 + $0x1d8] sm:$0xff]
  %v1065 = vld [vmem:[%s7 + $0x1e0] sm:$0xff]
  %v1066 = vld [vmem:[%s7 + $0x1e8] sm:$0xff]
  %v1067 = vld [vmem:[%s7 + $0x1f0] sm:$0xff]
  %v1068 = vld [vmem:[%s7 + $0x1f8] sm:$0xff]
  %v1133 = vunpack.c.l.b16 %v1005
  %v1134 = vunpack.c.h.b16 %v1005
  %v1135 = vunpack.c.l.b16 %v1006
  %v1136 = vunpack.c.h.b16 %v1006
  %v1137 = vunpack.c.l.b16 %v1007
  %v1138 = vunpack.c.h.b16 %v1007
  %v1139 = vunpack.c.l.b16 %v1008
  %v1140 = vunpack.c.h.b16 %v1008
  %v1141 = vunpack.c.l.b16 %v1009
  %v1142 = vunpack.c.h.b16 %v1009
  %v1143 = vunpack.c.l.b16 %v1010
  %v1144 = vunpack.c.h.b16 %v1010
  %v1145 = vunpack.c.l.b16 %v1011
  %v1146 = vunpack.c.h.b16 %v1011
  %v1147 = vunpack.c.l.b16 %v1012
  %v1148 = vunpack.c.h.b16 %v1012
  %v1149 = vunpack.c.l.b16 %v1013
  %v1150 = vunpack.c.h.b16 %v1013
  %v1151 = vunpack.c.l.b16 %v1014
  %v1152 = vunpack.c.h.b16 %v1014
  %v1153 = vunpack.c.l.b16 %v1015
  %v1154 = vunpack.c.h.b16 %v1015
  %v1155 = vunpack.c.l.b16 %v1016
  %v1156 = vunpack.c.h.b16 %v1016
  %v1157 = vunpack.c.l.b16 %v1017
  %v1158 = vunpack.c.h.b16 %v1017
  %v1159 = vunpack.c.l.b16 %v1018
  %v1160 = vunpack.c.h.b16 %v1018
  %v1161 = vunpack.c.l.b16 %v1019
  %v1162 = vunpack.c.h.b16 %v1019
  %v1163 = vunpack.c.l.b16 %v1020
  %v1164 = vunpack.c.h.b16 %v1020
  %v1165 = vunpack.c.l.b16 %v1021
  %v1166 = vunpack.c.h.b16 %v1021
  %v1167 = vunpack.c.l.b16 %v1022
  %v1168 = vunpack.c.h.b16 %v1022
  %v1169 = vunpack.c.l.b16 %v1023
  %v1170 = vunpack.c.h.b16 %v1023
  %v1171 = vunpack.c.l.b16 %v1024
  %v1172 = vunpack.c.h.b16 %v1024
  %v1173 = vunpack.c.l.b16 %v1025
  %v1174 = vunpack.c.h.b16 %v1025
  %v1175 = vunpack.c.l.b16 %v1026
  %v1176 = vunpack.c.h.b16 %v1026
  %v1177 = vunpack.c.l.b16 %v1027
  %v1178 = vunpack.c.h.b16 %v1027
  %v1179 = vunpack.c.l.b16 %v1028
  %v1180 = vunpack.c.h.b16 %v1028
  %v1181 = vunpack.c.l.b16 %v1029
  %v1182 = vunpack.c.h.b16 %v1029
  %v1183 = vunpack.c.l.b16 %v1030
  %v1184 = vunpack.c.h.b16 %v1030
  %v1185 = vunpack.c.l.b16 %v1031
  %v1186 = vunpack.c.h.b16 %v1031
  %v1187 = vunpack.c.l.b16 %v1032
  %v1188 = vunpack.c.h.b16 %v1032
  %v1189 = vunpack.c.l.b16 %v1033
  %v1190 = vunpack.c.h.b16 %v1033
  %v1191 = vunpack.c.l.b16 %v1034
  %v1192 = vunpack.c.h.b16 %v1034
  %v1193 = vunpack.c.l.b16 %v1035
  %v1194 = vunpack.c.h.b16 %v1035
  %v1195 = vunpack.c.l.b16 %v1036
  %v1196 = vunpack.c.h.b16 %v1036
  %v1197 = vunpack.c.l.b16 %v1037
  %v1198 = vunpack.c.h.b16 %v1037
  %v1199 = vunpack.c.l.b16 %v1038
  %v1200 = vunpack.c.h.b16 %v1038
  %v1201 = vunpack.c.l.b16 %v1039
  %v1202 = vunpack.c.h.b16 %v1039
  %v1203 = vunpack.c.l.b16 %v1040
  %v1204 = vunpack.c.h.b16 %v1040
  %v1205 = vunpack.c.l.b16 %v1041
  %v1206 = vunpack.c.h.b16 %v1041
  %v1207 = vunpack.c.l.b16 %v1042
  %v1208 = vunpack.c.h.b16 %v1042
  %v1209 = vunpack.c.l.b16 %v1043
  %v1210 = vunpack.c.h.b16 %v1043
  %v1211 = vunpack.c.l.b16 %v1044
  %v1212 = vunpack.c.h.b16 %v1044
  %v1213 = vunpack.c.l.b16 %v1045
  %v1214 = vunpack.c.h.b16 %v1045
  %v1215 = vunpack.c.l.b16 %v1046
  %v1216 = vunpack.c.h.b16 %v1046
  %v1217 = vunpack.c.l.b16 %v1047
  %v1218 = vunpack.c.h.b16 %v1047
  %v1219 = vunpack.c.l.b16 %v1048
  %v1220 = vunpack.c.h.b16 %v1048
  %v1221 = vunpack.c.l.b16 %v1049
  %v1222 = vunpack.c.h.b16 %v1049
  %v1223 = vunpack.c.l.b16 %v1050
  %v1224 = vunpack.c.h.b16 %v1050
  %v1225 = vunpack.c.l.b16 %v1051
  %v1226 = vunpack.c.h.b16 %v1051
  %v1227 = vunpack.c.l.b16 %v1052
  %v1228 = vunpack.c.h.b16 %v1052
  %v1229 = vunpack.c.l.b16 %v1053
  %v1230 = vunpack.c.h.b16 %v1053
  %v1231 = vunpack.c.l.b16 %v1054
  %v1232 = vunpack.c.h.b16 %v1054
  %v1233 = vunpack.c.l.b16 %v1055
  %v1234 = vunpack.c.h.b16 %v1055
  %v1235 = vunpack.c.l.b16 %v1056
  %v1236 = vunpack.c.h.b16 %v1056
  %v1237 = vunpack.c.l.b16 %v1057
  %v1238 = vunpack.c.h.b16 %v1057
  %v1239 = vunpack.c.l.b16 %v1058
  %v1240 = vunpack.c.h.b16 %v1058
  %v1241 = vunpack.c.l.b16 %v1059
  %v1242 = vunpack.c.h.b16 %v1059
  %v1243 = vunpack.c.l.b16 %v1060
  %v1244 = vunpack.c.h.b16 %v1060
  %v1245 = vunpack.c.l.b16 %v1061
  %v1246 = vunpack.c.h.b16 %v1061
  %v1247 = vunpack.c.l.b16 %v1062
  %v1248 = vunpack.c.h.b16 %v1062
  %v1249 = vunpack.c.l.b16 %v1063
  %v1250 = vunpack.c.h.b16 %v1063
  %v1251 = vunpack.c.l.b16 %v1064
  %v1252 = vunpack.c.h.b16 %v1064
  %v1253 = vunpack.c.l.b16 %v1065
  %v1254 = vunpack.c.h.b16 %v1065
  %v1255 = vunpack.c.l.b16 %v1066
  %v1256 = vunpack.c.h.b16 %v1066
  %v1257 = vunpack.c.l.b16 %v1067
  %v1258 = vunpack.c.h.b16 %v1067
  %v1259 = vunpack.c.l.b16 %v1068
  %v1260 = vunpack.c.h.b16 %v1068
  %v1261 = vpack.c.b16 %v1137, %v1133
  %v1262 = vpack.c.b16 %v1138, %v1134
  %v1263 = vpack.c.b16 %v1139, %v1135
  %v1264 = vpack.c.b16 %v1140, %v1136
  %v1265 = vpack.c.b16 %v1145, %v1141
  %v1266 = vpack.c.b16 %v1146, %v1142
  %v1267 = vpack.c.b16 %v1147, %v1143
  %v1268 = vpack.c.b16 %v1148, %v1144
  %v1269 = vpack.c.b16 %v1153, %v1149
  %v1270 = vpack.c.b16 %v1154, %v1150
  %v1271 = vpack.c.b16 %v1155, %v1151
  %v1272 = vpack.c.b16 %v1156, %v1152
  %v1273 = vpack.c.b16 %v1161, %v1157
  %v1274 = vpack.c.b16 %v1162, %v1158
  %v1275 = vpack.c.b16 %v1163, %v1159
  %v1276 = vpack.c.b16 %v1164, %v1160
  %v1277 = vpack.c.b16 %v1169, %v1165
  %v1278 = vpack.c.b16 %v1170, %v1166
  %v1279 = vpack.c.b16 %v1171, %v1167
  %v1280 = vpack.c.b16 %v1172, %v1168
  %v1281 = vpack.c.b16 %v1177, %v1173
  %v1282 = vpack.c.b16 %v1178, %v1174
  %v1283 = vpack.c.b16 %v1179, %v1175
  %v1284 = vpack.c.b16 %v1180, %v1176
  %v1285 = vpack.c.b16 %v1185, %v1181
  %v1286 = vpack.c.b16 %v1186, %v1182
  %v1287 = vpack.c.b16 %v1187, %v1183
  %v1288 = vpack.c.b16 %v1188, %v1184
  %v1289 = vpack.c.b16 %v1193, %v1189
  %v1290 = vpack.c.b16 %v1194, %v1190
  %v1291 = vpack.c.b16 %v1195, %v1191
  %v1292 = vpack.c.b16 %v1196, %v1192
  %v1293 = vpack.c.b16 %v1201, %v1197
  %v1294 = vpack.c.b16 %v1202, %v1198
  %v1295 = vpack.c.b16 %v1203, %v1199
  %v1296 = vpack.c.b16 %v1204, %v1200
  %v1297 = vpack.c.b16 %v1209, %v1205
  %v1298 = vpack.c.b16 %v1210, %v1206
  %v1299 = vpack.c.b16 %v1211, %v1207
  %v1300 = vpack.c.b16 %v1212, %v1208
  %v1301 = vpack.c.b16 %v1217, %v1213
  %v1302 = vpack.c.b16 %v1218, %v1214
  %v1303 = vpack.c.b16 %v1219, %v1215
  %v1304 = vpack.c.b16 %v1220, %v1216
  %v1305 = vpack.c.b16 %v1225, %v1221
  %v1306 = vpack.c.b16 %v1226, %v1222
  %v1307 = vpack.c.b16 %v1227, %v1223
  %v1308 = vpack.c.b16 %v1228, %v1224
  %v1309 = vpack.c.b16 %v1233, %v1229
  %v1310 = vpack.c.b16 %v1234, %v1230
  %v1311 = vpack.c.b16 %v1235, %v1231
  %v1312 = vpack.c.b16 %v1236, %v1232
  %v1313 = vpack.c.b16 %v1241, %v1237
  %v1314 = vpack.c.b16 %v1242, %v1238
  %v1315 = vpack.c.b16 %v1243, %v1239
  %v1316 = vpack.c.b16 %v1244, %v1240
  %v1317 = vpack.c.b16 %v1249, %v1245
  %v1318 = vpack.c.b16 %v1250, %v1246
  %v1319 = vpack.c.b16 %v1251, %v1247
  %v1320 = vpack.c.b16 %v1252, %v1248
  %v1321 = vpack.c.b16 %v1257, %v1253
  %v1322 = vpack.c.b16 %v1258, %v1254
  %v1323 = vpack.c.b16 %v1259, %v1255
  %v1324 = vpack.c.b16 %v1260, %v1256
  %1389 = vmatprep.subr.bf16.mxu0 %v1262
  %1390 = vmatpush1.bf16.msra.mxu0 %v1261
  %1391 = vmatprep.subr.bf16.mxu0 %v1266
  %1392 = vmatpush1.bf16.msra.mxu0 %v1265
  %1393 = vmatprep.subr.bf16.mxu0 %v1270
  %1394 = vmatpush1.bf16.msra.mxu0 %v1269
  %1395 = vmatprep.subr.bf16.mxu0 %v1274
  %1396 = vmatpush1.bf16.msra.mxu0 %v1273
  %1397 = vmatprep.subr.bf16.mxu0 %v1278
  %1398 = vmatpush1.bf16.msra.mxu0 %v1277
  %1399 = vmatprep.subr.bf16.mxu0 %v1282
  %1400 = vmatpush1.bf16.msra.mxu0 %v1281
  %1401 = vmatprep.subr.bf16.mxu0 %v1286
  %1402 = vmatpush1.bf16.msra.mxu0 %v1285
  %1403 = vmatprep.subr.bf16.mxu0 %v1290
  %1404 = vmatpush1.bf16.msra.mxu0 %v1289
  %1405 = vmatprep.subr.bf16.mxu0 %v1294
  %1406 = vmatpush1.bf16.msra.mxu0 %v1293
  %1407 = vmatprep.subr.bf16.mxu0 %v1298
  %1408 = vmatpush1.bf16.msra.mxu0 %v1297
  %1409 = vmatprep.subr.bf16.mxu0 %v1302
  %1410 = vmatpush1.bf16.msra.mxu0 %v1301
  %1411 = vmatprep.subr.bf16.mxu0 %v1306
  %1412 = vmatpush1.bf16.msra.mxu0 %v1305
  %1413 = vmatprep.subr.bf16.mxu0 %v1310
  %1414 = vmatpush1.bf16.msra.mxu0 %v1309
  %1415 = vmatprep.subr.bf16.mxu0 %v1314
  %1416 = vmatpush1.bf16.msra.mxu0 %v1313
  %1417 = vmatprep.subr.bf16.mxu0 %v1318
  %1418 = vmatpush1.bf16.msra.mxu0 %v1317
  %1419 = vmatprep.subr.bf16.mxu0 %v1322
  %1420 = vmatpush1.bf16.msra.mxu0 %v1321
  %1421 = vmatprep.mubr.bf16.mxu0 %v1004
  %1422 = vmatmul.mubr.bf16.gmra.mrb[0].mxu0 %v1003
  %v1423 = vpop.f32.mrb[0].mxu0
  %v1424 = vadd.f32 0.0, %v1423
  %v1425 = vpop.f32.mrb[0].mxu0
  %v1426 = vadd.f32 0.0, %v1425
  %v1427 = vpop.f32.mrb[0].mxu0
  %v1428 = vadd.f32 0.0, %v1427
  %v1429 = vpop.f32.mrb[0].mxu0
  %v1430 = vadd.f32 0.0, %v1429
  %1431 = vdwg.mxu0
  %1432 = vmatprep.subr.bf16.mxu0 %v1264
  %1433 = vmatpush1.bf16.msra.mxu0 %v1263
  %1434 = vmatprep.subr.bf16.mxu0 %v1268
  %1435 = vmatpush1.bf16.msra.mxu0 %v1267
  %1436 = vmatprep.subr.bf16.mxu0 %v1272
  %1437 = vmatpush1.bf16.msra.mxu0 %v1271
  %1438 = vmatprep.subr.bf16.mxu0 %v1276
  %1439 = vmatpush1.bf16.msra.mxu0 %v1275
  %1440 = vmatprep.subr.bf16.mxu0 %v1280
  %1441 = vmatpush1.bf16.msra.mxu0 %v1279
  %1442 = vmatprep.subr.bf16.mxu0 %v1284
  %1443 = vmatpush1.bf16.msra.mxu0 %v1283
  %1444 = vmatprep.subr.bf16.mxu0 %v1288
  %1445 = vmatpush1.bf16.msra.mxu0 %v1287
  %1446 = vmatprep.subr.bf16.mxu0 %v1292
  %1447 = vmatpush1.bf16.msra.mxu0 %v1291
  %1448 = vmatprep.subr.bf16.mxu0 %v1296
  %1449 = vmatpush1.bf16.msra.mxu0 %v1295
  %1450 = vmatprep.subr.bf16.mxu0 %v1300
  %1451 = vmatpush1.bf16.msra.mxu0 %v1299
  %1452 = vmatprep.subr.bf16.mxu0 %v1304
  %1453 = vmatpush1.bf16.msra.mxu0 %v1303
  %1454 = vmatprep.subr.bf16.mxu0 %v1308
  %1455 = vmatpush1.bf16.msra.mxu0 %v1307
  %1456 = vmatprep.subr.bf16.mxu0 %v1312
  %1457 = vmatpush1.bf16.msra.mxu0 %v1311
  %1458 = vmatprep.subr.bf16.mxu0 %v1316
  %1459 = vmatpush1.bf16.msra.mxu0 %v1315
  %1460 = vmatprep.subr.bf16.mxu0 %v1320
  %1461 = vmatpush1.bf16.msra.mxu0 %v1319
  %1462 = vmatprep.subr.bf16.mxu0 %v1324
  %1463 = vmatpush1.bf16.msra.mxu0 %v1323
  %1464 = vmatprep.mubr.bf16.mxu0 %v1004
  %1465 = vmatmul.mubr.bf16.gmra.mrb[0].mxu0 %v1003
  %v1466 = vpop.f32.mrb[0].mxu0
  %v1467 = vadd.f32 0.0, %v1466
  %v1468 = vpop.f32.mrb[0].mxu0
  %v1469 = vadd.f32 0.0, %v1468
  %v1470 = vpop.f32.mrb[0].mxu0
  %v1471 = vadd.f32 0.0, %v1470
  %v1472 = vpop.f32.mrb[0].mxu0
  %v1473 = vadd.f32 0.0, %v1472
  %1474 = vdwg.mxu0
  %v1475 = vadd.f32 %v948, %v1424
  %v1476 = vadd.f32 %v950, %v1426
  %v1477 = vadd.f32 %v991, %v1467
  %v1478 = vadd.f32 %v993, %v1469
  %v1479 = vadd.f32 %v952, %v1428
  %v1480 = vadd.f32 %v954, %v1430
  %v1481 = vadd.f32 %v995, %v1471
  %v1482 = vadd.f32 %v997, %v1473
  %v1483 = vld [vmem:[%s3] sm:$0xff]
  %v1484 = vld [vmem:[%s3 + $0x8] sm:$0xff]
  %v1485 = vpack.c.bf16 %v1484, %v1483
  %v1486 = vld [vmem:[%s9] sm:$0xff]
  %v1487 = vld [vmem:[%s9 + $0x8] sm:$0xff]
  %v1490 = vunpack.c.l.b16 %v1486
  %v1491 = vunpack.c.h.b16 %v1486
  %v1492 = vunpack.c.l.b16 %v1487
  %v1493 = vunpack.c.h.b16 %v1487
  %v1494 = vpack.c.b16 %v1490, %v1490
  %v1495 = vpack.c.b16 %v1491, %v1491
  %v1496 = vpack.c.b16 %v1492, %v1492
  %v1497 = vpack.c.b16 %v1493, %v1493
  %vm1498 = vcmask 64512
  %v1500 = vsel %vm1498, %v1485, 0
  %vm1502 = vcmask 1043456
  %v1504 = vsel %vm1502, %v1494, 0
  %v1507 = vsel %vm1502, %v1495, 0
  %v1510 = vsel %vm1502, %v1496, 0
  %v1513 = vsel %vm1502, %v1497, 0
  %1515 = vmatprep.subr.bf16.mxu0 %v1507
  %1516 = vmatpush1.bf16.msra.mxu0 %v1504
  %1517 = vmatprep.subr.bf16.mxu0 0
  %1518 = vmatpush1.bf16.msra.mxu0 0
  %1519 = vmatprep.subr.bf16.mxu0 0
  %1520 = vmatpush1.bf16.msra.mxu0 0
  %1521 = vmatprep.subr.bf16.mxu0 0
  %1522 = vmatpush1.bf16.msra.mxu0 0
  %1523 = vmatprep.subr.bf16.mxu0 0
  %1524 = vmatpush1.bf16.msra.mxu0 0
  %1525 = vmatprep.subr.bf16.mxu0 0
  %1526 = vmatpush1.bf16.msra.mxu0 0
  %1527 = vmatprep.subr.bf16.mxu0 0
  %1528 = vmatpush1.bf16.msra.mxu0 0
  %1529 = vmatprep.subr.bf16.mxu0 0
  %1530 = vmatpush1.bf16.msra.mxu0 0
  %1531 = vmatprep.subr.bf16.mxu0 0
  %1532 = vmatpush1.bf16.msra.mxu0 0
  %1533 = vmatprep.subr.bf16.mxu0 0
  %1534 = vmatpush1.bf16.msra.mxu0 0
  %1535 = vmatprep.subr.bf16.mxu0 0
  %1536 = vmatpush1.bf16.msra.mxu0 0
  %1537 = vmatprep.subr.bf16.mxu0 0
  %1538 = vmatpush1.bf16.msra.mxu0 0
  %1539 = vmatprep.subr.bf16.mxu0 0
  %1540 = vmatpush1.bf16.msra.mxu0 0
  %1541 = vmatprep.subr.bf16.mxu0 0
  %1542 = vmatpush1.bf16.msra.mxu0 0
  %1543 = vmatprep.subr.bf16.mxu0 0
  %1544 = vmatpush1.bf16.msra.mxu0 0
  %1545 = vmatprep.subr.bf16.mxu0 0
  %1546 = vmatpush1.bf16.msra.mxu0 0
  %1547 = vmatprep.mubr.bf16.mxu0 0
  %1548 = vmatmul.mubr.bf16.gmra.mrb[0].mxu0 %v1500
  %v1549 = vpop.f32.mrb[0].mxu0
  %v1550 = vadd.f32 0.0, %v1549
  %v1551 = vpop.f32.mrb[0].mxu0
  %v1552 = vadd.f32 0.0, %v1551
  %v1553 = vpop.f32.mrb[0].mxu0
  %v1554 = vadd.f32 0.0, %v1553
  %v1555 = vpop.f32.mrb[0].mxu0
  %v1556 = vadd.f32 0.0, %v1555
  %1557 = vdwg.mxu0
  %1558 = vmatprep.subr.bf16.mxu0 %v1513
  %1559 = vmatpush1.bf16.msra.mxu0 %v1510
  %1560 = vmatprep.subr.bf16.mxu0 0
  %1561 = vmatpush1.bf16.msra.mxu0 0
  %1562 = vmatprep.subr.bf16.mxu0 0
  %1563 = vmatpush1.bf16.msra.mxu0 0
  %1564 = vmatprep.subr.bf16.mxu0 0
  %1565 = vmatpush1.bf16.msra.mxu0 0
  %1566 = vmatprep.subr.bf16.mxu0 0
  %1567 = vmatpush1.bf16.msra.mxu0 0
  %1568 = vmatprep.subr.bf16.mxu0 0
  %1569 = vmatpush1.bf16.msra.mxu0 0
  %1570 = vmatprep.subr.bf16.mxu0 0
  %1571 = vmatpush1.bf16.msra.mxu0 0
  %1572 = vmatprep.subr.bf16.mxu0 0
  %1573 = vmatpush1.bf16.msra.mxu0 0
  %1574 = vmatprep.subr.bf16.mxu0 0
  %1575 = vmatpush1.bf16.msra.mxu0 0
  %1576 = vmatprep.subr.bf16.mxu0 0
  %1577 = vmatpush1.bf16.msra.mxu0 0
  %1578 = vmatprep.subr.bf16.mxu0 0
  %1579 = vmatpush1.bf16.msra.mxu0 0
  %1580 = vmatprep.subr.bf16.mxu0 0
  %1581 = vmatpush1.bf16.msra.mxu0 0
  %1582 = vmatprep.subr.bf16.mxu0 0
  %1583 = vmatpush1.bf16.msra.mxu0 0
  %1584 = vmatprep.subr.bf16.mxu0 0
  %1585 = vmatpush1.bf16.msra.mxu0 0
  %1586 = vmatprep.subr.bf16.mxu0 0
  %1587 = vmatpush1.bf16.msra.mxu0 0
  %1588 = vmatprep.subr.bf16.mxu0 0
  %1589 = vmatpush1.bf16.msra.mxu0 0
  %1590 = vmatprep.mubr.bf16.mxu0 0
  %1591 = vmatmul.mubr.bf16.gmra.mrb[0].mxu0 %v1500
  %v1592 = vpop.f32.mrb[0].mxu0
  %v1593 = vadd.f32 0.0, %v1592
  %v1594 = vpop.f32.mrb[0].mxu0
  %v1595 = vadd.f32 0.0, %v1594
  %v1596 = vpop.f32.mrb[0].mxu0
  %v1597 = vadd.f32 0.0, %v1596
  %v1598 = vpop.f32.mrb[0].mxu0
  %v1599 = vadd.f32 0.0, %v1598
  %1600 = vdwg.mxu0
  %v1601 = vadd.f32 %v1475, %v1550
  %v1602 = vadd.f32 %v1476, %v1552
  %v1603 = vadd.f32 %v1477, %v1593
  %v1604 = vadd.f32 %v1478, %v1595
  %v1605 = vadd.f32 %v1479, %v1554
  %v1606 = vadd.f32 %v1480, %v1556
  %v1607 = vadd.f32 %v1481, %v1597
  %v1608 = vadd.f32 %v1482, %v1599
  %v1609 = vld [vmem:[%s8] sm:$0xf]
  %v1610 = vld [vmem:[%s10] sm:$0xf]
  %v1611 = vadd.f32 %v1609, %v1610
  %v1613 = vlaneseq
  %v1614 = vshrl.u32 %v1613, 7
  %v1615 = vsub.s32 0, %v1614
  %v1616 = vrot.slane %v1611, %v1615
  %v1617 = vlaneseq
  %v1618 = vshrl.u32 %v1617, 7
  %v1619 = vsub.s32 1, %v1618
  %v1620 = vrot.slane %v1611, %v1619
  %v1621 = vlaneseq
  %v1622 = vshrl.u32 %v1621, 7
  %v1623 = vsub.s32 2, %v1622
  %v1624 = vrot.slane %v1611, %v1623
  %v1625 = vlaneseq
  %v1626 = vshrl.u32 %v1625, 7
  %v1627 = vsub.s32 3, %v1626
  %v1628 = vrot.slane %v1611, %v1627
  %v1633 = vadd.f32 %v1601, %v1616
  %v1634 = vadd.f32 %v1602, %v1620
  %v1635 = vadd.f32 %v1603, %v1624
  %v1636 = vadd.f32 %v1604, %v1628
  %v1637 = vadd.f32 %v1605, %v1616
  %v1638 = vadd.f32 %v1606, %v1620
  %v1639 = vadd.f32 %v1607, %v1624
  %v1640 = vadd.f32 %v1608, %v1628
  %v1641 = vtanh.pop %v1633
  %v1642 = vtanh.pop %v1634
  %v1643 = vtanh.pop %v1637
  %v1644 = vtanh.pop %v1638
  %v1645 = vxor.u32 %v1635, 2147483648
  %v1646 = vxor.u32 %v1636, 2147483648
  %v1647 = vxor.u32 %v1639, 2147483648
  %v1648 = vxor.u32 %v1640, 2147483648
  %v1649 = vmul.f32 %v1645, 1.442695
  %v1650 = vpow.pop %v1649
  %v1651 = vmul.f32 %v1646, 1.442695
  %v1652 = vpow.pop %v1651
  %v1653 = vmul.f32 %v1647, 1.442695
  %v1654 = vpow.pop %v1653
  %v1655 = vmul.f32 %v1648, 1.442695
  %v1656 = vpow.pop %v1655
  %v1657 = vadd.f32 %v1650, 1.0
  %v1658 = vadd.f32 %v1652, 1.0
  %v1659 = vadd.f32 %v1654, 1.0
  %v1660 = vadd.f32 %v1656, 1.0
  %v1661 = vrcp.pop %v1657
  %v1662 = vmul.f32 1.0, %v1661
  %v1663 = vrcp.pop %v1658
  %v1664 = vmul.f32 1.0, %v1663
  %v1665 = vrcp.pop %v1659
  %v1666 = vmul.f32 1.0, %v1665
  %v1667 = vrcp.pop %v1660
  %v1668 = vmul.f32 1.0, %v1667
  %v1669 = vmul.f32 %v1641, %v1662
  %v1670 = vmul.f32 %v1642, %v1664
  %v1671 = vmul.f32 %v1643, %v1666
  %v1672 = vmul.f32 %v1644, %v1668
  %v1673 = vpack.c.bf16 %v1671, %v1669
  %v1674 = vpack.c.bf16 %v1672, %v1670
  %v1675 = vld [vmem:[%s11] sm:$0xff]
  %v1676 = vld [vmem:[%s11 + $0x8] sm:$0xff]
  %v1677 = vld [vmem:[%s11 + $0x10] sm:$0xff]
  %v1678 = vld [vmem:[%s11 + $0x18] sm:$0xff]
  %v1679 = vld [vmem:[%s11 + $0x20] sm:$0xff]
  %v1680 = vld [vmem:[%s11 + $0x28] sm:$0xff]
  %v1681 = vld [vmem:[%s11 + $0x30] sm:$0xff]
  %v1682 = vld [vmem:[%s11 + $0x38] sm:$0xff]
  %v1683 = vld [vmem:[%s11 + $0x40] sm:$0xff]
  %v1684 = vld [vmem:[%s11 + $0x48] sm:$0xff]
  %v1685 = vld [vmem:[%s11 + $0x50] sm:$0xff]
  %v1686 = vld [vmem:[%s11 + $0x58] sm:$0xff]
  %v1687 = vld [vmem:[%s11 + $0x60] sm:$0xff]
  %v1688 = vld [vmem:[%s11 + $0x68] sm:$0xff]
  %v1689 = vld [vmem:[%s11 + $0x70] sm:$0xff]
  %v1690 = vld [vmem:[%s11 + $0x78] sm:$0xff]
  %v1691 = vld [vmem:[%s11 + $0x80] sm:$0xff]
  %v1692 = vld [vmem:[%s11 + $0x88] sm:$0xff]
  %v1693 = vld [vmem:[%s11 + $0x90] sm:$0xff]
  %v1694 = vld [vmem:[%s11 + $0x98] sm:$0xff]
  %v1695 = vld [vmem:[%s11 + $0xa0] sm:$0xff]
  %v1696 = vld [vmem:[%s11 + $0xa8] sm:$0xff]
  %v1697 = vld [vmem:[%s11 + $0xb0] sm:$0xff]
  %v1698 = vld [vmem:[%s11 + $0xb8] sm:$0xff]
  %v1699 = vld [vmem:[%s11 + $0xc0] sm:$0xff]
  %v1700 = vld [vmem:[%s11 + $0xc8] sm:$0xff]
  %v1701 = vld [vmem:[%s11 + $0xd0] sm:$0xff]
  %v1702 = vld [vmem:[%s11 + $0xd8] sm:$0xff]
  %v1703 = vld [vmem:[%s11 + $0xe0] sm:$0xff]
  %v1704 = vld [vmem:[%s11 + $0xe8] sm:$0xff]
  %v1705 = vld [vmem:[%s11 + $0xf0] sm:$0xff]
  %v1706 = vld [vmem:[%s11 + $0xf8] sm:$0xff]
  %v1707 = vld [vmem:[%s11 + $0x100] sm:$0xff]
  %v1708 = vld [vmem:[%s11 + $0x108] sm:$0xff]
  %v1709 = vld [vmem:[%s11 + $0x110] sm:$0xff]
  %v1710 = vld [vmem:[%s11 + $0x118] sm:$0xff]
  %v1711 = vld [vmem:[%s11 + $0x120] sm:$0xff]
  %v1712 = vld [vmem:[%s11 + $0x128] sm:$0xff]
  %v1713 = vld [vmem:[%s11 + $0x130] sm:$0xff]
  %v1714 = vld [vmem:[%s11 + $0x138] sm:$0xff]
  %v1715 = vld [vmem:[%s11 + $0x140] sm:$0xff]
  %v1716 = vld [vmem:[%s11 + $0x148] sm:$0xff]
  %v1717 = vld [vmem:[%s11 + $0x150] sm:$0xff]
  %v1718 = vld [vmem:[%s11 + $0x158] sm:$0xff]
  %v1719 = vld [vmem:[%s11 + $0x160] sm:$0xff]
  %v1720 = vld [vmem:[%s11 + $0x168] sm:$0xff]
  %v1721 = vld [vmem:[%s11 + $0x170] sm:$0xff]
  %v1722 = vld [vmem:[%s11 + $0x178] sm:$0xff]
  %v1723 = vld [vmem:[%s11 + $0x180] sm:$0xff]
  %v1724 = vld [vmem:[%s11 + $0x188] sm:$0xff]
  %v1725 = vld [vmem:[%s11 + $0x190] sm:$0xff]
  %v1726 = vld [vmem:[%s11 + $0x198] sm:$0xff]
  %v1727 = vld [vmem:[%s11 + $0x1a0] sm:$0xff]
  %v1728 = vld [vmem:[%s11 + $0x1a8] sm:$0xff]
  %v1729 = vld [vmem:[%s11 + $0x1b0] sm:$0xff]
  %v1730 = vld [vmem:[%s11 + $0x1b8] sm:$0xff]
  %v1731 = vld [vmem:[%s11 + $0x1c0] sm:$0xff]
  %v1732 = vld [vmem:[%s11 + $0x1c8] sm:$0xff]
  %v1733 = vld [vmem:[%s11 + $0x1d0] sm:$0xff]
  %v1734 = vld [vmem:[%s11 + $0x1d8] sm:$0xff]
  %v1735 = vld [vmem:[%s11 + $0x1e0] sm:$0xff]
  %v1736 = vld [vmem:[%s11 + $0x1e8] sm:$0xff]
  %v1737 = vld [vmem:[%s11 + $0x1f0] sm:$0xff]
  %v1738 = vld [vmem:[%s11 + $0x1f8] sm:$0xff]
  %v1739 = vld [vmem:[%s12] sm:$0xf]
  %v1741 = vlaneseq
  %v1742 = vshrl.u32 %v1741, 7
  %v1743 = vsub.s32 0, %v1742
  %v1744 = vrot.slane %v1739, %v1743
  %v1745 = vlaneseq
  %v1746 = vshrl.u32 %v1745, 7
  %v1747 = vsub.s32 1, %v1746
  %v1748 = vrot.slane %v1739, %v1747
  %v1749 = vlaneseq
  %v1750 = vshrl.u32 %v1749, 7
  %v1751 = vsub.s32 2, %v1750
  %v1752 = vrot.slane %v1739, %v1751
  %v1753 = vlaneseq
  %v1754 = vshrl.u32 %v1753, 7
  %v1755 = vsub.s32 3, %v1754
  %v1756 = vrot.slane %v1739, %v1755
  %v1825 = vunpack.c.l.b16 %v1675
  %v1826 = vunpack.c.h.b16 %v1675
  %v1827 = vunpack.c.l.b16 %v1676
  %v1828 = vunpack.c.h.b16 %v1676
  %v1829 = vunpack.c.l.b16 %v1677
  %v1830 = vunpack.c.h.b16 %v1677
  %v1831 = vunpack.c.l.b16 %v1678
  %v1832 = vunpack.c.h.b16 %v1678
  %v1833 = vunpack.c.l.b16 %v1679
  %v1834 = vunpack.c.h.b16 %v1679
  %v1835 = vunpack.c.l.b16 %v1680
  %v1836 = vunpack.c.h.b16 %v1680
  %v1837 = vunpack.c.l.b16 %v1681
  %v1838 = vunpack.c.h.b16 %v1681
  %v1839 = vunpack.c.l.b16 %v1682
  %v1840 = vunpack.c.h.b16 %v1682
  %v1841 = vunpack.c.l.b16 %v1683
  %v1842 = vunpack.c.h.b16 %v1683
  %v1843 = vunpack.c.l.b16 %v1684
  %v1844 = vunpack.c.h.b16 %v1684
  %v1845 = vunpack.c.l.b16 %v1685
  %v1846 = vunpack.c.h.b16 %v1685
  %v1847 = vunpack.c.l.b16 %v1686
  %v1848 = vunpack.c.h.b16 %v1686
  %v1849 = vunpack.c.l.b16 %v1687
  %v1850 = vunpack.c.h.b16 %v1687
  %v1851 = vunpack.c.l.b16 %v1688
  %v1852 = vunpack.c.h.b16 %v1688
  %v1853 = vunpack.c.l.b16 %v1689
  %v1854 = vunpack.c.h.b16 %v1689
  %v1855 = vunpack.c.l.b16 %v1690
  %v1856 = vunpack.c.h.b16 %v1690
  %v1857 = vunpack.c.l.b16 %v1691
  %v1858 = vunpack.c.h.b16 %v1691
  %v1859 = vunpack.c.l.b16 %v1692
  %v1860 = vunpack.c.h.b16 %v1692
  %v1861 = vunpack.c.l.b16 %v1693
  %v1862 = vunpack.c.h.b16 %v1693
  %v1863 = vunpack.c.l.b16 %v1694
  %v1864 = vunpack.c.h.b16 %v1694
  %v1865 = vunpack.c.l.b16 %v1695
  %v1866 = vunpack.c.h.b16 %v1695
  %v1867 = vunpack.c.l.b16 %v1696
  %v1868 = vunpack.c.h.b16 %v1696
  %v1869 = vunpack.c.l.b16 %v1697
  %v1870 = vunpack.c.h.b16 %v1697
  %v1871 = vunpack.c.l.b16 %v1698
  %v1872 = vunpack.c.h.b16 %v1698
  %v1873 = vunpack.c.l.b16 %v1699
  %v1874 = vunpack.c.h.b16 %v1699
  %v1875 = vunpack.c.l.b16 %v1700
  %v1876 = vunpack.c.h.b16 %v1700
  %v1877 = vunpack.c.l.b16 %v1701
  %v1878 = vunpack.c.h.b16 %v1701
  %v1879 = vunpack.c.l.b16 %v1702
  %v1880 = vunpack.c.h.b16 %v1702
  %v1881 = vunpack.c.l.b16 %v1703
  %v1882 = vunpack.c.h.b16 %v1703
  %v1883 = vunpack.c.l.b16 %v1704
  %v1884 = vunpack.c.h.b16 %v1704
  %v1885 = vunpack.c.l.b16 %v1705
  %v1886 = vunpack.c.h.b16 %v1705
  %v1887 = vunpack.c.l.b16 %v1706
  %v1888 = vunpack.c.h.b16 %v1706
  %v1889 = vunpack.c.l.b16 %v1707
  %v1890 = vunpack.c.h.b16 %v1707
  %v1891 = vunpack.c.l.b16 %v1708
  %v1892 = vunpack.c.h.b16 %v1708
  %v1893 = vunpack.c.l.b16 %v1709
  %v1894 = vunpack.c.h.b16 %v1709
  %v1895 = vunpack.c.l.b16 %v1710
  %v1896 = vunpack.c.h.b16 %v1710
  %v1897 = vunpack.c.l.b16 %v1711
  %v1898 = vunpack.c.h.b16 %v1711
  %v1899 = vunpack.c.l.b16 %v1712
  %v1900 = vunpack.c.h.b16 %v1712
  %v1901 = vunpack.c.l.b16 %v1713
  %v1902 = vunpack.c.h.b16 %v1713
  %v1903 = vunpack.c.l.b16 %v1714
  %v1904 = vunpack.c.h.b16 %v1714
  %v1905 = vunpack.c.l.b16 %v1715
  %v1906 = vunpack.c.h.b16 %v1715
  %v1907 = vunpack.c.l.b16 %v1716
  %v1908 = vunpack.c.h.b16 %v1716
  %v1909 = vunpack.c.l.b16 %v1717
  %v1910 = vunpack.c.h.b16 %v1717
  %v1911 = vunpack.c.l.b16 %v1718
  %v1912 = vunpack.c.h.b16 %v1718
  %v1913 = vunpack.c.l.b16 %v1719
  %v1914 = vunpack.c.h.b16 %v1719
  %v1915 = vunpack.c.l.b16 %v1720
  %v1916 = vunpack.c.h.b16 %v1720
  %v1917 = vunpack.c.l.b16 %v1721
  %v1918 = vunpack.c.h.b16 %v1721
  %v1919 = vunpack.c.l.b16 %v1722
  %v1920 = vunpack.c.h.b16 %v1722
  %v1921 = vunpack.c.l.b16 %v1723
  %v1922 = vunpack.c.h.b16 %v1723
  %v1923 = vunpack.c.l.b16 %v1724
  %v1924 = vunpack.c.h.b16 %v1724
  %v1925 = vunpack.c.l.b16 %v1725
  %v1926 = vunpack.c.h.b16 %v1725
  %v1927 = vunpack.c.l.b16 %v1726
  %v1928 = vunpack.c.h.b16 %v1726
  %v1929 = vunpack.c.l.b16 %v1727
  %v1930 = vunpack.c.h.b16 %v1727
  %v1931 = vunpack.c.l.b16 %v1728
  %v1932 = vunpack.c.h.b16 %v1728
  %v1933 = vunpack.c.l.b16 %v1729
  %v1934 = vunpack.c.h.b16 %v1729
  %v1935 = vunpack.c.l.b16 %v1730
  %v1936 = vunpack.c.h.b16 %v1730
  %v1937 = vunpack.c.l.b16 %v1731
  %v1938 = vunpack.c.h.b16 %v1731
  %v1939 = vunpack.c.l.b16 %v1732
  %v1940 = vunpack.c.h.b16 %v1732
  %v1941 = vunpack.c.l.b16 %v1733
  %v1942 = vunpack.c.h.b16 %v1733
  %v1943 = vunpack.c.l.b16 %v1734
  %v1944 = vunpack.c.h.b16 %v1734
  %v1945 = vunpack.c.l.b16 %v1735
  %v1946 = vunpack.c.h.b16 %v1735
  %v1947 = vunpack.c.l.b16 %v1736
  %v1948 = vunpack.c.h.b16 %v1736
  %v1949 = vunpack.c.l.b16 %v1737
  %v1950 = vunpack.c.h.b16 %v1737
  %v1951 = vunpack.c.l.b16 %v1738
  %v1952 = vunpack.c.h.b16 %v1738
  %v1953 = vpack.c.b16 %v1829, %v1825
  %v1954 = vpack.c.b16 %v1830, %v1826
  %v1955 = vpack.c.b16 %v1831, %v1827
  %v1956 = vpack.c.b16 %v1832, %v1828
  %v1957 = vpack.c.b16 %v1837, %v1833
  %v1958 = vpack.c.b16 %v1838, %v1834
  %v1959 = vpack.c.b16 %v1839, %v1835
  %v1960 = vpack.c.b16 %v1840, %v1836
  %v1961 = vpack.c.b16 %v1845, %v1841
  %v1962 = vpack.c.b16 %v1846, %v1842
  %v1963 = vpack.c.b16 %v1847, %v1843
  %v1964 = vpack.c.b16 %v1848, %v1844
  %v1965 = vpack.c.b16 %v1853, %v1849
  %v1966 = vpack.c.b16 %v1854, %v1850
  %v1967 = vpack.c.b16 %v1855, %v1851
  %v1968 = vpack.c.b16 %v1856, %v1852
  %v1969 = vpack.c.b16 %v1861, %v1857
  %v1970 = vpack.c.b16 %v1862, %v1858
  %v1971 = vpack.c.b16 %v1863, %v1859
  %v1972 = vpack.c.b16 %v1864, %v1860
  %v1973 = vpack.c.b16 %v1869, %v1865
  %v1974 = vpack.c.b16 %v1870, %v1866
  %v1975 = vpack.c.b16 %v1871, %v1867
  %v1976 = vpack.c.b16 %v1872, %v1868
  %v1977 = vpack.c.b16 %v1877, %v1873
  %v1978 = vpack.c.b16 %v1878, %v1874
  %v1979 = vpack.c.b16 %v1879, %v1875
  %v1980 = vpack.c.b16 %v1880, %v1876
  %v1981 = vpack.c.b16 %v1885, %v1881
  %v1982 = vpack.c.b16 %v1886, %v1882
  %v1983 = vpack.c.b16 %v1887, %v1883
  %v1984 = vpack.c.b16 %v1888, %v1884
  %v1985 = vpack.c.b16 %v1893, %v1889
  %v1986 = vpack.c.b16 %v1894, %v1890
  %v1987 = vpack.c.b16 %v1895, %v1891
  %v1988 = vpack.c.b16 %v1896, %v1892
  %v1989 = vpack.c.b16 %v1901, %v1897
  %v1990 = vpack.c.b16 %v1902, %v1898
  %v1991 = vpack.c.b16 %v1903, %v1899
  %v1992 = vpack.c.b16 %v1904, %v1900
  %v1993 = vpack.c.b16 %v1909, %v1905
  %v1994 = vpack.c.b16 %v1910, %v1906
  %v1995 = vpack.c.b16 %v1911, %v1907
  %v1996 = vpack.c.b16 %v1912, %v1908
  %v1997 = vpack.c.b16 %v1917, %v1913
  %v1998 = vpack.c.b16 %v1918, %v1914
  %v1999 = vpack.c.b16 %v1919, %v1915
  %v2000 = vpack.c.b16 %v1920, %v1916
  %v2001 = vpack.c.b16 %v1925, %v1921
  %v2002 = vpack.c.b16 %v1926, %v1922
  %v2003 = vpack.c.b16 %v1927, %v1923
  %v2004 = vpack.c.b16 %v1928, %v1924
  %v2005 = vpack.c.b16 %v1933, %v1929
  %v2006 = vpack.c.b16 %v1934, %v1930
  %v2007 = vpack.c.b16 %v1935, %v1931
  %v2008 = vpack.c.b16 %v1936, %v1932
  %v2009 = vpack.c.b16 %v1941, %v1937
  %v2010 = vpack.c.b16 %v1942, %v1938
  %v2011 = vpack.c.b16 %v1943, %v1939
  %v2012 = vpack.c.b16 %v1944, %v1940
  %v2013 = vpack.c.b16 %v1949, %v1945
  %v2014 = vpack.c.b16 %v1950, %v1946
  %v2015 = vpack.c.b16 %v1951, %v1947
  %v2016 = vpack.c.b16 %v1952, %v1948
  %2081 = vmatprep.subr.bf16.mxu0 %v1954
  %2082 = vmatpush1.bf16.msra.mxu0 %v1953
  %2083 = vmatprep.subr.bf16.mxu0 %v1958
  %2084 = vmatpush1.bf16.msra.mxu0 %v1957
  %2085 = vmatprep.subr.bf16.mxu0 %v1962
  %2086 = vmatpush1.bf16.msra.mxu0 %v1961
  %2087 = vmatprep.subr.bf16.mxu0 %v1966
  %2088 = vmatpush1.bf16.msra.mxu0 %v1965
  %2089 = vmatprep.subr.bf16.mxu0 %v1970
  %2090 = vmatpush1.bf16.msra.mxu0 %v1969
  %2091 = vmatprep.subr.bf16.mxu0 %v1974
  %2092 = vmatpush1.bf16.msra.mxu0 %v1973
  %2093 = vmatprep.subr.bf16.mxu0 %v1978
  %2094 = vmatpush1.bf16.msra.mxu0 %v1977
  %2095 = vmatprep.subr.bf16.mxu0 %v1982
  %2096 = vmatpush1.bf16.msra.mxu0 %v1981
  %2097 = vmatprep.subr.bf16.mxu0 %v1986
  %2098 = vmatpush1.bf16.msra.mxu0 %v1985
  %2099 = vmatprep.subr.bf16.mxu0 %v1990
  %2100 = vmatpush1.bf16.msra.mxu0 %v1989
  %2101 = vmatprep.subr.bf16.mxu0 %v1994
  %2102 = vmatpush1.bf16.msra.mxu0 %v1993
  %2103 = vmatprep.subr.bf16.mxu0 %v1998
  %2104 = vmatpush1.bf16.msra.mxu0 %v1997
  %2105 = vmatprep.subr.bf16.mxu0 %v2002
  %2106 = vmatpush1.bf16.msra.mxu0 %v2001
  %2107 = vmatprep.subr.bf16.mxu0 %v2006
  %2108 = vmatpush1.bf16.msra.mxu0 %v2005
  %2109 = vmatprep.subr.bf16.mxu0 %v2010
  %2110 = vmatpush1.bf16.msra.mxu0 %v2009
  %2111 = vmatprep.subr.bf16.mxu0 %v2014
  %2112 = vmatpush1.bf16.msra.mxu0 %v2013
  %2113 = vmatprep.mubr.bf16.mxu0 %v1674
  %2114 = vmatmul.mubr.bf16.gmra.mrb[0].mxu0 %v1673
  %v2115 = vpop.f32.mrb[0].mxu0
  %v2116 = vadd.f32 %v1744, %v2115
  %v2117 = vpop.f32.mrb[0].mxu0
  %v2118 = vadd.f32 %v1748, %v2117
  %v2119 = vpop.f32.mrb[0].mxu0
  %v2120 = vadd.f32 %v1744, %v2119
  %v2121 = vpop.f32.mrb[0].mxu0
  %v2122 = vadd.f32 %v1748, %v2121
  %2123 = vdwg.mxu0
  %2124 = vmatprep.subr.bf16.mxu0 %v1956
  %2125 = vmatpush1.bf16.msra.mxu0 %v1955
  %2126 = vmatprep.subr.bf16.mxu0 %v1960
  %2127 = vmatpush1.bf16.msra.mxu0 %v1959
  %2128 = vmatprep.subr.bf16.mxu0 %v1964
  %2129 = vmatpush1.bf16.msra.mxu0 %v1963
  %2130 = vmatprep.subr.bf16.mxu0 %v1968
  %2131 = vmatpush1.bf16.msra.mxu0 %v1967
  %2132 = vmatprep.subr.bf16.mxu0 %v1972
  %2133 = vmatpush1.bf16.msra.mxu0 %v1971
  %2134 = vmatprep.subr.bf16.mxu0 %v1976
  %2135 = vmatpush1.bf16.msra.mxu0 %v1975
  %2136 = vmatprep.subr.bf16.mxu0 %v1980
  %2137 = vmatpush1.bf16.msra.mxu0 %v1979
  %2138 = vmatprep.subr.bf16.mxu0 %v1984
  %2139 = vmatpush1.bf16.msra.mxu0 %v1983
  %2140 = vmatprep.subr.bf16.mxu0 %v1988
  %2141 = vmatpush1.bf16.msra.mxu0 %v1987
  %2142 = vmatprep.subr.bf16.mxu0 %v1992
  %2143 = vmatpush1.bf16.msra.mxu0 %v1991
  %2144 = vmatprep.subr.bf16.mxu0 %v1996
  %2145 = vmatpush1.bf16.msra.mxu0 %v1995
  %2146 = vmatprep.subr.bf16.mxu0 %v2000
  %2147 = vmatpush1.bf16.msra.mxu0 %v1999
  %2148 = vmatprep.subr.bf16.mxu0 %v2004
  %2149 = vmatpush1.bf16.msra.mxu0 %v2003
  %2150 = vmatprep.subr.bf16.mxu0 %v2008
  %2151 = vmatpush1.bf16.msra.mxu0 %v2007
  %2152 = vmatprep.subr.bf16.mxu0 %v2012
  %2153 = vmatpush1.bf16.msra.mxu0 %v2011
  %2154 = vmatprep.subr.bf16.mxu0 %v2016
  %2155 = vmatpush1.bf16.msra.mxu0 %v2015
  %2156 = vmatprep.mubr.bf16.mxu0 %v1674
  %2157 = vmatmul.mubr.bf16.gmra.mrb[0].mxu0 %v1673
  %v2158 = vpop.f32.mrb[0].mxu0
  %v2159 = vadd.f32 %v1752, %v2158
  %v2160 = vpop.f32.mrb[0].mxu0
  %v2161 = vadd.f32 %v1756, %v2160
  %v2162 = vpop.f32.mrb[0].mxu0
  %v2163 = vadd.f32 %v1752, %v2162
  %v2164 = vpop.f32.mrb[0].mxu0
  %v2165 = vadd.f32 %v1756, %v2164
  %2166 = vdwg.mxu0
  %v2167 = vadd.f32 %v47, %v2116
  %v2168 = vadd.f32 %v48, %v2118
  %v2169 = vadd.f32 %v49, %v2120
  %v2170 = vadd.f32 %v50, %v2122
  %v2171 = vmul.f32 %v2167, 0.70710677
  %v2172 = vmul.f32 %v2168, 0.70710677
  %v2173 = vmul.f32 %v2169, 0.70710677
  %v2174 = vmul.f32 %v2170, 0.70710677
  %2175 = vst [vmem:[%s13] sm:$0xff] %v2171
  %2176 = vst [vmem:[%s13 + $0x8] sm:$0xff] %v2172
  %2177 = vst [vmem:[%s13 + $0x10] sm:$0xff] %v2173
  %2178 = vst [vmem:[%s13 + $0x18] sm:$0xff] %v2174
  %v2179 = vld [vmem:[%s4] sm:$0xff]
  %v2180 = vld [vmem:[%s4 + $0x8] sm:$0xff]
  %v2181 = vld [vmem:[%s4 + $0x10] sm:$0xff]
  %v2182 = vld [vmem:[%s4 + $0x18] sm:$0xff]
  %v2183 = vadd.f32 %v2179, %v2159
  %v2184 = vadd.f32 %v2180, %v2161
  %v2185 = vadd.f32 %v2181, %v2163
  %v2186 = vadd.f32 %v2182, %v2165
  %2187 = vst [vmem:[%s14] sm:$0xff] %v2183
  %2188 = vst [vmem:[%s14 + $0x8] sm:$0xff] %v2184
  %2189 = vst [vmem:[%s14 + $0x10] sm:$0xff] %v2185
  %2190 = vst [vmem:[%s14 + $0x18] sm:$0xff] %v2186
  // Predicated region
  $region54: #{block_forward.12} parent=0 // pred_check
    _
  $region55: #{block_forward.12} parent=0 // pred_check_branch
    %2192 = sbr.rel (0) target = $region57
  $region56: #{block_forward.12} parent=0 // pred_region
    _
  $region57: #{block_forward.12} parent=0 // pred_fallthru
    _
  // Predicated region
  $region58: #{block_forward.12} parent=0 // pred_check
    _
  $region59: #{block_forward.12} parent=0 // pred_check_branch
    %2194 = sbr.rel (0) target = $region61
  $region60: #{block_forward.12} parent=0 // pred_region
    _
  $region61: #{block_forward.12} parent=0 // pred_fallthru
    _
  // Predicated region
  $region62: #{block_forward.12} parent=0 // pred_check
    _
  $region63: #{block_forward.12} parent=0 // pred_check_branch
    %2196 = sbr.rel (0) target = $region65
  $region64: #{block_forward.12} parent=0 // pred_region
    _
  $region65: #{block_forward.12} parent=0 // pred_fallthru
    _
  // Predicated region
  $region66: #{block_forward.12} parent=0 // pred_check
    _
  $region67: #{block_forward.12} parent=0 // pred_check_branch
    %2198 = sbr.rel (0) target = $region69
  $region68: #{block_forward.12} parent=0 // pred_region
    _
  $region69: #{block_forward.12} parent=0 // pred_fallthru
    _

</llo_original>
